<compile_context>
chip_gen: v6e
topology: v6e:2x2x1
jax: 0.10.0
libtpu: 0.0.40
codegen_flags: <defaults>
</compile_context>

<pallas_src>
import jax
import jax.numpy as jnp
from jax.experimental import pallas as pl
from jax.experimental.pallas import tpu as pltpu

D_IN = 3 * 32 * 32           # 3072, already a multiple of 128
H_RAW, H_PAD = 200, 256      # hidden width padded to a lane multiple
OUT_RAW, OUT_PAD = 10, 128   # logits padded to one lane-dense row
TB_MAX = 1024                # max batch-tile rows (VMEM-safe on v5e/v6e/v7x)
TB_MIN = 32                  # multiple of 32: clean bf16 (16,128) & fp32 (8,128) tiles
VMEM_LIMIT_BYTES = 48 * 1024 * 1024   # < 64 MiB (v7x physical), > 32 MiB default scoped


def _round_up(x, m):
    return ((x + m - 1) // m) * m


def mlp_kernel(x_ref, w1_ref, b1_ref, w2_ref, b2_ref, w3_ref, b3_ref, o_ref):
    # fp32 -> bf16 cast happens on-chip (VPU), feeding the MXU directly.
    x = x_ref[...].astype(jnp.bfloat16)
    # fc1 + ReLU (fp32 accumulate, fp32 bias)
    h1 = jnp.dot(x, w1_ref[...], preferred_element_type=jnp.float32)
    h1 = jnp.maximum(h1 + b1_ref[...], 0.0)
    # fc2 + ReLU
    h2 = jnp.dot(h1.astype(jnp.bfloat16), w2_ref[...],
                 preferred_element_type=jnp.float32)
    h2 = jnp.maximum(h2 + b2_ref[...], 0.0)
    # fc3 (no activation); lane-dense (TB, 128) store
    out = jnp.dot(h2.astype(jnp.bfloat16), w3_ref[...],
                  preferred_element_type=jnp.float32)
    o_ref[...] = (out + b3_ref[...]).astype(o_ref.dtype)


def _pick_batch_tile(B):
    """>=4 evenly sized tiles when the batch is big enough (pipelining +
    megacore), even tile count, rows rounded to TB_MIN, capped at TB_MAX."""
    num_tiles = pl.cdiv(B, TB_MAX)
    if B >= 4 * TB_MIN:
        num_tiles = max(num_tiles, 4)
    if num_tiles > 1 and num_tiles % 2:
        num_tiles += 1              # even grid: both v7x TensorCores get work
    return min(TB_MAX, _round_up(pl.cdiv(B, num_tiles), TB_MIN))


@jax.jit
def mlp_forward(x_nchw, padded_params):
    """x_nchw: (B, 3, 32, 32) float32 -> logits (B, 10) float32.

    padded_params: output of pad_and_cast_params (bf16 weights, fp32 biases,
    feature dims padded to 3072/256/256/128).
    """
    w1, b1, w2, b2, w3, b3 = padded_params
    B = x_nchw.shape[0]

    # Same flattening order as torch's x.view(-1, 3*32*32). Stays fp32; the
    # bf16 cast is done inside the kernel (no extra HBM round-trip).
    x2d = x_nchw.reshape(B, D_IN)

    TB = _pick_batch_tile(B)
    grid = (pl.cdiv(B, TB),)        # ragged last block handled by Pallas

    const2d = lambda shape: pl.BlockSpec(shape, lambda i: (0, 0))

    weight_bytes = (D_IN * H_PAD + H_PAD * H_PAD + H_PAD * OUT_PAD) * 2 \
                   + (2 * H_PAD + OUT_PAD) * 4
    cost = pl.CostEstimate(
        flops=2 * B * (D_IN * H_PAD + H_PAD * H_PAD + H_PAD * OUT_PAD),
        transcendentals=0,
        bytes_accessed=B * D_IN * 4 + B * OUT_PAD * 4 + weight_bytes,
    )

    out_padded = pl.pallas_call(
        mlp_kernel,
        out_shape=jax.ShapeDtypeStruct((B, OUT_PAD), jnp.float32),
        grid=grid,
        in_specs=[
            pl.BlockSpec((TB, D_IN), lambda i: (i, 0)),   # x tile, pipelined
            const2d(w1.shape), const2d(b1.shape),         # weights VMEM-resident
            const2d(w2.shape), const2d(b2.shape),
            const2d(w3.shape), const2d(b3.shape),
        ],
        out_specs=pl.BlockSpec((TB, OUT_PAD), lambda i: (i, 0)),
        compiler_params=pltpu.CompilerParams(
            dimension_semantics=("parallel",),
            vmem_limit_bytes=VMEM_LIMIT_BYTES),
        cost_estimate=cost,
    )(x2d, w1, b1, w2, b2, w3, b3)

    # Strip lane padding (free layout plumbing in the wrapper).
    return out_padded[:, :OUT_RAW]


def init_params(key):
    """Deterministic init mimicking nn.Linear default
    (uniform(-1/sqrt(fan_in), 1/sqrt(fan_in))), stored as (in, out) fp32."""
    def linear(key, fan_in, fan_out):
        kw, kb = jax.random.split(key)
        bound = 1.0 / jnp.sqrt(fan_in)
        w = jax.random.uniform(kw, (fan_in, fan_out), jnp.float32, -bound, bound)
        b = jax.random.uniform(kb, (1, fan_out), jnp.float32, -bound, bound)
        return w, b

    k1, k2, k3 = jax.random.split(key, 3)
    w1, b1 = linear(k1, D_IN, H_RAW)
    w2, b2 = linear(k2, H_RAW, H_RAW)
    w3, b3 = linear(k3, H_RAW, OUT_RAW)
    return (w1, b1, w2, b2, w3, b3)


def pad_and_cast_params(params):
    """One-time prep: zero-pad feature dims to 128 multiples and cast weights
    to bf16 (biases stay fp32; they are added post-accumulation)."""
    w1, b1, w2, b2, w3, b3 = params

    def pad2(a, rows, cols):
        return jnp.pad(a, ((0, rows - a.shape[0]), (0, cols - a.shape[1])))

    w1p = pad2(w1, D_IN, H_PAD).astype(jnp.bfloat16)
    b1p = pad2(b1, 1, H_PAD)
    w2p = pad2(w2, H_PAD, H_PAD).astype(jnp.bfloat16)
    b2p = pad2(b2, 1, H_PAD)
    w3p = pad2(w3, H_PAD, OUT_PAD).astype(jnp.bfloat16)
    b3p = pad2(b3, 1, OUT_PAD)
    return (w1p, b1p, w2p, b2p, w3p, b3p)


if __name__ == "__main__":
    key = jax.random.PRNGKey(0)
    kx, kp = jax.random.split(key)

    # Small batch; the module's view() fixes spatial shape to (3, 32, 32).
    x = jax.random.normal(kx, (2, 3, 32, 32), jnp.float32)
    params = init_params(kp)
    padded_params = pad_and_cast_params(params)

    out = jax.block_until_ready(mlp_forward(x, padded_params))
    assert out.shape == (2, OUT_RAW)

    # Reference using the same bf16 weights / bf16-cast input, fp32
    # accumulation (apples-to-apples with the kernel's MXU path).
    w1p, b1p, w2p, b2p, w3p, b3p = padded_params
    x2d = x.reshape(x.shape[0], -1).astype(jnp.bfloat16)
    ref = jnp.maximum(
        jnp.dot(x2d, w1p, preferred_element_type=jnp.float32) + b1p, 0.0)
    ref = jnp.maximum(
        jnp.dot(ref.astype(jnp.bfloat16), w2p,
                preferred_element_type=jnp.float32) + b2p, 0.0)
    ref = jnp.dot(ref.astype(jnp.bfloat16), w3p,
                  preferred_element_type=jnp.float32) + b3p
    ref = ref[:, :OUT_RAW]
    assert jnp.allclose(out, ref, atol=1e-3, rtol=1e-3)

    # Loose check against the original fp32 math (bf16 rounding only).
    w1, b1, w2, b2, w3, b3 = params
    xf = x.reshape(x.shape[0], -1)
    ref32 = jnp.maximum(xf @ w1 + b1, 0.0)
    ref32 = jnp.maximum(ref32 @ w2 + b2, 0.0)
    ref32 = ref32 @ w3 + b3
    assert jnp.allclose(out, ref32, atol=5e-2, rtol=5e-2)

    print("KERNEL_OK")
</pallas_src>

<mosaic_0001>
module attributes {stable_mosaic.version = 11 : i64} {
  func.func @mlp_kernel(%arg0: i32, %arg1: memref<32x3072xf32, #tpu.memory_space<vmem>>, %arg2: memref<3072x256xbf16, #tpu.memory_space<vmem>>, %arg3: memref<1x256xf32, #tpu.memory_space<vmem>>, %arg4: memref<256x256xbf16, #tpu.memory_space<vmem>>, %arg5: memref<1x256xf32, #tpu.memory_space<vmem>>, %arg6: memref<256x128xbf16, #tpu.memory_space<vmem>>, %arg7: memref<1x128xf32, #tpu.memory_space<vmem>>, %arg8: memref<32x128xf32, #tpu.memory_space<vmem>>) attributes {dimension_semantics = [#tpu.dimension_semantics<parallel>], iteration_bounds = array<i64: 1>, scalar_prefetch = 0 : i64, scratch_operands = 0 : i64, tpu.core_type = #tpu.core_type<tc>, window_params = [{transform_indices = @transform_0, window_bounds = array<i64: 32, 3072>}, {pipeline_mode = #tpu.pipeline_mode<synchronous>, transform_indices = @transform_1, window_bounds = array<i64: 3072, 256>}, {pipeline_mode = #tpu.pipeline_mode<synchronous>, transform_indices = @transform_2, window_bounds = array<i64: 1, 256>}, {pipeline_mode = #tpu.pipeline_mode<synchronous>, transform_indices = @transform_3, window_bounds = array<i64: 256, 256>}, {pipeline_mode = #tpu.pipeline_mode<synchronous>, transform_indices = @transform_4, window_bounds = array<i64: 1, 256>}, {pipeline_mode = #tpu.pipeline_mode<synchronous>, transform_indices = @transform_5, window_bounds = array<i64: 256, 128>}, {pipeline_mode = #tpu.pipeline_mode<synchronous>, transform_indices = @transform_6, window_bounds = array<i64: 1, 128>}, {transform_indices = @transform_7, window_bounds = array<i64: 32, 128>}]} {
    %c0 = arith.constant 0 : index
    %c0_0 = arith.constant 0 : index
    %0 = vector.load %arg1[%c0, %c0_0] : memref<32x3072xf32, #tpu.memory_space<vmem>>, vector<32x3072xf32>
    %1 = arith.truncf %0 : vector<32x3072xf32> to vector<32x3072xbf16>
    %c0_1 = arith.constant 0 : index
    %c0_2 = arith.constant 0 : index
    %2 = vector.load %arg2[%c0_1, %c0_2] : memref<3072x256xbf16, #tpu.memory_space<vmem>>, vector<3072x256xbf16>
    %cst = arith.constant dense<0.000000e+00> : vector<32x256xf32>
    %3 = tpu.matmul %1, %2, %cst {dimension_numbers = #tpu.dot_dimension_numbers<[1], [0], [0], [1], [0, 0, 1, 1], [], []>} : vector<32x3072xbf16>, vector<3072x256xbf16>, vector<32x256xf32> -> vector<32x256xf32>
    %c0_3 = arith.constant 0 : index
    %c0_4 = arith.constant 0 : index
    %4 = vector.load %arg3[%c0_3, %c0_4] : memref<1x256xf32, #tpu.memory_space<vmem>>, vector<1x256xf32>
    %5 = vector.broadcast %4 : vector<1x256xf32> to vector<32x256xf32>
    %6 = arith.addf %3, %5 : vector<32x256xf32>
    %cst_5 = arith.constant 0.000000e+00 : f32
    %7 = vector.broadcast %cst_5 : f32 to vector<32x256xf32>
    %8 = arith.maximumf %6, %7 : vector<32x256xf32>
    %9 = arith.truncf %8 : vector<32x256xf32> to vector<32x256xbf16>
    %c0_6 = arith.constant 0 : index
    %c0_7 = arith.constant 0 : index
    %10 = vector.load %arg4[%c0_6, %c0_7] : memref<256x256xbf16, #tpu.memory_space<vmem>>, vector<256x256xbf16>
    %cst_8 = arith.constant dense<0.000000e+00> : vector<32x256xf32>
    %11 = tpu.matmul %9, %10, %cst_8 {dimension_numbers = #tpu.dot_dimension_numbers<[1], [0], [0], [1], [0, 0, 1, 1], [], []>} : vector<32x256xbf16>, vector<256x256xbf16>, vector<32x256xf32> -> vector<32x256xf32>
    %c0_9 = arith.constant 0 : index
    %c0_10 = arith.constant 0 : index
    %12 = vector.load %arg5[%c0_9, %c0_10] : memref<1x256xf32, #tpu.memory_space<vmem>>, vector<1x256xf32>
    %13 = vector.broadcast %12 : vector<1x256xf32> to vector<32x256xf32>
    %14 = arith.addf %11, %13 : vector<32x256xf32>
    %cst_11 = arith.constant 0.000000e+00 : f32
    %15 = vector.broadcast %cst_11 : f32 to vector<32x256xf32>
    %16 = arith.maximumf %14, %15 : vector<32x256xf32>
    %17 = arith.truncf %16 : vector<32x256xf32> to vector<32x256xbf16>
    %c0_12 = arith.constant 0 : index
    %c0_13 = arith.constant 0 : index
    %18 = vector.load %arg6[%c0_12, %c0_13] : memref<256x128xbf16, #tpu.memory_space<vmem>>, vector<256x128xbf16>
    %cst_14 = arith.constant dense<0.000000e+00> : vector<32x128xf32>
    %19 = tpu.matmul %17, %18, %cst_14 {dimension_numbers = #tpu.dot_dimension_numbers<[1], [0], [0], [1], [0, 0, 1, 1], [], []>} : vector<32x256xbf16>, vector<256x128xbf16>, vector<32x128xf32> -> vector<32x128xf32>
    %c0_15 = arith.constant 0 : index
    %c0_16 = arith.constant 0 : index
    %20 = vector.load %arg7[%c0_15, %c0_16] : memref<1x128xf32, #tpu.memory_space<vmem>>, vector<1x128xf32>
    %21 = vector.broadcast %20 : vector<1x128xf32> to vector<32x128xf32>
    %22 = arith.addf %19, %21 : vector<32x128xf32>
    %c0_17 = arith.constant 0 : index
    %c0_18 = arith.constant 0 : index
    %23 = vector.load %arg8[%c0_17, %c0_18] : memref<32x128xf32, #tpu.memory_space<vmem>>, vector<32x128xf32>
    tpu.vector_store %arg8[%c0_17, %c0_18], %22 {strides = array<i32>} : memref<32x128xf32, #tpu.memory_space<vmem>>, vector<32x128xf32>,
    return
  }
  func.func @transform_0(%arg0: i32) -> (i32, i32) {
    %c0_i32 = arith.constant 0 : i32
    %c0_i32_0 = arith.constant 0 : i32
    return %arg0, %c0_i32 : i32, i32
  }
  func.func @transform_1(%arg0: i32) -> (i32, i32) {
    %c0_i32 = arith.constant 0 : i32
    %c0_i32_0 = arith.constant 0 : i32
    %c0_i32_1 = arith.constant 0 : i32
    return %c0_i32, %c0_i32_0 : i32, i32
  }
  func.func @transform_2(%arg0: i32) -> (i32, i32) {
    %c0_i32 = arith.constant 0 : i32
    %c0_i32_0 = arith.constant 0 : i32
    %c0_i32_1 = arith.constant 0 : i32
    return %c0_i32, %c0_i32_0 : i32, i32
  }
  func.func @transform_3(%arg0: i32) -> (i32, i32) {
    %c0_i32 = arith.constant 0 : i32
    %c0_i32_0 = arith.constant 0 : i32
    %c0_i32_1 = arith.constant 0 : i32
    return %c0_i32, %c0_i32_0 : i32, i32
  }
  func.func @transform_4(%arg0: i32) -> (i32, i32) {
    %c0_i32 = arith.constant 0 : i32
    %c0_i32_0 = arith.constant 0 : i32
    %c0_i32_1 = arith.constant 0 : i32
    return %c0_i32, %c0_i32_0 : i32, i32
  }
  func.func @transform_5(%arg0: i32) -> (i32, i32) {
    %c0_i32 = arith.constant 0 : i32
    %c0_i32_0 = arith.constant 0 : i32
    %c0_i32_1 = arith.constant 0 : i32
    return %c0_i32, %c0_i32_0 : i32, i32
  }
  func.func @transform_6(%arg0: i32) -> (i32, i32) {
    %c0_i32 = arith.constant 0 : i32
    %c0_i32_0 = arith.constant 0 : i32
    %c0_i32_1 = arith.constant 0 : i32
    return %c0_i32, %c0_i32_0 : i32, i32
  }
  func.func @transform_7(%arg0: i32) -> (i32, i32) {
    %c0_i32 = arith.constant 0 : i32
    %c0_i32_0 = arith.constant 0 : i32
    return %arg0, %c0_i32 : i32, i32
  }
}

</mosaic_0001>

<llo_original>
// kernel: mlp_forward.1
$region0: #{mlp_forward.1}
  #allocation0 [shape = 'u32[]', space=smem, size = 0x4, offset = 0x4, fixed_abs, tag = 'smem constant byte address 0x4 - core index']
  #allocation1 [shape = 'u32[144,128]{1,0:T(1,128)}', space=vmem, size = 0x12000, scoped, tag = 'internal scratch']
  %s0 = inlined_call_operand.vmem [shape: f32[2,3072], index: 0, kind: input, shape index: {}]
  %s1 = inlined_call_operand.hbm [shape: bf16[3072,256], index: 1, kind: input, shape index: {}]
  %s2 = inlined_call_operand.hbm [shape: f32[1,256], index: 2, kind: input, shape index: {}]
  %s3 = inlined_call_operand.hbm [shape: bf16[256,256], index: 3, kind: input, shape index: {}]
  %s4 = inlined_call_operand.hbm [shape: f32[1,256], index: 4, kind: input, shape index: {}]
  %s5 = inlined_call_operand.hbm [shape: bf16[256,128], index: 5, kind: input, shape index: {}]
  %s6 = inlined_call_operand.hbm [shape: f32[1,128], index: 6, kind: input, shape index: {}]
  %s7 = inlined_call_operand.hbm [shape: f32[2,128], index: 7, kind: output, shape index: {}]
  %s8 = sld [smem:[#allocation0]]
  $region62: #{mlp_forward.1} parent=0
    _
  %s10 = ssub.s32 1, %s8
  %s11 = scalar_select 0, %s10, %s8
  $region1: #{mlp_forward.1} parent=0
    #allocation2 [shape = 'u8[1572864]{0}', space=vmem, size = 0x180000, scoped, tag = 'input window, operand 1, single buffered']
    #allocation3 [shape = 's32[1]{0}', space=sflag, size = 0x4, scoped, tag = 'scoped memory for mlp_forward.1']
    #allocation4 [shape = 's32[1]{0}', space=sflag, size = 0x4, scoped, tag = 'scoped memory for mlp_forward.1']
    #allocation5 [shape = 'u8[1024]{0}', space=vmem, size = 0x400, scoped, tag = 'input window, operand 2, single buffered']
    #allocation6 [shape = 's32[1]{0}', space=sflag, size = 0x4, scoped, tag = 'scoped memory for mlp_forward.1']
    #allocation7 [shape = 'u8[131072]{0}', space=vmem, size = 0x20000, scoped, tag = 'input window, operand 3, single buffered']
    #allocation8 [shape = 'u8[1024]{0}', space=vmem, size = 0x400, scoped, tag = 'input window, operand 4, single buffered']
    #allocation9 [shape = 's32[1]{0}', space=sflag, size = 0x4, scoped, tag = 'scoped memory for mlp_forward.1']
    #allocation10 [shape = 'u8[65536]{0}', space=vmem, size = 0x10000, scoped, tag = 'input window, operand 5, single buffered']
    #allocation11 [shape = 'u8[512]{0}', space=vmem, size = 0x400, scoped, tag = 'input window, operand 6, single buffered']
    #allocation12 [shape = 's32[1]{0}', space=sflag, size = 0x4, scoped, tag = 'scoped memory for mlp_forward.1']
    #allocation13 [shape = 'u8[16384]{0}', space=vmem, size = 0x4000, scoped, tag = 'output window, operand 0, single buffered']
    %12 = vsyncpa [#allocation3], 0
    %13 = vsyncpa [#allocation6], 0
    %14 = vsyncpa [#allocation9], 0
    %15 = vsyncpa [#allocation12], 0
    %16 = vsyncpa [#allocation4], 0
    // Predicated region
    $region2: #{mlp_forward.1} parent=1 // pred_check
      _
    $region3: #{mlp_forward.1} parent=1 // pred_check_branch
      %18 = sbr.rel (0) target = $region5
    $region4: #{mlp_forward.1} parent=1 // pred_region
      _
    $region5: #{mlp_forward.1} parent=1 // pred_fallthru
      _
    // Predicated region
    $region6: #{mlp_forward.1} parent=1 // pred_check
      _
    $region7: #{mlp_forward.1} parent=1 // pred_check_branch
      %20 = sbr.rel (0) target = $region9
    $region8: #{mlp_forward.1} parent=1 // pred_region
      %s22 = ssub.s32 49152, 49152
      %23 = vsyncadd [#allocation3], %s22
      %s24 = sshll.u32 [#allocation2], 4
      %s25 = int_to_ptr.vmem [resolvable:$true] %s24
      %30 = dma.hbm_to_vmem [thread:$0]  %s1, 49152, %s25, [#allocation3], 128, 128, 8
    $region9: #{mlp_forward.1} parent=1 // pred_fallthru
      _
    // Predicated region
    $region10: #{mlp_forward.1} parent=1 // pred_check
      _
    $region11: #{mlp_forward.1} parent=1 // pred_check_branch
      %32 = sbr.rel (0) target = $region13
    $region12: #{mlp_forward.1} parent=1 // pred_region
      %s34 = ssub.s32 32, 32
      %35 = vsyncadd [#allocation6], %s34
      %s37 = sshll.u32 [#allocation5], 4
      %s38 = int_to_ptr.vmem [resolvable:$true] %s37
      %40 = dma.hbm_to_vmem [thread:$0]  %s2, 32, %s38, [#allocation6]
    $region13: #{mlp_forward.1} parent=1 // pred_fallthru
      _
    // Predicated region
    $region14: #{mlp_forward.1} parent=1 // pred_check
      _
    $region15: #{mlp_forward.1} parent=1 // pred_check_branch
      %42 = sbr.rel (0) target = $region17
    $region16: #{mlp_forward.1} parent=1 // pred_region
      %s44 = ssub.s32 4096, 4096
      %45 = vsyncadd [#allocation6], %s44
      %s46 = sshll.u32 [#allocation7], 4
      %s47 = int_to_ptr.vmem [resolvable:$true] %s46
      %52 = dma.hbm_to_vmem [thread:$0]  %s3, 4096, %s47, [#allocation6], 128, 128, 8
    $region17: #{mlp_forward.1} parent=1 // pred_fallthru
      _
    // Predicated region
    $region18: #{mlp_forward.1} parent=1 // pred_check
      _
    $region19: #{mlp_forward.1} parent=1 // pred_check_branch
      %54 = sbr.rel (0) target = $region21
    $region20: #{mlp_forward.1} parent=1 // pred_region
      %s56 = ssub.s32 32, 32
      %57 = vsyncadd [#allocation9], %s56
      %s59 = sshll.u32 [#allocation8], 4
      %s60 = int_to_ptr.vmem [resolvable:$true] %s59
      %62 = dma.hbm_to_vmem [thread:$0]  %s4, 32, %s60, [#allocation9]
    $region21: #{mlp_forward.1} parent=1 // pred_fallthru
      _
    // Predicated region
    $region22: #{mlp_forward.1} parent=1 // pred_check
      _
    $region23: #{mlp_forward.1} parent=1 // pred_check_branch
      %64 = sbr.rel (0) target = $region25
    $region24: #{mlp_forward.1} parent=1 // pred_region
      %s66 = ssub.s32 2048, 2048
      %67 = vsyncadd [#allocation9], %s66
      %s68 = sshll.u32 [#allocation10], 4
      %s69 = int_to_ptr.vmem [resolvable:$true] %s68
      %74 = dma.hbm_to_vmem [thread:$0]  %s5, 2048, %s69, [#allocation9], 64, 64, 4
    $region25: #{mlp_forward.1} parent=1 // pred_fallthru
      _
    // Predicated region
    $region26: #{mlp_forward.1} parent=1 // pred_check
      _
    $region27: #{mlp_forward.1} parent=1 // pred_check_branch
      %76 = sbr.rel (0) target = $region29
    $region28: #{mlp_forward.1} parent=1 // pred_region
      %s78 = ssub.s32 16, 16
      %79 = vsyncadd [#allocation12], %s78
      %s81 = sshll.u32 [#allocation11], 4
      %s82 = int_to_ptr.vmem [resolvable:$true] %s81
      %84 = dma.hbm_to_vmem [thread:$0]  %s6, 16, %s82, [#allocation12]
    $region29: #{mlp_forward.1} parent=1 // pred_fallthru
      _
    // Predicated region
    $region30: #{mlp_forward.1} parent=1 // pred_check
      _
    $region31: #{mlp_forward.1} parent=1 // pred_check_branch
      %86 = sbr.rel (0) target = $region33
    $region32: #{mlp_forward.1} parent=1 // pred_region
      %87 = dma.done [#allocation3], 49152
    $region33: #{mlp_forward.1} parent=1 // pred_fallthru
      _
    // Predicated region
    $region34: #{mlp_forward.1} parent=1 // pred_check
      _
    $region35: #{mlp_forward.1} parent=1 // pred_check_branch
      %89 = sbr.rel (0) target = $region37
    $region36: #{mlp_forward.1} parent=1 // pred_region
      %90 = dma.done [#allocation6], 32
    $region37: #{mlp_forward.1} parent=1 // pred_fallthru
      _
    // Predicated region
    $region38: #{mlp_forward.1} parent=1 // pred_check
      _
    $region39: #{mlp_forward.1} parent=1 // pred_check_branch
      %92 = sbr.rel (0) target = $region41
    $region40: #{mlp_forward.1} parent=1 // pred_region
      %93 = dma.done [#allocation6], 4096
    $region41: #{mlp_forward.1} parent=1 // pred_fallthru
      _
    // Predicated region
    $region42: #{mlp_forward.1} parent=1 // pred_check
      _
    $region43: #{mlp_forward.1} parent=1 // pred_check_branch
      %95 = sbr.rel (0) target = $region45
    $region44: #{mlp_forward.1} parent=1 // pred_region
      %96 = dma.done [#allocation9], 32
    $region45: #{mlp_forward.1} parent=1 // pred_fallthru
      _
    // Predicated region
    $region46: #{mlp_forward.1} parent=1 // pred_check
      _
    $region47: #{mlp_forward.1} parent=1 // pred_check_branch
      %98 = sbr.rel (0) target = $region49
    $region48: #{mlp_forward.1} parent=1 // pred_region
      %99 = dma.done [#allocation9], 2048
    $region49: #{mlp_forward.1} parent=1 // pred_fallthru
      _
    // Predicated region
    $region50: #{mlp_forward.1} parent=1 // pred_check
      _
    $region51: #{mlp_forward.1} parent=1 // pred_check_branch
      %101 = sbr.rel (0) target = $region53
    $region52: #{mlp_forward.1} parent=1 // pred_region
      %102 = dma.done [#allocation12], 16
    $region53: #{mlp_forward.1} parent=1 // pred_fallthru
      _
    %v104 = vld [vmem:[%s0] sm:$0xff]
    %v105 = vld [vmem:[%s0 + $0x8] sm:$0xff]
    %v106 = vld [vmem:[%s0 + $0x10] sm:$0xff]
    %v107 = vld [vmem:[%s0 + $0x18] sm:$0xff]
    %v108 = vld [vmem:[%s0 + $0x20] sm:$0xff]
    %v109 = vld [vmem:[%s0 + $0x28] sm:$0xff]
    %v110 = vld [vmem:[%s0 + $0x30] sm:$0xff]
    %v111 = vld [vmem:[%s0 + $0x38] sm:$0xff]
    %v112 = vld [vmem:[%s0 + $0x40] sm:$0xff]
    %v113 = vld [vmem:[%s0 + $0x48] sm:$0xff]
    %v114 = vld [vmem:[%s0 + $0x50] sm:$0xff]
    %v115 = vld [vmem:[%s0 + $0x58] sm:$0xff]
    %v116 = vld [vmem:[%s0 + $0x60] sm:$0xff]
    %v117 = vld [vmem:[%s0 + $0x68] sm:$0xff]
    %v118 = vld [vmem:[%s0 + $0x70] sm:$0xff]
    %v119 = vld [vmem:[%s0 + $0x78] sm:$0xff]
    %v120 = vld [vmem:[%s0 + $0x80] sm:$0xff]
    %v121 = vld [vmem:[%s0 + $0x88] sm:$0xff]
    %v122 = vld [vmem:[%s0 + $0x90] sm:$0xff]
    %v123 = vld [vmem:[%s0 + $0x98] sm:$0xff]
    %v124 = vld [vmem:[%s0 + $0xa0] sm:$0xff]
    %v125 = vld [vmem:[%s0 + $0xa8] sm:$0xff]
    %v126 = vld [vmem:[%s0 + $0xb0] sm:$0xff]
    %v127 = vld [vmem:[%s0 + $0xb8] sm:$0xff]
    %v128 = vld [vmem:[%s0 + $0xc0] sm:$0xff]
    %v129 = vld [vmem:[%s0 + $0xc8] sm:$0xff]
    %v130 = vld [vmem:[%s0 + $0xd0] sm:$0xff]
    %v131 = vld [vmem:[%s0 + $0xd8] sm:$0xff]
    %v132 = vld [vmem:[%s0 + $0xe0] sm:$0xff]
    %v133 = vld [vmem:[%s0 + $0xe8] sm:$0xff]
    %v134 = vld [vmem:[%s0 + $0xf0] sm:$0xff]
    %v135 = vld [vmem:[%s0 + $0xf8] sm:$0xff]
    %v136 = vld [vmem:[%s0 + $0x100] sm:$0xff]
    %v137 = vld [vmem:[%s0 + $0x108] sm:$0xff]
    %v138 = vld [vmem:[%s0 + $0x110] sm:$0xff]
    %v139 = vld [vmem:[%s0 + $0x118] sm:$0xff]
    %v140 = vld [vmem:[%s0 + $0x120] sm:$0xff]
    %v141 = vld [vmem:[%s0 + $0x128] sm:$0xff]
    %v142 = vld [vmem:[%s0 + $0x130] sm:$0xff]
    %v143 = vld [vmem:[%s0 + $0x138] sm:$0xff]
    %v144 = vld [vmem:[%s0 + $0x140] sm:$0xff]
    %v145 = vld [vmem:[%s0 + $0x148] sm:$0xff]
    %v146 = vld [vmem:[%s0 + $0x150] sm:$0xff]
    %v147 = vld [vmem:[%s0 + $0x158] sm:$0xff]
    %v148 = vld [vmem:[%s0 + $0x160] sm:$0xff]
    %v149 = vld [vmem:[%s0 + $0x168] sm:$0xff]
    %v150 = vld [vmem:[%s0 + $0x170] sm:$0xff]
    %v151 = vld [vmem:[%s0 + $0x178] sm:$0xff]
    %v152 = vld [vmem:[%s0 + $0x180] sm:$0xff]
    %v153 = vld [vmem:[%s0 + $0x188] sm:$0xff]
    %v154 = vld [vmem:[%s0 + $0x190] sm:$0xff]
    %v155 = vld [vmem:[%s0 + $0x198] sm:$0xff]
    %v156 = vld [vmem:[%s0 + $0x1a0] sm:$0xff]
    %v157 = vld [vmem:[%s0 + $0x1a8] sm:$0xff]
    %v158 = vld [vmem:[%s0 + $0x1b0] sm:$0xff]
    %v159 = vld [vmem:[%s0 + $0x1b8] sm:$0xff]
    %v160 = vld [vmem:[%s0 + $0x1c0] sm:$0xff]
    %v161 = vld [vmem:[%s0 + $0x1c8] sm:$0xff]
    %v162 = vld [vmem:[%s0 + $0x1d0] sm:$0xff]
    %v163 = vld [vmem:[%s0 + $0x1d8] sm:$0xff]
    %v164 = vld [vmem:[%s0 + $0x1e0] sm:$0xff]
    %v165 = vld [vmem:[%s0 + $0x1e8] sm:$0xff]
    %v166 = vld [vmem:[%s0 + $0x1f0] sm:$0xff]
    %v167 = vld [vmem:[%s0 + $0x1f8] sm:$0xff]
    %v168 = vld [vmem:[%s0 + $0x200] sm:$0xff]
    %v169 = vld [vmem:[%s0 + $0x208] sm:$0xff]
    %v170 = vld [vmem:[%s0 + $0x210] sm:$0xff]
    %v171 = vld [vmem:[%s0 + $0x218] sm:$0xff]
    %v172 = vld [vmem:[%s0 + $0x220] sm:$0xff]
    %v173 = vld [vmem:[%s0 + $0x228] sm:$0xff]
    %v174 = vld [vmem:[%s0 + $0x230] sm:$0xff]
    %v175 = vld [vmem:[%s0 + $0x238] sm:$0xff]
    %v176 = vld [vmem:[%s0 + $0x240] sm:$0xff]
    %v177 = vld [vmem:[%s0 + $0x248] sm:$0xff]
    %v178 = vld [vmem:[%s0 + $0x250] sm:$0xff]
    %v179 = vld [vmem:[%s0 + $0x258] sm:$0xff]
    %v180 = vld [vmem:[%s0 + $0x260] sm:$0xff]
    %v181 = vld [vmem:[%s0 + $0x268] sm:$0xff]
    %v182 = vld [vmem:[%s0 + $0x270] sm:$0xff]
    %v183 = vld [vmem:[%s0 + $0x278] sm:$0xff]
    %v184 = vld [vmem:[%s0 + $0x280] sm:$0xff]
    %v185 = vld [vmem:[%s0 + $0x288] sm:$0xff]
    %v186 = vld [vmem:[%s0 + $0x290] sm:$0xff]
    %v187 = vld [vmem:[%s0 + $0x298] sm:$0xff]
    %v188 = vld [vmem:[%s0 + $0x2a0] sm:$0xff]
    %v189 = vld [vmem:[%s0 + $0x2a8] sm:$0xff]
    %v190 = vld [vmem:[%s0 + $0x2b0] sm:$0xff]
    %v191 = vld [vmem:[%s0 + $0x2b8] sm:$0xff]
    %v192 = vld [vmem:[%s0 + $0x2c0] sm:$0xff]
    %v193 = vld [vmem:[%s0 + $0x2c8] sm:$0xff]
    %v194 = vld [vmem:[%s0 + $0x2d0] sm:$0xff]
    %v195 = vld [vmem:[%s0 + $0x2d8] sm:$0xff]
    %v196 = vld [vmem:[%s0 + $0x2e0] sm:$0xff]
    %v197 = vld [vmem:[%s0 + $0x2e8] sm:$0xff]
    %v198 = vld [vmem:[%s0 + $0x2f0] sm:$0xff]
    %v199 = vld [vmem:[%s0 + $0x2f8] sm:$0xff]
    %v296 = vcombine.low %v104, %v110
    %v297 = vcombine.high %v104, %v110
    %v298 = vcombine.low %v116, %v122
    %v299 = vcombine.high %v116, %v122
    %v301 = vunpack.c.l.s4 1983009808
    %v302 = vunpack.c.0.s8 %v301
    %v303 = vlaneseq
    %v304 = vshrl.u32 %v303, 7
    %v305 = vsub.s32 %v302, %v304
    %v306 = vrot.slane %v296, %v305
    %v308 = vunpack.c.l.s4 1983009808
    %v309 = vunpack.c.0.s8 %v308
    %v310 = vlaneseq
    %v311 = vshrl.u32 %v310, 7
    %v312 = vsub.s32 %v309, %v311
    %v313 = vrot.slane %v297, %v312
    %v315 = vunpack.c.l.s4 1983009808
    %v316 = vunpack.c.0.s8 %v315
    %v317 = vlaneseq
    %v318 = vshrl.u32 %v317, 7
    %v319 = vsub.s32 %v316, %v318
    %v320 = vrot.slane %v298, %v319
    %v322 = vunpack.c.l.s4 1983009808
    %v323 = vunpack.c.0.s8 %v322
    %v324 = vlaneseq
    %v325 = vshrl.u32 %v324, 7
    %v326 = vsub.s32 %v323, %v325
    %v327 = vrot.slane %v299, %v326
    %v328 = vcombine.low %v306, %v320
    %v329 = vcombine.high %v306, %v320
    %v330 = vcombine.low %v313, %v327
    %v331 = vcombine.high %v313, %v327
    %v332 = vcombine.low %v105, %v111
    %v333 = vcombine.high %v105, %v111
    %v334 = vcombine.low %v117, %v123
    %v335 = vcombine.high %v117, %v123
    %v337 = vunpack.c.l.s4 1983009808
    %v338 = vunpack.c.0.s8 %v337
    %v339 = vlaneseq
    %v340 = vshrl.u32 %v339, 7
    %v341 = vsub.s32 %v338, %v340
    %v342 = vrot.slane %v332, %v341
    %v344 = vunpack.c.l.s4 1983009808
    %v345 = vunpack.c.0.s8 %v344
    %v346 = vlaneseq
    %v347 = vshrl.u32 %v346, 7
    %v348 = vsub.s32 %v345, %v347
    %v349 = vrot.slane %v333, %v348
    %v351 = vunpack.c.l.s4 1983009808
    %v352 = vunpack.c.0.s8 %v351
    %v353 = vlaneseq
    %v354 = vshrl.u32 %v353, 7
    %v355 = vsub.s32 %v352, %v354
    %v356 = vrot.slane %v334, %v355
    %v358 = vunpack.c.l.s4 1983009808
    %v359 = vunpack.c.0.s8 %v358
    %v360 = vlaneseq
    %v361 = vshrl.u32 %v360, 7
    %v362 = vsub.s32 %v359, %v361
    %v363 = vrot.slane %v335, %v362
    %v364 = vcombine.low %v342, %v356
    %v365 = vcombine.high %v342, %v356
    %v366 = vcombine.low %v349, %v363
    %v367 = vcombine.high %v349, %v363
    %v368 = vcombine.low %v106, %v112
    %v369 = vcombine.high %v106, %v112
    %v370 = vcombine.low %v118, %v124
    %v371 = vcombine.high %v118, %v124
    %v373 = vunpack.c.l.s4 1983009808
    %v374 = vunpack.c.0.s8 %v373
    %v375 = vlaneseq
    %v376 = vshrl.u32 %v375, 7
    %v377 = vsub.s32 %v374, %v376
    %v378 = vrot.slane %v368, %v377
    %v380 = vunpack.c.l.s4 1983009808
    %v381 = vunpack.c.0.s8 %v380
    %v382 = vlaneseq
    %v383 = vshrl.u32 %v382, 7
    %v384 = vsub.s32 %v381, %v383
    %v385 = vrot.slane %v369, %v384
    %v387 = vunpack.c.l.s4 1983009808
    %v388 = vunpack.c.0.s8 %v387
    %v389 = vlaneseq
    %v390 = vshrl.u32 %v389, 7
    %v391 = vsub.s32 %v388, %v390
    %v392 = vrot.slane %v370, %v391
    %v394 = vunpack.c.l.s4 1983009808
    %v395 = vunpack.c.0.s8 %v394
    %v396 = vlaneseq
    %v397 = vshrl.u32 %v396, 7
    %v398 = vsub.s32 %v395, %v397
    %v399 = vrot.slane %v371, %v398
    %v400 = vcombine.low %v378, %v392
    %v401 = vcombine.high %v378, %v392
    %v402 = vcombine.low %v385, %v399
    %v403 = vcombine.high %v385, %v399
    %v404 = vcombine.low %v107, %v113
    %v405 = vcombine.high %v107, %v113
    %v406 = vcombine.low %v119, %v125
    %v407 = vcombine.high %v119, %v125
    %v409 = vunpack.c.l.s4 1983009808
    %v410 = vunpack.c.0.s8 %v409
    %v411 = vlaneseq
    %v412 = vshrl.u32 %v411, 7
    %v413 = vsub.s32 %v410, %v412
    %v414 = vrot.slane %v404, %v413
    %v416 = vunpack.c.l.s4 1983009808
    %v417 = vunpack.c.0.s8 %v416
    %v418 = vlaneseq
    %v419 = vshrl.u32 %v418, 7
    %v420 = vsub.s32 %v417, %v419
    %v421 = vrot.slane %v405, %v420
    %v423 = vunpack.c.l.s4 1983009808
    %v424 = vunpack.c.0.s8 %v423
    %v425 = vlaneseq
    %v426 = vshrl.u32 %v425, 7
    %v427 = vsub.s32 %v424, %v426
    %v428 = vrot.slane %v406, %v427
    %v430 = vunpack.c.l.s4 1983009808
    %v431 = vunpack.c.0.s8 %v430
    %v432 = vlaneseq
    %v433 = vshrl.u32 %v432, 7
    %v434 = vsub.s32 %v431, %v433
    %v435 = vrot.slane %v407, %v434
    %v436 = vcombine.low %v414, %v428
    %v437 = vcombine.high %v414, %v428
    %v438 = vcombine.low %v421, %v435
    %v439 = vcombine.high %v421, %v435
    %v440 = vcombine.low %v108, %v114
    %v441 = vcombine.high %v108, %v114
    %v442 = vcombine.low %v120, %v126
    %v443 = vcombine.high %v120, %v126
    %v445 = vunpack.c.l.s4 1983009808
    %v446 = vunpack.c.0.s8 %v445
    %v447 = vlaneseq
    %v448 = vshrl.u32 %v447, 7
    %v449 = vsub.s32 %v446, %v448
    %v450 = vrot.slane %v440, %v449
    %v452 = vunpack.c.l.s4 1983009808
    %v453 = vunpack.c.0.s8 %v452
    %v454 = vlaneseq
    %v455 = vshrl.u32 %v454, 7
    %v456 = vsub.s32 %v453, %v455
    %v457 = vrot.slane %v441, %v456
    %v459 = vunpack.c.l.s4 1983009808
    %v460 = vunpack.c.0.s8 %v459
    %v461 = vlaneseq
    %v462 = vshrl.u32 %v461, 7
    %v463 = vsub.s32 %v460, %v462
    %v464 = vrot.slane %v442, %v463
    %v466 = vunpack.c.l.s4 1983009808
    %v467 = vunpack.c.0.s8 %v466
    %v468 = vlaneseq
    %v469 = vshrl.u32 %v468, 7
    %v470 = vsub.s32 %v467, %v469
    %v471 = vrot.slane %v443, %v470
    %v472 = vcombine.low %v450, %v464
    %v473 = vcombine.high %v450, %v464
    %v474 = vcombine.low %v457, %v471
    %v475 = vcombine.high %v457, %v471
    %v476 = vcombine.low %v109, %v115
    %v477 = vcombine.high %v109, %v115
    %v478 = vcombine.low %v121, %v127
    %v479 = vcombine.high %v121, %v127
    %v481 = vunpack.c.l.s4 1983009808
    %v482 = vunpack.c.0.s8 %v481
    %v483 = vlaneseq
    %v484 = vshrl.u32 %v483, 7
    %v485 = vsub.s32 %v482, %v484
    %v486 = vrot.slane %v476, %v485
    %v488 = vunpack.c.l.s4 1983009808
    %v489 = vunpack.c.0.s8 %v488
    %v490 = vlaneseq
    %v491 = vshrl.u32 %v490, 7
    %v492 = vsub.s32 %v489, %v491
    %v493 = vrot.slane %v477, %v492
    %v495 = vunpack.c.l.s4 1983009808
    %v496 = vunpack.c.0.s8 %v495
    %v497 = vlaneseq
    %v498 = vshrl.u32 %v497, 7
    %v499 = vsub.s32 %v496, %v498
    %v500 = vrot.slane %v478, %v499
    %v502 = vunpack.c.l.s4 1983009808
    %v503 = vunpack.c.0.s8 %v502
    %v504 = vlaneseq
    %v505 = vshrl.u32 %v504, 7
    %v506 = vsub.s32 %v503, %v505
    %v507 = vrot.slane %v479, %v506
    %v508 = vcombine.low %v486, %v500
    %v509 = vcombine.high %v486, %v500
    %v510 = vcombine.low %v493, %v507
    %v511 = vcombine.high %v493, %v507
    %v512 = vcombine.low %v128, %v134
    %v513 = vcombine.high %v128, %v134
    %v514 = vcombine.low %v140, %v146
    %v515 = vcombine.high %v140, %v146
    %v517 = vunpack.c.l.s4 1983009808
    %v518 = vunpack.c.0.s8 %v517
    %v519 = vlaneseq
    %v520 = vshrl.u32 %v519, 7
    %v521 = vsub.s32 %v518, %v520
    %v522 = vrot.slane %v512, %v521
    %v524 = vunpack.c.l.s4 1983009808
    %v525 = vunpack.c.0.s8 %v524
    %v526 = vlaneseq
    %v527 = vshrl.u32 %v526, 7
    %v528 = vsub.s32 %v525, %v527
    %v529 = vrot.slane %v513, %v528
    %v531 = vunpack.c.l.s4 1983009808
    %v532 = vunpack.c.0.s8 %v531
    %v533 = vlaneseq
    %v534 = vshrl.u32 %v533, 7
    %v535 = vsub.s32 %v532, %v534
    %v536 = vrot.slane %v514, %v535
    %v538 = vunpack.c.l.s4 1983009808
    %v539 = vunpack.c.0.s8 %v538
    %v540 = vlaneseq
    %v541 = vshrl.u32 %v540, 7
    %v542 = vsub.s32 %v539, %v541
    %v543 = vrot.slane %v515, %v542
    %v544 = vcombine.low %v522, %v536
    %v545 = vcombine.high %v522, %v536
    %v546 = vcombine.low %v529, %v543
    %v547 = vcombine.high %v529, %v543
    %v548 = vcombine.low %v129, %v135
    %v549 = vcombine.high %v129, %v135
    %v550 = vcombine.low %v141, %v147
    %v551 = vcombine.high %v141, %v147
    %v553 = vunpack.c.l.s4 1983009808
    %v554 = vunpack.c.0.s8 %v553
    %v555 = vlaneseq
    %v556 = vshrl.u32 %v555, 7
    %v557 = vsub.s32 %v554, %v556
    %v558 = vrot.slane %v548, %v557
    %v560 = vunpack.c.l.s4 1983009808
    %v561 = vunpack.c.0.s8 %v560
    %v562 = vlaneseq
    %v563 = vshrl.u32 %v562, 7
    %v564 = vsub.s32 %v561, %v563
    %v565 = vrot.slane %v549, %v564
    %v567 = vunpack.c.l.s4 1983009808
    %v568 = vunpack.c.0.s8 %v567
    %v569 = vlaneseq
    %v570 = vshrl.u32 %v569, 7
    %v571 = vsub.s32 %v568, %v570
    %v572 = vrot.slane %v550, %v571
    %v574 = vunpack.c.l.s4 1983009808
    %v575 = vunpack.c.0.s8 %v574
    %v576 = vlaneseq
    %v577 = vshrl.u32 %v576, 7
    %v578 = vsub.s32 %v575, %v577
    %v579 = vrot.slane %v551, %v578
    %v580 = vcombine.low %v558, %v572
    %v581 = vcombine.high %v558, %v572
    %v582 = vcombine.low %v565, %v579
    %v583 = vcombine.high %v565, %v579
    %v584 = vcombine.low %v130, %v136
    %v585 = vcombine.high %v130, %v136
    %v586 = vcombine.low %v142, %v148
    %v587 = vcombine.high %v142, %v148
    %v589 = vunpack.c.l.s4 1983009808
    %v590 = vunpack.c.0.s8 %v589
    %v591 = vlaneseq
    %v592 = vshrl.u32 %v591, 7
    %v593 = vsub.s32 %v590, %v592
    %v594 = vrot.slane %v584, %v593
    %v596 = vunpack.c.l.s4 1983009808
    %v597 = vunpack.c.0.s8 %v596
    %v598 = vlaneseq
    %v599 = vshrl.u32 %v598, 7
    %v600 = vsub.s32 %v597, %v599
    %v601 = vrot.slane %v585, %v600
    %v603 = vunpack.c.l.s4 1983009808
    %v604 = vunpack.c.0.s8 %v603
    %v605 = vlaneseq
    %v606 = vshrl.u32 %v605, 7
    %v607 = vsub.s32 %v604, %v606
    %v608 = vrot.slane %v586, %v607
    %v610 = vunpack.c.l.s4 1983009808
    %v611 = vunpack.c.0.s8 %v610
    %v612 = vlaneseq
    %v613 = vshrl.u32 %v612, 7
    %v614 = vsub.s32 %v611, %v613
    %v615 = vrot.slane %v587, %v614
    %v616 = vcombine.low %v594, %v608
    %v617 = vcombine.high %v594, %v608
    %v618 = vcombine.low %v601, %v615
    %v619 = vcombine.high %v601, %v615
    %v620 = vcombine.low %v131, %v137
    %v621 = vcombine.high %v131, %v137
    %v622 = vcombine.low %v143, %v149
    %v623 = vcombine.high %v143, %v149
    %v625 = vunpack.c.l.s4 1983009808
    %v626 = vunpack.c.0.s8 %v625
    %v627 = vlaneseq
    %v628 = vshrl.u32 %v627, 7
    %v629 = vsub.s32 %v626, %v628
    %v630 = vrot.slane %v620, %v629
    %v632 = vunpack.c.l.s4 1983009808
    %v633 = vunpack.c.0.s8 %v632
    %v634 = vlaneseq
    %v635 = vshrl.u32 %v634, 7
    %v636 = vsub.s32 %v633, %v635
    %v637 = vrot.slane %v621, %v636
    %v639 = vunpack.c.l.s4 1983009808
    %v640 = vunpack.c.0.s8 %v639
    %v641 = vlaneseq
    %v642 = vshrl.u32 %v641, 7
    %v643 = vsub.s32 %v640, %v642
    %v644 = vrot.slane %v622, %v643
    %v646 = vunpack.c.l.s4 1983009808
    %v647 = vunpack.c.0.s8 %v646
    %v648 = vlaneseq
    %v649 = vshrl.u32 %v648, 7
    %v650 = vsub.s32 %v647, %v649
    %v651 = vrot.slane %v623, %v650
    %v652 = vcombine.low %v630, %v644
    %v653 = vcombine.high %v630, %v644
    %v654 = vcombine.low %v637, %v651
    %v655 = vcombine.high %v637, %v651
    %v656 = vcombine.low %v132, %v138
    %v657 = vcombine.high %v132, %v138
    %v658 = vcombine.low %v144, %v150
    %v659 = vcombine.high %v144, %v150
    %v661 = vunpack.c.l.s4 1983009808
    %v662 = vunpack.c.0.s8 %v661
    %v663 = vlaneseq
    %v664 = vshrl.u32 %v663, 7
    %v665 = vsub.s32 %v662, %v664
    %v666 = vrot.slane %v656, %v665
    %v668 = vunpack.c.l.s4 1983009808
    %v669 = vunpack.c.0.s8 %v668
    %v670 = vlaneseq
    %v671 = vshrl.u32 %v670, 7
    %v672 = vsub.s32 %v669, %v671
    %v673 = vrot.slane %v657, %v672
    %v675 = vunpack.c.l.s4 1983009808
    %v676 = vunpack.c.0.s8 %v675
    %v677 = vlaneseq
    %v678 = vshrl.u32 %v677, 7
    %v679 = vsub.s32 %v676, %v678
    %v680 = vrot.slane %v658, %v679
    %v682 = vunpack.c.l.s4 1983009808
    %v683 = vunpack.c.0.s8 %v682
    %v684 = vlaneseq
    %v685 = vshrl.u32 %v684, 7
    %v686 = vsub.s32 %v683, %v685
    %v687 = vrot.slane %v659, %v686
    %v688 = vcombine.low %v666, %v680
    %v689 = vcombine.high %v666, %v680
    %v690 = vcombine.low %v673, %v687
    %v691 = vcombine.high %v673, %v687
    %v692 = vcombine.low %v133, %v139
    %v693 = vcombine.high %v133, %v139
    %v694 = vcombine.low %v145, %v151
    %v695 = vcombine.high %v145, %v151
    %v697 = vunpack.c.l.s4 1983009808
    %v698 = vunpack.c.0.s8 %v697
    %v699 = vlaneseq
    %v700 = vshrl.u32 %v699, 7
    %v701 = vsub.s32 %v698, %v700
    %v702 = vrot.slane %v692, %v701
    %v704 = vunpack.c.l.s4 1983009808
    %v705 = vunpack.c.0.s8 %v704
    %v706 = vlaneseq
    %v707 = vshrl.u32 %v706, 7
    %v708 = vsub.s32 %v705, %v707
    %v709 = vrot.slane %v693, %v708
    %v711 = vunpack.c.l.s4 1983009808
    %v712 = vunpack.c.0.s8 %v711
    %v713 = vlaneseq
    %v714 = vshrl.u32 %v713, 7
    %v715 = vsub.s32 %v712, %v714
    %v716 = vrot.slane %v694, %v715
    %v718 = vunpack.c.l.s4 1983009808
    %v719 = vunpack.c.0.s8 %v718
    %v720 = vlaneseq
    %v721 = vshrl.u32 %v720, 7
    %v722 = vsub.s32 %v719, %v721
    %v723 = vrot.slane %v695, %v722
    %v724 = vcombine.low %v702, %v716
    %v725 = vcombine.high %v702, %v716
    %v726 = vcombine.low %v709, %v723
    %v727 = vcombine.high %v709, %v723
    %v728 = vcombine.low %v152, %v158
    %v729 = vcombine.high %v152, %v158
    %v730 = vcombine.low %v164, %v170
    %v731 = vcombine.high %v164, %v170
    %v733 = vunpack.c.l.s4 1983009808
    %v734 = vunpack.c.0.s8 %v733
    %v735 = vlaneseq
    %v736 = vshrl.u32 %v735, 7
    %v737 = vsub.s32 %v734, %v736
    %v738 = vrot.slane %v728, %v737
    %v740 = vunpack.c.l.s4 1983009808
    %v741 = vunpack.c.0.s8 %v740
    %v742 = vlaneseq
    %v743 = vshrl.u32 %v742, 7
    %v744 = vsub.s32 %v741, %v743
    %v745 = vrot.slane %v729, %v744
    %v747 = vunpack.c.l.s4 1983009808
    %v748 = vunpack.c.0.s8 %v747
    %v749 = vlaneseq
    %v750 = vshrl.u32 %v749, 7
    %v751 = vsub.s32 %v748, %v750
    %v752 = vrot.slane %v730, %v751
    %v754 = vunpack.c.l.s4 1983009808
    %v755 = vunpack.c.0.s8 %v754
    %v756 = vlaneseq
    %v757 = vshrl.u32 %v756, 7
    %v758 = vsub.s32 %v755, %v757
    %v759 = vrot.slane %v731, %v758
    %v760 = vcombine.low %v738, %v752
    %v761 = vcombine.high %v738, %v752
    %v762 = vcombine.low %v745, %v759
    %v763 = vcombine.high %v745, %v759
    %v764 = vcombine.low %v153, %v159
    %v765 = vcombine.high %v153, %v159
    %v766 = vcombine.low %v165, %v171
    %v767 = vcombine.high %v165, %v171
    %v769 = vunpack.c.l.s4 1983009808
    %v770 = vunpack.c.0.s8 %v769
    %v771 = vlaneseq
    %v772 = vshrl.u32 %v771, 7
    %v773 = vsub.s32 %v770, %v772
    %v774 = vrot.slane %v764, %v773
    %v776 = vunpack.c.l.s4 1983009808
    %v777 = vunpack.c.0.s8 %v776
    %v778 = vlaneseq
    %v779 = vshrl.u32 %v778, 7
    %v780 = vsub.s32 %v777, %v779
    %v781 = vrot.slane %v765, %v780
    %v783 = vunpack.c.l.s4 1983009808
    %v784 = vunpack.c.0.s8 %v783
    %v785 = vlaneseq
    %v786 = vshrl.u32 %v785, 7
    %v787 = vsub.s32 %v784, %v786
    %v788 = vrot.slane %v766, %v787
    %v790 = vunpack.c.l.s4 1983009808
    %v791 = vunpack.c.0.s8 %v790
    %v792 = vlaneseq
    %v793 = vshrl.u32 %v792, 7
    %v794 = vsub.s32 %v791, %v793
    %v795 = vrot.slane %v767, %v794
    %v796 = vcombine.low %v774, %v788
    %v797 = vcombine.high %v774, %v788
    %v798 = vcombine.low %v781, %v795
    %v799 = vcombine.high %v781, %v795
    %v800 = vcombine.low %v154, %v160
    %v801 = vcombine.high %v154, %v160
    %v802 = vcombine.low %v166, %v172
    %v803 = vcombine.high %v166, %v172
    %v805 = vunpack.c.l.s4 1983009808
    %v806 = vunpack.c.0.s8 %v805
    %v807 = vlaneseq
    %v808 = vshrl.u32 %v807, 7
    %v809 = vsub.s32 %v806, %v808
    %v810 = vrot.slane %v800, %v809
    %v812 = vunpack.c.l.s4 1983009808
    %v813 = vunpack.c.0.s8 %v812
    %v814 = vlaneseq
    %v815 = vshrl.u32 %v814, 7
    %v816 = vsub.s32 %v813, %v815
    %v817 = vrot.slane %v801, %v816
    %v819 = vunpack.c.l.s4 1983009808
    %v820 = vunpack.c.0.s8 %v819
    %v821 = vlaneseq
    %v822 = vshrl.u32 %v821, 7
    %v823 = vsub.s32 %v820, %v822
    %v824 = vrot.slane %v802, %v823
    %v826 = vunpack.c.l.s4 1983009808
    %v827 = vunpack.c.0.s8 %v826
    %v828 = vlaneseq
    %v829 = vshrl.u32 %v828, 7
    %v830 = vsub.s32 %v827, %v829
    %v831 = vrot.slane %v803, %v830
    %v832 = vcombine.low %v810, %v824
    %v833 = vcombine.high %v810, %v824
    %v834 = vcombine.low %v817, %v831
    %v835 = vcombine.high %v817, %v831
    %v836 = vcombine.low %v155, %v161
    %v837 = vcombine.high %v155, %v161
    %v838 = vcombine.low %v167, %v173
    %v839 = vcombine.high %v167, %v173
    %v841 = vunpack.c.l.s4 1983009808
    %v842 = vunpack.c.0.s8 %v841
    %v843 = vlaneseq
    %v844 = vshrl.u32 %v843, 7
    %v845 = vsub.s32 %v842, %v844
    %v846 = vrot.slane %v836, %v845
    %v848 = vunpack.c.l.s4 1983009808
    %v849 = vunpack.c.0.s8 %v848
    %v850 = vlaneseq
    %v851 = vshrl.u32 %v850, 7
    %v852 = vsub.s32 %v849, %v851
    %v853 = vrot.slane %v837, %v852
    %v855 = vunpack.c.l.s4 1983009808
    %v856 = vunpack.c.0.s8 %v855
    %v857 = vlaneseq
    %v858 = vshrl.u32 %v857, 7
    %v859 = vsub.s32 %v856, %v858
    %v860 = vrot.slane %v838, %v859
    %v862 = vunpack.c.l.s4 1983009808
    %v863 = vunpack.c.0.s8 %v862
    %v864 = vlaneseq
    %v865 = vshrl.u32 %v864, 7
    %v866 = vsub.s32 %v863, %v865
    %v867 = vrot.slane %v839, %v866
    %v868 = vcombine.low %v846, %v860
    %v869 = vcombine.high %v846, %v860
    %v870 = vcombine.low %v853, %v867
    %v871 = vcombine.high %v853, %v867
    %v872 = vcombine.low %v156, %v162
    %v873 = vcombine.high %v156, %v162
    %v874 = vcombine.low %v168, %v174
    %v875 = vcombine.high %v168, %v174
    %v877 = vunpack.c.l.s4 1983009808
    %v878 = vunpack.c.0.s8 %v877
    %v879 = vlaneseq
    %v880 = vshrl.u32 %v879, 7
    %v881 = vsub.s32 %v878, %v880
    %v882 = vrot.slane %v872, %v881
    %v884 = vunpack.c.l.s4 1983009808
    %v885 = vunpack.c.0.s8 %v884
    %v886 = vlaneseq
    %v887 = vshrl.u32 %v886, 7
    %v888 = vsub.s32 %v885, %v887
    %v889 = vrot.slane %v873, %v888
    %v891 = vunpack.c.l.s4 1983009808
    %v892 = vunpack.c.0.s8 %v891
    %v893 = vlaneseq
    %v894 = vshrl.u32 %v893, 7
    %v895 = vsub.s32 %v892, %v894
    %v896 = vrot.slane %v874, %v895
    %v898 = vunpack.c.l.s4 1983009808
    %v899 = vunpack.c.0.s8 %v898
    %v900 = vlaneseq
    %v901 = vshrl.u32 %v900, 7
    %v902 = vsub.s32 %v899, %v901
    %v903 = vrot.slane %v875, %v902
    %v904 = vcombine.low %v882, %v896
    %v905 = vcombine.high %v882, %v896
    %v906 = vcombine.low %v889, %v903
    %v907 = vcombine.high %v889, %v903
    %v908 = vcombine.low %v157, %v163
    %v909 = vcombine.high %v157, %v163
    %v910 = vcombine.low %v169, %v175
    %v911 = vcombine.high %v169, %v175
    %v913 = vunpack.c.l.s4 1983009808
    %v914 = vunpack.c.0.s8 %v913
    %v915 = vlaneseq
    %v916 = vshrl.u32 %v915, 7
    %v917 = vsub.s32 %v914, %v916
    %v918 = vrot.slane %v908, %v917
    %v920 = vunpack.c.l.s4 1983009808
    %v921 = vunpack.c.0.s8 %v920
    %v922 = vlaneseq
    %v923 = vshrl.u32 %v922, 7
    %v924 = vsub.s32 %v921, %v923
    %v925 = vrot.slane %v909, %v924
    %v927 = vunpack.c.l.s4 1983009808
    %v928 = vunpack.c.0.s8 %v927
    %v929 = vlaneseq
    %v930 = vshrl.u32 %v929, 7
    %v931 = vsub.s32 %v928, %v930
    %v932 = vrot.slane %v910, %v931
    %v934 = vunpack.c.l.s4 1983009808
    %v935 = vunpack.c.0.s8 %v934
    %v936 = vlaneseq
    %v937 = vshrl.u32 %v936, 7
    %v938 = vsub.s32 %v935, %v937
    %v939 = vrot.slane %v911, %v938
    %v940 = vcombine.low %v918, %v932
    %v941 = vcombine.high %v918, %v932
    %v942 = vcombine.low %v925, %v939
    %v943 = vcombine.high %v925, %v939
    %v944 = vcombine.low %v176, %v182
    %v945 = vcombine.high %v176, %v182
    %v946 = vcombine.low %v188, %v194
    %v947 = vcombine.high %v188, %v194
    %v949 = vunpack.c.l.s4 1983009808
    %v950 = vunpack.c.0.s8 %v949
    %v951 = vlaneseq
    %v952 = vshrl.u32 %v951, 7
    %v953 = vsub.s32 %v950, %v952
    %v954 = vrot.slane %v944, %v953
    %v956 = vunpack.c.l.s4 1983009808
    %v957 = vunpack.c.0.s8 %v956
    %v958 = vlaneseq
    %v959 = vshrl.u32 %v958, 7
    %v960 = vsub.s32 %v957, %v959
    %v961 = vrot.slane %v945, %v960
    %v963 = vunpack.c.l.s4 1983009808
    %v964 = vunpack.c.0.s8 %v963
    %v965 = vlaneseq
    %v966 = vshrl.u32 %v965, 7
    %v967 = vsub.s32 %v964, %v966
    %v968 = vrot.slane %v946, %v967
    %v970 = vunpack.c.l.s4 1983009808
    %v971 = vunpack.c.0.s8 %v970
    %v972 = vlaneseq
    %v973 = vshrl.u32 %v972, 7
    %v974 = vsub.s32 %v971, %v973
    %v975 = vrot.slane %v947, %v974
    %v976 = vcombine.low %v954, %v968
    %v977 = vcombine.high %v954, %v968
    %v978 = vcombine.low %v961, %v975
    %v979 = vcombine.high %v961, %v975
    %v980 = vcombine.low %v177, %v183
    %v981 = vcombine.high %v177, %v183
    %v982 = vcombine.low %v189, %v195
    %v983 = vcombine.high %v189, %v195
    %v985 = vunpack.c.l.s4 1983009808
    %v986 = vunpack.c.0.s8 %v985
    %v987 = vlaneseq
    %v988 = vshrl.u32 %v987, 7
    %v989 = vsub.s32 %v986, %v988
    %v990 = vrot.slane %v980, %v989
    %v992 = vunpack.c.l.s4 1983009808
    %v993 = vunpack.c.0.s8 %v992
    %v994 = vlaneseq
    %v995 = vshrl.u32 %v994, 7
    %v996 = vsub.s32 %v993, %v995
    %v997 = vrot.slane %v981, %v996
    %v999 = vunpack.c.l.s4 1983009808
    %v1000 = vunpack.c.0.s8 %v999
    %v1001 = vlaneseq
    %v1002 = vshrl.u32 %v1001, 7
    %v1003 = vsub.s32 %v1000, %v1002
    %v1004 = vrot.slane %v982, %v1003
    %v1006 = vunpack.c.l.s4 1983009808
    %v1007 = vunpack.c.0.s8 %v1006
    %v1008 = vlaneseq
    %v1009 = vshrl.u32 %v1008, 7
    %v1010 = vsub.s32 %v1007, %v1009
    %v1011 = vrot.slane %v983, %v1010
    %v1012 = vcombine.low %v990, %v1004
    %v1013 = vcombine.high %v990, %v1004
    %v1014 = vcombine.low %v997, %v1011
    %v1015 = vcombine.high %v997, %v1011
    %v1016 = vcombine.low %v178, %v184
    %v1017 = vcombine.high %v178, %v184
    %v1018 = vcombine.low %v190, %v196
    %v1019 = vcombine.high %v190, %v196
    %v1021 = vunpack.c.l.s4 1983009808
    %v1022 = vunpack.c.0.s8 %v1021
    %v1023 = vlaneseq
    %v1024 = vshrl.u32 %v1023, 7
    %v1025 = vsub.s32 %v1022, %v1024
    %v1026 = vrot.slane %v1016, %v1025
    %v1028 = vunpack.c.l.s4 1983009808
    %v1029 = vunpack.c.0.s8 %v1028
    %v1030 = vlaneseq
    %v1031 = vshrl.u32 %v1030, 7
    %v1032 = vsub.s32 %v1029, %v1031
    %v1033 = vrot.slane %v1017, %v1032
    %v1035 = vunpack.c.l.s4 1983009808
    %v1036 = vunpack.c.0.s8 %v1035
    %v1037 = vlaneseq
    %v1038 = vshrl.u32 %v1037, 7
    %v1039 = vsub.s32 %v1036, %v1038
    %v1040 = vrot.slane %v1018, %v1039
    %v1042 = vunpack.c.l.s4 1983009808
    %v1043 = vunpack.c.0.s8 %v1042
    %v1044 = vlaneseq
    %v1045 = vshrl.u32 %v1044, 7
    %v1046 = vsub.s32 %v1043, %v1045
    %v1047 = vrot.slane %v1019, %v1046
    %v1048 = vcombine.low %v1026, %v1040
    %v1049 = vcombine.high %v1026, %v1040
    %v1050 = vcombine.low %v1033, %v1047
    %v1051 = vcombine.high %v1033, %v1047
    %v1052 = vcombine.low %v179, %v185
    %v1053 = vcombine.high %v179, %v185
    %v1054 = vcombine.low %v191, %v197
    %v1055 = vcombine.high %v191, %v197
    %v1057 = vunpack.c.l.s4 1983009808
    %v1058 = vunpack.c.0.s8 %v1057
    %v1059 = vlaneseq
    %v1060 = vshrl.u32 %v1059, 7
    %v1061 = vsub.s32 %v1058, %v1060
    %v1062 = vrot.slane %v1052, %v1061
    %v1064 = vunpack.c.l.s4 1983009808
    %v1065 = vunpack.c.0.s8 %v1064
    %v1066 = vlaneseq
    %v1067 = vshrl.u32 %v1066, 7
    %v1068 = vsub.s32 %v1065, %v1067
    %v1069 = vrot.slane %v1053, %v1068
    %v1071 = vunpack.c.l.s4 1983009808
    %v1072 = vunpack.c.0.s8 %v1071
    %v1073 = vlaneseq
    %v1074 = vshrl.u32 %v1073, 7
    %v1075 = vsub.s32 %v1072, %v1074
    %v1076 = vrot.slane %v1054, %v1075
    %v1078 = vunpack.c.l.s4 1983009808
    %v1079 = vunpack.c.0.s8 %v1078
    %v1080 = vlaneseq
    %v1081 = vshrl.u32 %v1080, 7
    %v1082 = vsub.s32 %v1079, %v1081
    %v1083 = vrot.slane %v1055, %v1082
    %v1084 = vcombine.low %v1062, %v1076
    %v1085 = vcombine.high %v1062, %v1076
    %v1086 = vcombine.low %v1069, %v1083
    %v1087 = vcombine.high %v1069, %v1083
    %v1088 = vcombine.low %v180, %v186
    %v1089 = vcombine.high %v180, %v186
    %v1090 = vcombine.low %v192, %v198
    %v1091 = vcombine.high %v192, %v198
    %v1093 = vunpack.c.l.s4 1983009808
    %v1094 = vunpack.c.0.s8 %v1093
    %v1095 = vlaneseq
    %v1096 = vshrl.u32 %v1095, 7
    %v1097 = vsub.s32 %v1094, %v1096
    %v1098 = vrot.slane %v1088, %v1097
    %v1100 = vunpack.c.l.s4 1983009808
    %v1101 = vunpack.c.0.s8 %v1100
    %v1102 = vlaneseq
    %v1103 = vshrl.u32 %v1102, 7
    %v1104 = vsub.s32 %v1101, %v1103
    %v1105 = vrot.slane %v1089, %v1104
    %v1107 = vunpack.c.l.s4 1983009808
    %v1108 = vunpack.c.0.s8 %v1107
    %v1109 = vlaneseq
    %v1110 = vshrl.u32 %v1109, 7
    %v1111 = vsub.s32 %v1108, %v1110
    %v1112 = vrot.slane %v1090, %v1111
    %v1114 = vunpack.c.l.s4 1983009808
    %v1115 = vunpack.c.0.s8 %v1114
    %v1116 = vlaneseq
    %v1117 = vshrl.u32 %v1116, 7
    %v1118 = vsub.s32 %v1115, %v1117
    %v1119 = vrot.slane %v1091, %v1118
    %v1120 = vcombine.low %v1098, %v1112
    %v1121 = vcombine.high %v1098, %v1112
    %v1122 = vcombine.low %v1105, %v1119
    %v1123 = vcombine.high %v1105, %v1119
    %v1124 = vcombine.low %v181, %v187
    %v1125 = vcombine.high %v181, %v187
    %v1126 = vcombine.low %v193, %v199
    %v1127 = vcombine.high %v193, %v199
    %v1129 = vunpack.c.l.s4 1983009808
    %v1130 = vunpack.c.0.s8 %v1129
    %v1131 = vlaneseq
    %v1132 = vshrl.u32 %v1131, 7
    %v1133 = vsub.s32 %v1130, %v1132
    %v1134 = vrot.slane %v1124, %v1133
    %v1136 = vunpack.c.l.s4 1983009808
    %v1137 = vunpack.c.0.s8 %v1136
    %v1138 = vlaneseq
    %v1139 = vshrl.u32 %v1138, 7
    %v1140 = vsub.s32 %v1137, %v1139
    %v1141 = vrot.slane %v1125, %v1140
    %v1143 = vunpack.c.l.s4 1983009808
    %v1144 = vunpack.c.0.s8 %v1143
    %v1145 = vlaneseq
    %v1146 = vshrl.u32 %v1145, 7
    %v1147 = vsub.s32 %v1144, %v1146
    %v1148 = vrot.slane %v1126, %v1147
    %v1150 = vunpack.c.l.s4 1983009808
    %v1151 = vunpack.c.0.s8 %v1150
    %v1152 = vlaneseq
    %v1153 = vshrl.u32 %v1152, 7
    %v1154 = vsub.s32 %v1151, %v1153
    %v1155 = vrot.slane %v1127, %v1154
    %v1156 = vcombine.low %v1134, %v1148
    %v1157 = vcombine.high %v1134, %v1148
    %v1158 = vcombine.low %v1141, %v1155
    %v1159 = vcombine.high %v1141, %v1155
    %v1256 = vpack.c.bf16 %v544, %v328
    %v1257 = vpack.c.bf16 %v545, %v329
    %v1258 = vpack.c.bf16 %v546, %v330
    %v1259 = vpack.c.bf16 %v547, %v331
    %v1260 = vpack.c.bf16 %v580, %v364
    %v1261 = vpack.c.bf16 %v581, %v365
    %v1262 = vpack.c.bf16 %v582, %v366
    %v1263 = vpack.c.bf16 %v583, %v367
    %v1264 = vpack.c.bf16 %v616, %v400
    %v1265 = vpack.c.bf16 %v617, %v401
    %v1266 = vpack.c.bf16 %v618, %v402
    %v1267 = vpack.c.bf16 %v619, %v403
    %v1268 = vpack.c.bf16 %v652, %v436
    %v1269 = vpack.c.bf16 %v653, %v437
    %v1270 = vpack.c.bf16 %v654, %v438
    %v1271 = vpack.c.bf16 %v655, %v439
    %v1272 = vpack.c.bf16 %v688, %v472
    %v1273 = vpack.c.bf16 %v689, %v473
    %v1274 = vpack.c.bf16 %v690, %v474
    %v1275 = vpack.c.bf16 %v691, %v475
    %v1276 = vpack.c.bf16 %v724, %v508
    %v1277 = vpack.c.bf16 %v725, %v509
    %v1278 = vpack.c.bf16 %v726, %v510
    %v1279 = vpack.c.bf16 %v727, %v511
    %v1280 = vpack.c.bf16 %v976, %v760
    %v1281 = vpack.c.bf16 %v977, %v761
    %v1282 = vpack.c.bf16 %v978, %v762
    %v1283 = vpack.c.bf16 %v979, %v763
    %v1284 = vpack.c.bf16 %v1012, %v796
    %v1285 = vpack.c.bf16 %v1013, %v797
    %v1286 = vpack.c.bf16 %v1014, %v798
    %v1287 = vpack.c.bf16 %v1015, %v799
    %v1288 = vpack.c.bf16 %v1048, %v832
    %v1289 = vpack.c.bf16 %v1049, %v833
    %v1290 = vpack.c.bf16 %v1050, %v834
    %v1291 = vpack.c.bf16 %v1051, %v835
    %v1292 = vpack.c.bf16 %v1084, %v868
    %v1293 = vpack.c.bf16 %v1085, %v869
    %v1294 = vpack.c.bf16 %v1086, %v870
    %v1295 = vpack.c.bf16 %v1087, %v871
    %v1296 = vpack.c.bf16 %v1120, %v904
    %v1297 = vpack.c.bf16 %v1121, %v905
    %v1298 = vpack.c.bf16 %v1122, %v906
    %v1299 = vpack.c.bf16 %v1123, %v907
    %v1300 = vpack.c.bf16 %v1156, %v940
    %v1301 = vpack.c.bf16 %v1157, %v941
    %v1302 = vpack.c.bf16 %v1158, %v942
    %v1303 = vpack.c.bf16 %v1159, %v943
    %v1304 = vld [vmem:[#allocation2] sm:$0xff]
    %v1305 = vld [vmem:[#allocation2 + $0x8] sm:$0xff]
    %v1306 = vld [vmem:[#allocation2 + $0x10] sm:$0xff]
    %v1307 = vld [vmem:[#allocation2 + $0x18] sm:$0xff]
    %v1308 = vld [vmem:[#allocation2 + $0x20] sm:$0xff]
    %v1309 = vld [vmem:[#allocation2 + $0x28] sm:$0xff]
    %v1310 = vld [vmem:[#allocation2 + $0x30] sm:$0xff]
    %v1311 = vld [vmem:[#allocation2 + $0x38] sm:$0xff]
    %v1312 = vld [vmem:[#allocation2 + $0x40] sm:$0xff]
    %v1313 = vld [vmem:[#allocation2 + $0x48] sm:$0xff]
    %v1314 = vld [vmem:[#allocation2 + $0x50] sm:$0xff]
    %v1315 = vld [vmem:[#allocation2 + $0x58] sm:$0xff]
    %v1316 = vld [vmem:[#allocation2 + $0x60] sm:$0xff]
    %v1317 = vld [vmem:[#allocation2 + $0x68] sm:$0xff]
    %v1318 = vld [vmem:[#allocation2 + $0x70] sm:$0xff]
    %v1319 = vld [vmem:[#allocation2 + $0x78] sm:$0xff]
    %v1320 = vld [vmem:[#allocation2 + $0x80] sm:$0xff]
    %v1321 = vld [vmem:[#allocation2 + $0x88] sm:$0xff]
    %v1322 = vld [vmem:[#allocation2 + $0x90] sm:$0xff]
    %v1323 = vld [vmem:[#allocation2 + $0x98] sm:$0xff]
    %v1324 = vld [vmem:[#allocation2 + $0xa0] sm:$0xff]
    %v1325 = vld [vmem:[#allocation2 + $0xa8] sm:$0xff]
    %v1326 = vld [vmem:[#allocation2 + $0xb0] sm:$0xff]
    %v1327 = vld [vmem:[#allocation2 + $0xb8] sm:$0xff]
    %v1328 = vld [vmem:[#allocation2 + $0xc0] sm:$0xff]
    %v1329 = vld [vmem:[#allocation2 + $0xc8] sm:$0xff]
    %v1330 = vld [vmem:[#allocation2 + $0xd0] sm:$0xff]
    %v1331 = vld [vmem:[#allocation2 + $0xd8] sm:$0xff]
    %v1332 = vld [vmem:[#allocation2 + $0xe0] sm:$0xff]
    %v1333 = vld [vmem:[#allocation2 + $0xe8] sm:$0xff]
    %v1334 = vld [vmem:[#allocation2 + $0xf0] sm:$0xff]
    %v1335 = vld [vmem:[#allocation2 + $0xf8] sm:$0xff]
    %v1336 = vld [vmem:[#allocation2 + $0x100] sm:$0xff]
    %v1337 = vld [vmem:[#allocation2 + $0x108] sm:$0xff]
    %v1338 = vld [vmem:[#allocation2 + $0x110] sm:$0xff]
    %v1339 = vld [vmem:[#allocation2 + $0x118] sm:$0xff]
    %v1340 = vld [vmem:[#allocation2 + $0x120] sm:$0xff]
    %v1341 = vld [vmem:[#allocation2 + $0x128] sm:$0xff]
    %v1342 = vld [vmem:[#allocation2 + $0x130] sm:$0xff]
    %v1343 = vld [vmem:[#allocation2 + $0x138] sm:$0xff]
    %v1344 = vld [vmem:[#allocation2 + $0x140] sm:$0xff]
    %v1345 = vld [vmem:[#allocation2 + $0x148] sm:$0xff]
    %v1346 = vld [vmem:[#allocation2 + $0x150] sm:$0xff]
    %v1347 = vld [vmem:[#allocation2 + $0x158] sm:$0xff]
    %v1348 = vld [vmem:[#allocation2 + $0x160] sm:$0xff]
    %v1349 = vld [vmem:[#allocation2 + $0x168] sm:$0xff]
    %v1350 = vld [vmem:[#allocation2 + $0x170] sm:$0xff]
    %v1351 = vld [vmem:[#allocation2 + $0x178] sm:$0xff]
    %v1352 = vld [vmem:[#allocation2 + $0x180] sm:$0xff]
    %v1353 = vld [vmem:[#allocation2 + $0x188] sm:$0xff]
    %v1354 = vld [vmem:[#allocation2 + $0x190] sm:$0xff]
    %v1355 = vld [vmem:[#allocation2 + $0x198] sm:$0xff]
    %v1356 = vld [vmem:[#allocation2 + $0x1a0] sm:$0xff]
    %v1357 = vld [vmem:[#allocation2 + $0x1a8] sm:$0xff]
    %v1358 = vld [vmem:[#allocation2 + $0x1b0] sm:$0xff]
    %v1359 = vld [vmem:[#allocation2 + $0x1b8] sm:$0xff]
    %v1360 = vld [vmem:[#allocation2 + $0x1c0] sm:$0xff]
    %v1361 = vld [vmem:[#allocation2 + $0x1c8] sm:$0xff]
    %v1362 = vld [vmem:[#allocation2 + $0x1d0] sm:$0xff]
    %v1363 = vld [vmem:[#allocation2 + $0x1d8] sm:$0xff]
    %v1364 = vld [vmem:[#allocation2 + $0x1e0] sm:$0xff]
    %v1365 = vld [vmem:[#allocation2 + $0x1e8] sm:$0xff]
    %v1366 = vld [vmem:[#allocation2 + $0x1f0] sm:$0xff]
    %v1367 = vld [vmem:[#allocation2 + $0x1f8] sm:$0xff]
    %v1368 = vld [vmem:[#allocation2 + $0x200] sm:$0xff]
    %v1369 = vld [vmem:[#allocation2 + $0x208] sm:$0xff]
    %v1370 = vld [vmem:[#allocation2 + $0x210] sm:$0xff]
    %v1371 = vld [vmem:[#allocation2 + $0x218] sm:$0xff]
    %v1372 = vld [vmem:[#allocation2 + $0x220] sm:$0xff]
    %v1373 = vld [vmem:[#allocation2 + $0x228] sm:$0xff]
    %v1374 = vld [vmem:[#allocation2 + $0x230] sm:$0xff]
    %v1375 = vld [vmem:[#allocation2 + $0x238] sm:$0xff]
    %v1376 = vld [vmem:[#allocation2 + $0x240] sm:$0xff]
    %v1377 = vld [vmem:[#allocation2 + $0x248] sm:$0xff]
    %v1378 = vld [vmem:[#allocation2 + $0x250] sm:$0xff]
    %v1379 = vld [vmem:[#allocation2 + $0x258] sm:$0xff]
    %v1380 = vld [vmem:[#allocation2 + $0x260] sm:$0xff]
    %v1381 = vld [vmem:[#allocation2 + $0x268] sm:$0xff]
    %v1382 = vld [vmem:[#allocation2 + $0x270] sm:$0xff]
    %v1383 = vld [vmem:[#allocation2 + $0x278] sm:$0xff]
    %v1384 = vld [vmem:[#allocation2 + $0x280] sm:$0xff]
    %v1385 = vld [vmem:[#allocation2 + $0x288] sm:$0xff]
    %v1386 = vld [vmem:[#allocation2 + $0x290] sm:$0xff]
    %v1387 = vld [vmem:[#allocation2 + $0x298] sm:$0xff]
    %v1388 = vld [vmem:[#allocation2 + $0x2a0] sm:$0xff]
    %v1389 = vld [vmem:[#allocation2 + $0x2a8] sm:$0xff]
    %v1390 = vld [vmem:[#allocation2 + $0x2b0] sm:$0xff]
    %v1391 = vld [vmem:[#allocation2 + $0x2b8] sm:$0xff]
    %v1392 = vld [vmem:[#allocation2 + $0x2c0] sm:$0xff]
    %v1393 = vld [vmem:[#allocation2 + $0x2c8] sm:$0xff]
    %v1394 = vld [vmem:[#allocation2 + $0x2d0] sm:$0xff]
    %v1395 = vld [vmem:[#allocation2 + $0x2d8] sm:$0xff]
    %v1396 = vld [vmem:[#allocation2 + $0x2e0] sm:$0xff]
    %v1397 = vld [vmem:[#allocation2 + $0x2e8] sm:$0xff]
    %v1398 = vld [vmem:[#allocation2 + $0x2f0] sm:$0xff]
    %v1399 = vld [vmem:[#allocation2 + $0x2f8] sm:$0xff]
    %v1400 = vld [vmem:[#allocation2 + $0x300] sm:$0xff]
    %v1401 = vld [vmem:[#allocation2 + $0x308] sm:$0xff]
    %v1402 = vld [vmem:[#allocation2 + $0x310] sm:$0xff]
    %v1403 = vld [vmem:[#allocation2 + $0x318] sm:$0xff]
    %v1404 = vld [vmem:[#allocation2 + $0x320] sm:$0xff]
    %v1405 = vld [vmem:[#allocation2 + $0x328] sm:$0xff]
    %v1406 = vld [vmem:[#allocation2 + $0x330] sm:$0xff]
    %v1407 = vld [vmem:[#allocation2 + $0x338] sm:$0xff]
    %v1408 = vld [vmem:[#allocation2 + $0x340] sm:$0xff]
    %v1409 = vld [vmem:[#allocation2 + $0x348] sm:$0xff]
    %v1410 = vld [vmem:[#allocation2 + $0x350] sm:$0xff]
    %v1411 = vld [vmem:[#allocation2 + $0x358] sm:$0xff]
    %v1412 = vld [vmem:[#allocation2 + $0x360] sm:$0xff]
    %v1413 = vld [vmem:[#allocation2 + $0x368] sm:$0xff]
    %v1414 = vld [vmem:[#allocation2 + $0x370] sm:$0xff]
    %v1415 = vld [vmem:[#allocation2 + $0x378] sm:$0xff]
    %v1416 = vld [vmem:[#allocation2 + $0x380] sm:$0xff]
    %v1417 = vld [vmem:[#allocation2 + $0x388] sm:$0xff]
    %v1418 = vld [vmem:[#allocation2 + $0x390] sm:$0xff]
    %v1419 = vld [vmem:[#allocation2 + $0x398] sm:$0xff]
    %v1420 = vld [vmem:[#allocation2 + $0x3a0] sm:$0xff]
    %v1421 = vld [vmem:[#allocation2 + $0x3a8] sm:$0xff]
    %v1422 = vld [vmem:[#allocation2 + $0x3b0] sm:$0xff]
    %v1423 = vld [vmem:[#allocation2 + $0x3b8] sm:$0xff]
    %v1424 = vld [vmem:[#allocation2 + $0x3c0] sm:$0xff]
    %v1425 = vld [vmem:[#allocation2 + $0x3c8] sm:$0xff]
    %v1426 = vld [vmem:[#allocation2 + $0x3d0] sm:$0xff]
    %v1427 = vld [vmem:[#allocation2 + $0x3d8] sm:$0xff]
    %v1428 = vld [vmem:[#allocation2 + $0x3e0] sm:$0xff]
    %v1429 = vld [vmem:[#allocation2 + $0x3e8] sm:$0xff]
    %v1430 = vld [vmem:[#allocation2 + $0x3f0] sm:$0xff]
    %v1431 = vld [vmem:[#allocation2 + $0x3f8] sm:$0xff]
    %v1432 = vld [vmem:[#allocation2 + $0x400] sm:$0xff]
    %v1433 = vld [vmem:[#allocation2 + $0x408] sm:$0xff]
    %v1434 = vld [vmem:[#allocation2 + $0x410] sm:$0xff]
    %v1435 = vld [vmem:[#allocation2 + $0x418] sm:$0xff]
    %v1436 = vld [vmem:[#allocation2 + $0x420] sm:$0xff]
    %v1437 = vld [vmem:[#allocation2 + $0x428] sm:$0xff]
    %v1438 = vld [vmem:[#allocation2 + $0x430] sm:$0xff]
    %v1439 = vld [vmem:[#allocation2 + $0x438] sm:$0xff]
    %v1440 = vld [vmem:[#allocation2 + $0x440] sm:$0xff]
    %v1441 = vld [vmem:[#allocation2 + $0x448] sm:$0xff]
    %v1442 = vld [vmem:[#allocation2 + $0x450] sm:$0xff]
    %v1443 = vld [vmem:[#allocation2 + $0x458] sm:$0xff]
    %v1444 = vld [vmem:[#allocation2 + $0x460] sm:$0xff]
    %v1445 = vld [vmem:[#allocation2 + $0x468] sm:$0xff]
    %v1446 = vld [vmem:[#allocation2 + $0x470] sm:$0xff]
    %v1447 = vld [vmem:[#allocation2 + $0x478] sm:$0xff]
    %v1448 = vld [vmem:[#allocation2 + $0x480] sm:$0xff]
    %v1449 = vld [vmem:[#allocation2 + $0x488] sm:$0xff]
    %v1450 = vld [vmem:[#allocation2 + $0x490] sm:$0xff]
    %v1451 = vld [vmem:[#allocation2 + $0x498] sm:$0xff]
    %v1452 = vld [vmem:[#allocation2 + $0x4a0] sm:$0xff]
    %v1453 = vld [vmem:[#allocation2 + $0x4a8] sm:$0xff]
    %v1454 = vld [vmem:[#allocation2 + $0x4b0] sm:$0xff]
    %v1455 = vld [vmem:[#allocation2 + $0x4b8] sm:$0xff]
    %v1456 = vld [vmem:[#allocation2 + $0x4c0] sm:$0xff]
    %v1457 = vld [vmem:[#allocation2 + $0x4c8] sm:$0xff]
    %v1458 = vld [vmem:[#allocation2 + $0x4d0] sm:$0xff]
    %v1459 = vld [vmem:[#allocation2 + $0x4d8] sm:$0xff]
    %v1460 = vld [vmem:[#allocation2 + $0x4e0] sm:$0xff]
    %v1461 = vld [vmem:[#allocation2 + $0x4e8] sm:$0xff]
    %v1462 = vld [vmem:[#allocation2 + $0x4f0] sm:$0xff]
    %v1463 = vld [vmem:[#allocation2 + $0x4f8] sm:$0xff]
    %v1464 = vld [vmem:[#allocation2 + $0x500] sm:$0xff]
    %v1465 = vld [vmem:[#allocation2 + $0x508] sm:$0xff]
    %v1466 = vld [vmem:[#allocation2 + $0x510] sm:$0xff]
    %v1467 = vld [vmem:[#allocation2 + $0x518] sm:$0xff]
    %v1468 = vld [vmem:[#allocation2 + $0x520] sm:$0xff]
    %v1469 = vld [vmem:[#allocation2 + $0x528] sm:$0xff]
    %v1470 = vld [vmem:[#allocation2 + $0x530] sm:$0xff]
    %v1471 = vld [vmem:[#allocation2 + $0x538] sm:$0xff]
    %v1472 = vld [vmem:[#allocation2 + $0x540] sm:$0xff]
    %v1473 = vld [vmem:[#allocation2 + $0x548] sm:$0xff]
    %v1474 = vld [vmem:[#allocation2 + $0x550] sm:$0xff]
    %v1475 = vld [vmem:[#allocation2 + $0x558] sm:$0xff]
    %v1476 = vld [vmem:[#allocation2 + $0x560] sm:$0xff]
    %v1477 = vld [vmem:[#allocation2 + $0x568] sm:$0xff]
    %v1478 = vld [vmem:[#allocation2 + $0x570] sm:$0xff]
    %v1479 = vld [vmem:[#allocation2 + $0x578] sm:$0xff]
    %v1480 = vld [vmem:[#allocation2 + $0x580] sm:$0xff]
    %v1481 = vld [vmem:[#allocation2 + $0x588] sm:$0xff]
    %v1482 = vld [vmem:[#allocation2 + $0x590] sm:$0xff]
    %v1483 = vld [vmem:[#allocation2 + $0x598] sm:$0xff]
    %v1484 = vld [vmem:[#allocation2 + $0x5a0] sm:$0xff]
    %v1485 = vld [vmem:[#allocation2 + $0x5a8] sm:$0xff]
    %v1486 = vld [vmem:[#allocation2 + $0x5b0] sm:$0xff]
    %v1487 = vld [vmem:[#allocation2 + $0x5b8] sm:$0xff]
    %v1488 = vld [vmem:[#allocation2 + $0x5c0] sm:$0xff]
    %v1489 = vld [vmem:[#allocation2 + $0x5c8] sm:$0xff]
    %v1490 = vld [vmem:[#allocation2 + $0x5d0] sm:$0xff]
    %v1491 = vld [vmem:[#allocation2 + $0x5d8] sm:$0xff]
    %v1492 = vld [vmem:[#allocation2 + $0x5e0] sm:$0xff]
    %v1493 = vld [vmem:[#allocation2 + $0x5e8] sm:$0xff]
    %v1494 = vld [vmem:[#allocation2 + $0x5f0] sm:$0xff]
    %v1495 = vld [vmem:[#allocation2 + $0x5f8] sm:$0xff]
    %v1496 = vld [vmem:[#allocation2 + $0x600] sm:$0xff]
    %v1497 = vld [vmem:[#allocation2 + $0x608] sm:$0xff]
    %v1498 = vld [vmem:[#allocation2 + $0x610] sm:$0xff]
    %v1499 = vld [vmem:[#allocation2 + $0x618] sm:$0xff]
    %v1500 = vld [vmem:[#allocation2 + $0x620] sm:$0xff]
    %v1501 = vld [vmem:[#allocation2 + $0x628] sm:$0xff]
    %v1502 = vld [vmem:[#allocation2 + $0x630] sm:$0xff]
    %v1503 = vld [vmem:[#allocation2 + $0x638] sm:$0xff]
    %v1504 = vld [vmem:[#allocation2 + $0x640] sm:$0xff]
    %v1505 = vld [vmem:[#allocation2 + $0x648] sm:$0xff]
    %v1506 = vld [vmem:[#allocation2 + $0x650] sm:$0xff]
    %v1507 = vld [vmem:[#allocation2 + $0x658] sm:$0xff]
    %v1508 = vld [vmem:[#allocation2 + $0x660] sm:$0xff]
    %v1509 = vld [vmem:[#allocation2 + $0x668] sm:$0xff]
    %v1510 = vld [vmem:[#allocation2 + $0x670] sm:$0xff]
    %v1511 = vld [vmem:[#allocation2 + $0x678] sm:$0xff]
    %v1512 = vld [vmem:[#allocation2 + $0x680] sm:$0xff]
    %v1513 = vld [vmem:[#allocation2 + $0x688] sm:$0xff]
    %v1514 = vld [vmem:[#allocation2 + $0x690] sm:$0xff]
    %v1515 = vld [vmem:[#allocation2 + $0x698] sm:$0xff]
    %v1516 = vld [vmem:[#allocation2 + $0x6a0] sm:$0xff]
    %v1517 = vld [vmem:[#allocation2 + $0x6a8] sm:$0xff]
    %v1518 = vld [vmem:[#allocation2 + $0x6b0] sm:$0xff]
    %v1519 = vld [vmem:[#allocation2 + $0x6b8] sm:$0xff]
    %v1520 = vld [vmem:[#allocation2 + $0x6c0] sm:$0xff]
    %v1521 = vld [vmem:[#allocation2 + $0x6c8] sm:$0xff]
    %v1522 = vld [vmem:[#allocation2 + $0x6d0] sm:$0xff]
    %v1523 = vld [vmem:[#allocation2 + $0x6d8] sm:$0xff]
    %v1524 = vld [vmem:[#allocation2 + $0x6e0] sm:$0xff]
    %v1525 = vld [vmem:[#allocation2 + $0x6e8] sm:$0xff]
    %v1526 = vld [vmem:[#allocation2 + $0x6f0] sm:$0xff]
    %v1527 = vld [vmem:[#allocation2 + $0x6f8] sm:$0xff]
    %v1528 = vld [vmem:[#allocation2 + $0x700] sm:$0xff]
    %v1529 = vld [vmem:[#allocation2 + $0x708] sm:$0xff]
    %v1530 = vld [vmem:[#allocation2 + $0x710] sm:$0xff]
    %v1531 = vld [vmem:[#allocation2 + $0x718] sm:$0xff]
    %v1532 = vld [vmem:[#allocation2 + $0x720] sm:$0xff]
    %v1533 = vld [vmem:[#allocation2 + $0x728] sm:$0xff]
    %v1534 = vld [vmem:[#allocation2 + $0x730] sm:$0xff]
    %v1535 = vld [vmem:[#allocation2 + $0x738] sm:$0xff]
    %v1536 = vld [vmem:[#allocation2 + $0x740] sm:$0xff]
    %v1537 = vld [vmem:[#allocation2 + $0x748] sm:$0xff]
    %v1538 = vld [vmem:[#allocation2 + $0x750] sm:$0xff]
    %v1539 = vld [vmem:[#allocation2 + $0x758] sm:$0xff]
    %v1540 = vld [vmem:[#allocation2 + $0x760] sm:$0xff]
    %v1541 = vld [vmem:[#allocation2 + $0x768] sm:$0xff]
    %v1542 = vld [vmem:[#allocation2 + $0x770] sm:$0xff]
    %v1543 = vld [vmem:[#allocation2 + $0x778] sm:$0xff]
    %v1544 = vld [vmem:[#allocation2 + $0x780] sm:$0xff]
    %v1545 = vld [vmem:[#allocation2 + $0x788] sm:$0xff]
    %v1546 = vld [vmem:[#allocation2 + $0x790] sm:$0xff]
    %v1547 = vld [vmem:[#allocation2 + $0x798] sm:$0xff]
    %v1548 = vld [vmem:[#allocation2 + $0x7a0] sm:$0xff]
    %v1549 = vld [vmem:[#allocation2 + $0x7a8] sm:$0xff]
    %v1550 = vld [vmem:[#allocation2 + $0x7b0] sm:$0xff]
    %v1551 = vld [vmem:[#allocation2 + $0x7b8] sm:$0xff]
    %v1552 = vld [vmem:[#allocation2 + $0x7c0] sm:$0xff]
    %v1553 = vld [vmem:[#allocation2 + $0x7c8] sm:$0xff]
    %v1554 = vld [vmem:[#allocation2 + $0x7d0] sm:$0xff]
    %v1555 = vld [vmem:[#allocation2 + $0x7d8] sm:$0xff]
    %v1556 = vld [vmem:[#allocation2 + $0x7e0] sm:$0xff]
    %v1557 = vld [vmem:[#allocation2 + $0x7e8] sm:$0xff]
    %v1558 = vld [vmem:[#allocation2 + $0x7f0] sm:$0xff]
    %v1559 = vld [vmem:[#allocation2 + $0x7f8] sm:$0xff]
    %v1560 = vld [vmem:[#allocation2 + $0x800] sm:$0xff]
    %v1561 = vld [vmem:[#allocation2 + $0x808] sm:$0xff]
    %v1562 = vld [vmem:[#allocation2 + $0x810] sm:$0xff]
    %v1563 = vld [vmem:[#allocation2 + $0x818] sm:$0xff]
    %v1564 = vld [vmem:[#allocation2 + $0x820] sm:$0xff]
    %v1565 = vld [vmem:[#allocation2 + $0x828] sm:$0xff]
    %v1566 = vld [vmem:[#allocation2 + $0x830] sm:$0xff]
    %v1567 = vld [vmem:[#allocation2 + $0x838] sm:$0xff]
    %v1568 = vld [vmem:[#allocation2 + $0x840] sm:$0xff]
    %v1569 = vld [vmem:[#allocation2 + $0x848] sm:$0xff]
    %v1570 = vld [vmem:[#allocation2 + $0x850] sm:$0xff]
    %v1571 = vld [vmem:[#allocation2 + $0x858] sm:$0xff]
    %v1572 = vld [vmem:[#allocation2 + $0x860] sm:$0xff]
    %v1573 = vld [vmem:[#allocation2 + $0x868] sm:$0xff]
    %v1574 = vld [vmem:[#allocation2 + $0x870] sm:$0xff]
    %v1575 = vld [vmem:[#allocation2 + $0x878] sm:$0xff]
    %v1576 = vld [vmem:[#allocation2 + $0x880] sm:$0xff]
    %v1577 = vld [vmem:[#allocation2 + $0x888] sm:$0xff]
    %v1578 = vld [vmem:[#allocation2 + $0x890] sm:$0xff]
    %v1579 = vld [vmem:[#allocation2 + $0x898] sm:$0xff]
    %v1580 = vld [vmem:[#allocation2 + $0x8a0] sm:$0xff]
    %v1581 = vld [vmem:[#allocation2 + $0x8a8] sm:$0xff]
    %v1582 = vld [vmem:[#allocation2 + $0x8b0] sm:$0xff]
    %v1583 = vld [vmem:[#allocation2 + $0x8b8] sm:$0xff]
    %v1584 = vld [vmem:[#allocation2 + $0x8c0] sm:$0xff]
    %v1585 = vld [vmem:[#allocation2 + $0x8c8] sm:$0xff]
    %v1586 = vld [vmem:[#allocation2 + $0x8d0] sm:$0xff]
    %v1587 = vld [vmem:[#allocation2 + $0x8d8] sm:$0xff]
    %v1588 = vld [vmem:[#allocation2 + $0x8e0] sm:$0xff]
    %v1589 = vld [vmem:[#allocation2 + $0x8e8] sm:$0xff]
    %v1590 = vld [vmem:[#allocation2 + $0x8f0] sm:$0xff]
    %v1591 = vld [vmem:[#allocation2 + $0x8f8] sm:$0xff]
    %v1592 = vld [vmem:[#allocation2 + $0x900] sm:$0xff]
    %v1593 = vld [vmem:[#allocation2 + $0x908] sm:$0xff]
    %v1594 = vld [vmem:[#allocation2 + $0x910] sm:$0xff]
    %v1595 = vld [vmem:[#allocation2 + $0x918] sm:$0xff]
    %v1596 = vld [vmem:[#allocation2 + $0x920] sm:$0xff]
    %v1597 = vld [vmem:[#allocation2 + $0x928] sm:$0xff]
    %v1598 = vld [vmem:[#allocation2 + $0x930] sm:$0xff]
    %v1599 = vld [vmem:[#allocation2 + $0x938] sm:$0xff]
    %v1600 = vld [vmem:[#allocation2 + $0x940] sm:$0xff]
    %v1601 = vld [vmem:[#allocation2 + $0x948] sm:$0xff]
    %v1602 = vld [vmem:[#allocation2 + $0x950] sm:$0xff]
    %v1603 = vld [vmem:[#allocation2 + $0x958] sm:$0xff]
    %v1604 = vld [vmem:[#allocation2 + $0x960] sm:$0xff]
    %v1605 = vld [vmem:[#allocation2 + $0x968] sm:$0xff]
    %v1606 = vld [vmem:[#allocation2 + $0x970] sm:$0xff]
    %v1607 = vld [vmem:[#allocation2 + $0x978] sm:$0xff]
    %v1608 = vld [vmem:[#allocation2 + $0x980] sm:$0xff]
    %v1609 = vld [vmem:[#allocation2 + $0x988] sm:$0xff]
    %v1610 = vld [vmem:[#allocation2 + $0x990] sm:$0xff]
    %v1611 = vld [vmem:[#allocation2 + $0x998] sm:$0xff]
    %v1612 = vld [vmem:[#allocation2 + $0x9a0] sm:$0xff]
    %v1613 = vld [vmem:[#allocation2 + $0x9a8] sm:$0xff]
    %v1614 = vld [vmem:[#allocation2 + $0x9b0] sm:$0xff]
    %v1615 = vld [vmem:[#allocation2 + $0x9b8] sm:$0xff]
    %v1616 = vld [vmem:[#allocation2 + $0x9c0] sm:$0xff]
    %v1617 = vld [vmem:[#allocation2 + $0x9c8] sm:$0xff]
    %v1618 = vld [vmem:[#allocation2 + $0x9d0] sm:$0xff]
    %v1619 = vld [vmem:[#allocation2 + $0x9d8] sm:$0xff]
    %v1620 = vld [vmem:[#allocation2 + $0x9e0] sm:$0xff]
    %v1621 = vld [vmem:[#allocation2 + $0x9e8] sm:$0xff]
    %v1622 = vld [vmem:[#allocation2 + $0x9f0] sm:$0xff]
    %v1623 = vld [vmem:[#allocation2 + $0x9f8] sm:$0xff]
    %v1624 = vld [vmem:[#allocation2 + $0xa00] sm:$0xff]
    %v1625 = vld [vmem:[#allocation2 + $0xa08] sm:$0xff]
    %v1626 = vld [vmem:[#allocation2 + $0xa10] sm:$0xff]
    %v1627 = vld [vmem:[#allocation2 + $0xa18] sm:$0xff]
    %v1628 = vld [vmem:[#allocation2 + $0xa20] sm:$0xff]
    %v1629 = vld [vmem:[#allocation2 + $0xa28] sm:$0xff]
    %v1630 = vld [vmem:[#allocation2 + $0xa30] sm:$0xff]
    %v1631 = vld [vmem:[#allocation2 + $0xa38] sm:$0xff]
    %v1632 = vld [vmem:[#allocation2 + $0xa40] sm:$0xff]
    %v1633 = vld [vmem:[#allocation2 + $0xa48] sm:$0xff]
    %v1634 = vld [vmem:[#allocation2 + $0xa50] sm:$0xff]
    %v1635 = vld [vmem:[#allocation2 + $0xa58] sm:$0xff]
    %v1636 = vld [vmem:[#allocation2 + $0xa60] sm:$0xff]
    %v1637 = vld [vmem:[#allocation2 + $0xa68] sm:$0xff]
    %v1638 = vld [vmem:[#allocation2 + $0xa70] sm:$0xff]
    %v1639 = vld [vmem:[#allocation2 + $0xa78] sm:$0xff]
    %v1640 = vld [vmem:[#allocation2 + $0xa80] sm:$0xff]
    %v1641 = vld [vmem:[#allocation2 + $0xa88] sm:$0xff]
    %v1642 = vld [vmem:[#allocation2 + $0xa90] sm:$0xff]
    %v1643 = vld [vmem:[#allocation2 + $0xa98] sm:$0xff]
    %v1644 = vld [vmem:[#allocation2 + $0xaa0] sm:$0xff]
    %v1645 = vld [vmem:[#allocation2 + $0xaa8] sm:$0xff]
    %v1646 = vld [vmem:[#allocation2 + $0xab0] sm:$0xff]
    %v1647 = vld [vmem:[#allocation2 + $0xab8] sm:$0xff]
    %v1648 = vld [vmem:[#allocation2 + $0xac0] sm:$0xff]
    %v1649 = vld [vmem:[#allocation2 + $0xac8] sm:$0xff]
    %v1650 = vld [vmem:[#allocation2 + $0xad0] sm:$0xff]
    %v1651 = vld [vmem:[#allocation2 + $0xad8] sm:$0xff]
    %v1652 = vld [vmem:[#allocation2 + $0xae0] sm:$0xff]
    %v1653 = vld [vmem:[#allocation2 + $0xae8] sm:$0xff]
    %v1654 = vld [vmem:[#allocation2 + $0xaf0] sm:$0xff]
    %v1655 = vld [vmem:[#allocation2 + $0xaf8] sm:$0xff]
    %v1656 = vld [vmem:[#allocation2 + $0xb00] sm:$0xff]
    %v1657 = vld [vmem:[#allocation2 + $0xb08] sm:$0xff]
    %v1658 = vld [vmem:[#allocation2 + $0xb10] sm:$0xff]
    %v1659 = vld [vmem:[#allocation2 + $0xb18] sm:$0xff]
    %v1660 = vld [vmem:[#allocation2 + $0xb20] sm:$0xff]
    %v1661 = vld [vmem:[#allocation2 + $0xb28] sm:$0xff]
    %v1662 = vld [vmem:[#allocation2 + $0xb30] sm:$0xff]
    %v1663 = vld [vmem:[#allocation2 + $0xb38] sm:$0xff]
    %v1664 = vld [vmem:[#allocation2 + $0xb40] sm:$0xff]
    %v1665 = vld [vmem:[#allocation2 + $0xb48] sm:$0xff]
    %v1666 = vld [vmem:[#allocation2 + $0xb50] sm:$0xff]
    %v1667 = vld [vmem:[#allocation2 + $0xb58] sm:$0xff]
    %v1668 = vld [vmem:[#allocation2 + $0xb60] sm:$0xff]
    %v1669 = vld [vmem:[#allocation2 + $0xb68] sm:$0xff]
    %v1670 = vld [vmem:[#allocation2 + $0xb70] sm:$0xff]
    %v1671 = vld [vmem:[#allocation2 + $0xb78] sm:$0xff]
    %v1672 = vld [vmem:[#allocation2 + $0xb80] sm:$0xff]
    %v1673 = vld [vmem:[#allocation2 + $0xb88] sm:$0xff]
    %v1674 = vld [vmem:[#allocation2 + $0xb90] sm:$0xff]
    %v1675 = vld [vmem:[#allocation2 + $0xb98] sm:$0xff]
    %v1676 = vld [vmem:[#allocation2 + $0xba0] sm:$0xff]
    %v1677 = vld [vmem:[#allocation2 + $0xba8] sm:$0xff]
    %v1678 = vld [vmem:[#allocation2 + $0xbb0] sm:$0xff]
    %v1679 = vld [vmem:[#allocation2 + $0xbb8] sm:$0xff]
    %v1680 = vld [vmem:[#allocation2 + $0xbc0] sm:$0xff]
    %v1681 = vld [vmem:[#allocation2 + $0xbc8] sm:$0xff]
    %v1682 = vld [vmem:[#allocation2 + $0xbd0] sm:$0xff]
    %v1683 = vld [vmem:[#allocation2 + $0xbd8] sm:$0xff]
    %v1684 = vld [vmem:[#allocation2 + $0xbe0] sm:$0xff]
    %v1685 = vld [vmem:[#allocation2 + $0xbe8] sm:$0xff]
    %v1686 = vld [vmem:[#allocation2 + $0xbf0] sm:$0xff]
    %v1687 = vld [vmem:[#allocation2 + $0xbf8] sm:$0xff]
    %v1688 = vld [vmem:[#allocation5] sm:$0x3]
    %v1690 = vlaneseq
    %v1691 = vshrl.u32 %v1690, 7
    %v1692 = vsub.s32 0, %v1691
    %v1693 = vrot.slane %v1688, %v1692
    %v1694 = vlaneseq
    %v1695 = vshrl.u32 %v1694, 7
    %v1696 = vsub.s32 1, %v1695
    %v1697 = vrot.slane %v1688, %v1696
    %v2084 = vunpack.c.l.b16 %v1304
    %v2085 = vunpack.c.h.b16 %v1304
    %v2086 = vunpack.c.l.b16 %v1305
    %v2087 = vunpack.c.h.b16 %v1305
    %v2088 = vunpack.c.l.b16 %v1306
    %v2089 = vunpack.c.h.b16 %v1306
    %v2090 = vunpack.c.l.b16 %v1307
    %v2091 = vunpack.c.h.b16 %v1307
    %v2092 = vunpack.c.l.b16 %v1308
    %v2093 = vunpack.c.h.b16 %v1308
    %v2094 = vunpack.c.l.b16 %v1309
    %v2095 = vunpack.c.h.b16 %v1309
    %v2096 = vunpack.c.l.b16 %v1310
    %v2097 = vunpack.c.h.b16 %v1310
    %v2098 = vunpack.c.l.b16 %v1311
    %v2099 = vunpack.c.h.b16 %v1311
    %v2100 = vunpack.c.l.b16 %v1312
    %v2101 = vunpack.c.h.b16 %v1312
    %v2102 = vunpack.c.l.b16 %v1313
    %v2103 = vunpack.c.h.b16 %v1313
    %v2104 = vunpack.c.l.b16 %v1314
    %v2105 = vunpack.c.h.b16 %v1314
    %v2106 = vunpack.c.l.b16 %v1315
    %v2107 = vunpack.c.h.b16 %v1315
    %v2108 = vunpack.c.l.b16 %v1316
    %v2109 = vunpack.c.h.b16 %v1316
    %v2110 = vunpack.c.l.b16 %v1317
    %v2111 = vunpack.c.h.b16 %v1317
    %v2112 = vunpack.c.l.b16 %v1318
    %v2113 = vunpack.c.h.b16 %v1318
    %v2114 = vunpack.c.l.b16 %v1319
    %v2115 = vunpack.c.h.b16 %v1319
    %v2116 = vunpack.c.l.b16 %v1320
    %v2117 = vunpack.c.h.b16 %v1320
    %v2118 = vunpack.c.l.b16 %v1321
    %v2119 = vunpack.c.h.b16 %v1321
    %v2120 = vunpack.c.l.b16 %v1322
    %v2121 = vunpack.c.h.b16 %v1322
    %v2122 = vunpack.c.l.b16 %v1323
    %v2123 = vunpack.c.h.b16 %v1323
    %v2124 = vunpack.c.l.b16 %v1324
    %v2125 = vunpack.c.h.b16 %v1324
    %v2126 = vunpack.c.l.b16 %v1325
    %v2127 = vunpack.c.h.b16 %v1325
    %v2128 = vunpack.c.l.b16 %v1326
    %v2129 = vunpack.c.h.b16 %v1326
    %v2130 = vunpack.c.l.b16 %v1327
    %v2131 = vunpack.c.h.b16 %v1327
    %v2132 = vunpack.c.l.b16 %v1328
    %v2133 = vunpack.c.h.b16 %v1328
    %v2134 = vunpack.c.l.b16 %v1329
    %v2135 = vunpack.c.h.b16 %v1329
    %v2136 = vunpack.c.l.b16 %v1330
    %v2137 = vunpack.c.h.b16 %v1330
    %v2138 = vunpack.c.l.b16 %v1331
    %v2139 = vunpack.c.h.b16 %v1331
    %v2140 = vunpack.c.l.b16 %v1332
    %v2141 = vunpack.c.h.b16 %v1332
    %v2142 = vunpack.c.l.b16 %v1333
    %v2143 = vunpack.c.h.b16 %v1333
    %v2144 = vunpack.c.l.b16 %v1334
    %v2145 = vunpack.c.h.b16 %v1334
    %v2146 = vunpack.c.l.b16 %v1335
    %v2147 = vunpack.c.h.b16 %v1335
    %v2148 = vunpack.c.l.b16 %v1336
    %v2149 = vunpack.c.h.b16 %v1336
    %v2150 = vunpack.c.l.b16 %v1337
    %v2151 = vunpack.c.h.b16 %v1337
    %v2152 = vunpack.c.l.b16 %v1338
    %v2153 = vunpack.c.h.b16 %v1338
    %v2154 = vunpack.c.l.b16 %v1339
    %v2155 = vunpack.c.h.b16 %v1339
    %v2156 = vunpack.c.l.b16 %v1340
    %v2157 = vunpack.c.h.b16 %v1340
    %v2158 = vunpack.c.l.b16 %v1341
    %v2159 = vunpack.c.h.b16 %v1341
    %v2160 = vunpack.c.l.b16 %v1342
    %v2161 = vunpack.c.h.b16 %v1342
    %v2162 = vunpack.c.l.b16 %v1343
    %v2163 = vunpack.c.h.b16 %v1343
    %v2164 = vunpack.c.l.b16 %v1344
    %v2165 = vunpack.c.h.b16 %v1344
    %v2166 = vunpack.c.l.b16 %v1345
    %v2167 = vunpack.c.h.b16 %v1345
    %v2168 = vunpack.c.l.b16 %v1346
    %v2169 = vunpack.c.h.b16 %v1346
    %v2170 = vunpack.c.l.b16 %v1347
    %v2171 = vunpack.c.h.b16 %v1347
    %v2172 = vunpack.c.l.b16 %v1348
    %v2173 = vunpack.c.h.b16 %v1348
    %v2174 = vunpack.c.l.b16 %v1349
    %v2175 = vunpack.c.h.b16 %v1349
    %v2176 = vunpack.c.l.b16 %v1350
    %v2177 = vunpack.c.h.b16 %v1350
    %v2178 = vunpack.c.l.b16 %v1351
    %v2179 = vunpack.c.h.b16 %v1351
    %v2180 = vunpack.c.l.b16 %v1352
    %v2181 = vunpack.c.h.b16 %v1352
    %v2182 = vunpack.c.l.b16 %v1353
    %v2183 = vunpack.c.h.b16 %v1353
    %v2184 = vunpack.c.l.b16 %v1354
    %v2185 = vunpack.c.h.b16 %v1354
    %v2186 = vunpack.c.l.b16 %v1355
    %v2187 = vunpack.c.h.b16 %v1355
    %v2188 = vunpack.c.l.b16 %v1356
    %v2189 = vunpack.c.h.b16 %v1356
    %v2190 = vunpack.c.l.b16 %v1357
    %v2191 = vunpack.c.h.b16 %v1357
    %v2192 = vunpack.c.l.b16 %v1358
    %v2193 = vunpack.c.h.b16 %v1358
    %v2194 = vunpack.c.l.b16 %v1359
    %v2195 = vunpack.c.h.b16 %v1359
    %v2196 = vunpack.c.l.b16 %v1360
    %v2197 = vunpack.c.h.b16 %v1360
    %v2198 = vunpack.c.l.b16 %v1361
    %v2199 = vunpack.c.h.b16 %v1361
    %v2200 = vunpack.c.l.b16 %v1362
    %v2201 = vunpack.c.h.b16 %v1362
    %v2202 = vunpack.c.l.b16 %v1363
    %v2203 = vunpack.c.h.b16 %v1363
    %v2204 = vunpack.c.l.b16 %v1364
    %v2205 = vunpack.c.h.b16 %v1364
    %v2206 = vunpack.c.l.b16 %v1365
    %v2207 = vunpack.c.h.b16 %v1365
    %v2208 = vunpack.c.l.b16 %v1366
    %v2209 = vunpack.c.h.b16 %v1366
    %v2210 = vunpack.c.l.b16 %v1367
    %v2211 = vunpack.c.h.b16 %v1367
    %v2212 = vunpack.c.l.b16 %v1368
    %v2213 = vunpack.c.h.b16 %v1368
    %v2214 = vunpack.c.l.b16 %v1369
    %v2215 = vunpack.c.h.b16 %v1369
    %v2216 = vunpack.c.l.b16 %v1370
    %v2217 = vunpack.c.h.b16 %v1370
    %v2218 = vunpack.c.l.b16 %v1371
    %v2219 = vunpack.c.h.b16 %v1371
    %v2220 = vunpack.c.l.b16 %v1372
    %v2221 = vunpack.c.h.b16 %v1372
    %v2222 = vunpack.c.l.b16 %v1373
    %v2223 = vunpack.c.h.b16 %v1373
    %v2224 = vunpack.c.l.b16 %v1374
    %v2225 = vunpack.c.h.b16 %v1374
    %v2226 = vunpack.c.l.b16 %v1375
    %v2227 = vunpack.c.h.b16 %v1375
    %v2228 = vunpack.c.l.b16 %v1376
    %v2229 = vunpack.c.h.b16 %v1376
    %v2230 = vunpack.c.l.b16 %v1377
    %v2231 = vunpack.c.h.b16 %v1377
    %v2232 = vunpack.c.l.b16 %v1378
    %v2233 = vunpack.c.h.b16 %v1378
    %v2234 = vunpack.c.l.b16 %v1379
    %v2235 = vunpack.c.h.b16 %v1379
    %v2236 = vunpack.c.l.b16 %v1380
    %v2237 = vunpack.c.h.b16 %v1380
    %v2238 = vunpack.c.l.b16 %v1381
    %v2239 = vunpack.c.h.b16 %v1381
    %v2240 = vunpack.c.l.b16 %v1382
    %v2241 = vunpack.c.h.b16 %v1382
    %v2242 = vunpack.c.l.b16 %v1383
    %v2243 = vunpack.c.h.b16 %v1383
    %v2244 = vunpack.c.l.b16 %v1384
    %v2245 = vunpack.c.h.b16 %v1384
    %v2246 = vunpack.c.l.b16 %v1385
    %v2247 = vunpack.c.h.b16 %v1385
    %v2248 = vunpack.c.l.b16 %v1386
    %v2249 = vunpack.c.h.b16 %v1386
    %v2250 = vunpack.c.l.b16 %v1387
    %v2251 = vunpack.c.h.b16 %v1387
    %v2252 = vunpack.c.l.b16 %v1388
    %v2253 = vunpack.c.h.b16 %v1388
    %v2254 = vunpack.c.l.b16 %v1389
    %v2255 = vunpack.c.h.b16 %v1389
    %v2256 = vunpack.c.l.b16 %v1390
    %v2257 = vunpack.c.h.b16 %v1390
    %v2258 = vunpack.c.l.b16 %v1391
    %v2259 = vunpack.c.h.b16 %v1391
    %v2260 = vunpack.c.l.b16 %v1392
    %v2261 = vunpack.c.h.b16 %v1392
    %v2262 = vunpack.c.l.b16 %v1393
    %v2263 = vunpack.c.h.b16 %v1393
    %v2264 = vunpack.c.l.b16 %v1394
    %v2265 = vunpack.c.h.b16 %v1394
    %v2266 = vunpack.c.l.b16 %v1395
    %v2267 = vunpack.c.h.b16 %v1395
    %v2268 = vunpack.c.l.b16 %v1396
    %v2269 = vunpack.c.h.b16 %v1396
    %v2270 = vunpack.c.l.b16 %v1397
    %v2271 = vunpack.c.h.b16 %v1397
    %v2272 = vunpack.c.l.b16 %v1398
    %v2273 = vunpack.c.h.b16 %v1398
    %v2274 = vunpack.c.l.b16 %v1399
    %v2275 = vunpack.c.h.b16 %v1399
    %v2276 = vunpack.c.l.b16 %v1400
    %v2277 = vunpack.c.h.b16 %v1400
    %v2278 = vunpack.c.l.b16 %v1401
    %v2279 = vunpack.c.h.b16 %v1401
    %v2280 = vunpack.c.l.b16 %v1402
    %v2281 = vunpack.c.h.b16 %v1402
    %v2282 = vunpack.c.l.b16 %v1403
    %v2283 = vunpack.c.h.b16 %v1403
    %v2284 = vunpack.c.l.b16 %v1404
    %v2285 = vunpack.c.h.b16 %v1404
    %v2286 = vunpack.c.l.b16 %v1405
    %v2287 = vunpack.c.h.b16 %v1405
    %v2288 = vunpack.c.l.b16 %v1406
    %v2289 = vunpack.c.h.b16 %v1406
    %v2290 = vunpack.c.l.b16 %v1407
    %v2291 = vunpack.c.h.b16 %v1407
    %v2292 = vunpack.c.l.b16 %v1408
    %v2293 = vunpack.c.h.b16 %v1408
    %v2294 = vunpack.c.l.b16 %v1409
    %v2295 = vunpack.c.h.b16 %v1409
    %v2296 = vunpack.c.l.b16 %v1410
    %v2297 = vunpack.c.h.b16 %v1410
    %v2298 = vunpack.c.l.b16 %v1411
    %v2299 = vunpack.c.h.b16 %v1411
    %v2300 = vunpack.c.l.b16 %v1412
    %v2301 = vunpack.c.h.b16 %v1412
    %v2302 = vunpack.c.l.b16 %v1413
    %v2303 = vunpack.c.h.b16 %v1413
    %v2304 = vunpack.c.l.b16 %v1414
    %v2305 = vunpack.c.h.b16 %v1414
    %v2306 = vunpack.c.l.b16 %v1415
    %v2307 = vunpack.c.h.b16 %v1415
    %v2308 = vunpack.c.l.b16 %v1416
    %v2309 = vunpack.c.h.b16 %v1416
    %v2310 = vunpack.c.l.b16 %v1417
    %v2311 = vunpack.c.h.b16 %v1417
    %v2312 = vunpack.c.l.b16 %v1418
    %v2313 = vunpack.c.h.b16 %v1418
    %v2314 = vunpack.c.l.b16 %v1419
    %v2315 = vunpack.c.h.b16 %v1419
    %v2316 = vunpack.c.l.b16 %v1420
    %v2317 = vunpack.c.h.b16 %v1420
    %v2318 = vunpack.c.l.b16 %v1421
    %v2319 = vunpack.c.h.b16 %v1421
    %v2320 = vunpack.c.l.b16 %v1422
    %v2321 = vunpack.c.h.b16 %v1422
    %v2322 = vunpack.c.l.b16 %v1423
    %v2323 = vunpack.c.h.b16 %v1423
    %v2324 = vunpack.c.l.b16 %v1424
    %v2325 = vunpack.c.h.b16 %v1424
    %v2326 = vunpack.c.l.b16 %v1425
    %v2327 = vunpack.c.h.b16 %v1425
    %v2328 = vunpack.c.l.b16 %v1426
    %v2329 = vunpack.c.h.b16 %v1426
    %v2330 = vunpack.c.l.b16 %v1427
    %v2331 = vunpack.c.h.b16 %v1427
    %v2332 = vunpack.c.l.b16 %v1428
    %v2333 = vunpack.c.h.b16 %v1428
    %v2334 = vunpack.c.l.b16 %v1429
    %v2335 = vunpack.c.h.b16 %v1429
    %v2336 = vunpack.c.l.b16 %v1430
    %v2337 = vunpack.c.h.b16 %v1430
    %v2338 = vunpack.c.l.b16 %v1431
    %v2339 = vunpack.c.h.b16 %v1431
    %v2340 = vunpack.c.l.b16 %v1432
    %v2341 = vunpack.c.h.b16 %v1432
    %v2342 = vunpack.c.l.b16 %v1433
    %v2343 = vunpack.c.h.b16 %v1433
    %v2344 = vunpack.c.l.b16 %v1434
    %v2345 = vunpack.c.h.b16 %v1434
    %v2346 = vunpack.c.l.b16 %v1435
    %v2347 = vunpack.c.h.b16 %v1435
    %v2348 = vunpack.c.l.b16 %v1436
    %v2349 = vunpack.c.h.b16 %v1436
    %v2350 = vunpack.c.l.b16 %v1437
    %v2351 = vunpack.c.h.b16 %v1437
    %v2352 = vunpack.c.l.b16 %v1438
    %v2353 = vunpack.c.h.b16 %v1438
    %v2354 = vunpack.c.l.b16 %v1439
    %v2355 = vunpack.c.h.b16 %v1439
    %v2356 = vunpack.c.l.b16 %v1440
    %v2357 = vunpack.c.h.b16 %v1440
    %v2358 = vunpack.c.l.b16 %v1441
    %v2359 = vunpack.c.h.b16 %v1441
    %v2360 = vunpack.c.l.b16 %v1442
    %v2361 = vunpack.c.h.b16 %v1442
    %v2362 = vunpack.c.l.b16 %v1443
    %v2363 = vunpack.c.h.b16 %v1443
    %v2364 = vunpack.c.l.b16 %v1444
    %v2365 = vunpack.c.h.b16 %v1444
    %v2366 = vunpack.c.l.b16 %v1445
    %v2367 = vunpack.c.h.b16 %v1445
    %v2368 = vunpack.c.l.b16 %v1446
    %v2369 = vunpack.c.h.b16 %v1446
    %v2370 = vunpack.c.l.b16 %v1447
    %v2371 = vunpack.c.h.b16 %v1447
    %v2372 = vunpack.c.l.b16 %v1448
    %v2373 = vunpack.c.h.b16 %v1448
    %v2374 = vunpack.c.l.b16 %v1449
    %v2375 = vunpack.c.h.b16 %v1449
    %v2376 = vunpack.c.l.b16 %v1450
    %v2377 = vunpack.c.h.b16 %v1450
    %v2378 = vunpack.c.l.b16 %v1451
    %v2379 = vunpack.c.h.b16 %v1451
    %v2380 = vunpack.c.l.b16 %v1452
    %v2381 = vunpack.c.h.b16 %v1452
    %v2382 = vunpack.c.l.b16 %v1453
    %v2383 = vunpack.c.h.b16 %v1453
    %v2384 = vunpack.c.l.b16 %v1454
    %v2385 = vunpack.c.h.b16 %v1454
    %v2386 = vunpack.c.l.b16 %v1455
    %v2387 = vunpack.c.h.b16 %v1455
    %v2388 = vunpack.c.l.b16 %v1456
    %v2389 = vunpack.c.h.b16 %v1456
    %v2390 = vunpack.c.l.b16 %v1457
    %v2391 = vunpack.c.h.b16 %v1457
    %v2392 = vunpack.c.l.b16 %v1458
    %v2393 = vunpack.c.h.b16 %v1458
    %v2394 = vunpack.c.l.b16 %v1459
    %v2395 = vunpack.c.h.b16 %v1459
    %v2396 = vunpack.c.l.b16 %v1460
    %v2397 = vunpack.c.h.b16 %v1460
    %v2398 = vunpack.c.l.b16 %v1461
    %v2399 = vunpack.c.h.b16 %v1461
    %v2400 = vunpack.c.l.b16 %v1462
    %v2401 = vunpack.c.h.b16 %v1462
    %v2402 = vunpack.c.l.b16 %v1463
    %v2403 = vunpack.c.h.b16 %v1463
    %v2404 = vunpack.c.l.b16 %v1464
    %v2405 = vunpack.c.h.b16 %v1464
    %v2406 = vunpack.c.l.b16 %v1465
    %v2407 = vunpack.c.h.b16 %v1465
    %v2408 = vunpack.c.l.b16 %v1466
    %v2409 = vunpack.c.h.b16 %v1466
    %v2410 = vunpack.c.l.b16 %v1467
    %v2411 = vunpack.c.h.b16 %v1467
    %v2412 = vunpack.c.l.b16 %v1468
    %v2413 = vunpack.c.h.b16 %v1468
    %v2414 = vunpack.c.l.b16 %v1469
    %v2415 = vunpack.c.h.b16 %v1469
    %v2416 = vunpack.c.l.b16 %v1470
    %v2417 = vunpack.c.h.b16 %v1470
    %v2418 = vunpack.c.l.b16 %v1471
    %v2419 = vunpack.c.h.b16 %v1471
    %v2420 = vunpack.c.l.b16 %v1472
    %v2421 = vunpack.c.h.b16 %v1472
    %v2422 = vunpack.c.l.b16 %v1473
    %v2423 = vunpack.c.h.b16 %v1473
    %v2424 = vunpack.c.l.b16 %v1474
    %v2425 = vunpack.c.h.b16 %v1474
    %v2426 = vunpack.c.l.b16 %v1475
    %v2427 = vunpack.c.h.b16 %v1475
    %v2428 = vunpack.c.l.b16 %v1476
    %v2429 = vunpack.c.h.b16 %v1476
    %v2430 = vunpack.c.l.b16 %v1477
    %v2431 = vunpack.c.h.b16 %v1477
    %v2432 = vunpack.c.l.b16 %v1478
    %v2433 = vunpack.c.h.b16 %v1478
    %v2434 = vunpack.c.l.b16 %v1479
    %v2435 = vunpack.c.h.b16 %v1479
    %v2436 = vunpack.c.l.b16 %v1480
    %v2437 = vunpack.c.h.b16 %v1480
    %v2438 = vunpack.c.l.b16 %v1481
    %v2439 = vunpack.c.h.b16 %v1481
    %v2440 = vunpack.c.l.b16 %v1482
    %v2441 = vunpack.c.h.b16 %v1482
    %v2442 = vunpack.c.l.b16 %v1483
    %v2443 = vunpack.c.h.b16 %v1483
    %v2444 = vunpack.c.l.b16 %v1484
    %v2445 = vunpack.c.h.b16 %v1484
    %v2446 = vunpack.c.l.b16 %v1485
    %v2447 = vunpack.c.h.b16 %v1485
    %v2448 = vunpack.c.l.b16 %v1486
    %v2449 = vunpack.c.h.b16 %v1486
    %v2450 = vunpack.c.l.b16 %v1487
    %v2451 = vunpack.c.h.b16 %v1487
    %v2452 = vunpack.c.l.b16 %v1488
    %v2453 = vunpack.c.h.b16 %v1488
    %v2454 = vunpack.c.l.b16 %v1489
    %v2455 = vunpack.c.h.b16 %v1489
    %v2456 = vunpack.c.l.b16 %v1490
    %v2457 = vunpack.c.h.b16 %v1490
    %v2458 = vunpack.c.l.b16 %v1491
    %v2459 = vunpack.c.h.b16 %v1491
    %v2460 = vunpack.c.l.b16 %v1492
    %v2461 = vunpack.c.h.b16 %v1492
    %v2462 = vunpack.c.l.b16 %v1493
    %v2463 = vunpack.c.h.b16 %v1493
    %v2464 = vunpack.c.l.b16 %v1494
    %v2465 = vunpack.c.h.b16 %v1494
    %v2466 = vunpack.c.l.b16 %v1495
    %v2467 = vunpack.c.h.b16 %v1495
    %v2468 = vunpack.c.l.b16 %v1496
    %v2469 = vunpack.c.h.b16 %v1496
    %v2470 = vunpack.c.l.b16 %v1497
    %v2471 = vunpack.c.h.b16 %v1497
    %v2472 = vunpack.c.l.b16 %v1498
    %v2473 = vunpack.c.h.b16 %v1498
    %v2474 = vunpack.c.l.b16 %v1499
    %v2475 = vunpack.c.h.b16 %v1499
    %v2476 = vunpack.c.l.b16 %v1500
    %v2477 = vunpack.c.h.b16 %v1500
    %v2478 = vunpack.c.l.b16 %v1501
    %v2479 = vunpack.c.h.b16 %v1501
    %v2480 = vunpack.c.l.b16 %v1502
    %v2481 = vunpack.c.h.b16 %v1502
    %v2482 = vunpack.c.l.b16 %v1503
    %v2483 = vunpack.c.h.b16 %v1503
    %v2484 = vunpack.c.l.b16 %v1504
    %v2485 = vunpack.c.h.b16 %v1504
    %v2486 = vunpack.c.l.b16 %v1505
    %v2487 = vunpack.c.h.b16 %v1505
    %v2488 = vunpack.c.l.b16 %v1506
    %v2489 = vunpack.c.h.b16 %v1506
    %v2490 = vunpack.c.l.b16 %v1507
    %v2491 = vunpack.c.h.b16 %v1507
    %v2492 = vunpack.c.l.b16 %v1508
    %v2493 = vunpack.c.h.b16 %v1508
    %v2494 = vunpack.c.l.b16 %v1509
    %v2495 = vunpack.c.h.b16 %v1509
    %v2496 = vunpack.c.l.b16 %v1510
    %v2497 = vunpack.c.h.b16 %v1510
    %v2498 = vunpack.c.l.b16 %v1511
    %v2499 = vunpack.c.h.b16 %v1511
    %v2500 = vunpack.c.l.b16 %v1512
    %v2501 = vunpack.c.h.b16 %v1512
    %v2502 = vunpack.c.l.b16 %v1513
    %v2503 = vunpack.c.h.b16 %v1513
    %v2504 = vunpack.c.l.b16 %v1514
    %v2505 = vunpack.c.h.b16 %v1514
    %v2506 = vunpack.c.l.b16 %v1515
    %v2507 = vunpack.c.h.b16 %v1515
    %v2508 = vunpack.c.l.b16 %v1516
    %v2509 = vunpack.c.h.b16 %v1516
    %v2510 = vunpack.c.l.b16 %v1517
    %v2511 = vunpack.c.h.b16 %v1517
    %v2512 = vunpack.c.l.b16 %v1518
    %v2513 = vunpack.c.h.b16 %v1518
    %v2514 = vunpack.c.l.b16 %v1519
    %v2515 = vunpack.c.h.b16 %v1519
    %v2516 = vunpack.c.l.b16 %v1520
    %v2517 = vunpack.c.h.b16 %v1520
    %v2518 = vunpack.c.l.b16 %v1521
    %v2519 = vunpack.c.h.b16 %v1521
    %v2520 = vunpack.c.l.b16 %v1522
    %v2521 = vunpack.c.h.b16 %v1522
    %v2522 = vunpack.c.l.b16 %v1523
    %v2523 = vunpack.c.h.b16 %v1523
    %v2524 = vunpack.c.l.b16 %v1524
    %v2525 = vunpack.c.h.b16 %v1524
    %v2526 = vunpack.c.l.b16 %v1525
    %v2527 = vunpack.c.h.b16 %v1525
    %v2528 = vunpack.c.l.b16 %v1526
    %v2529 = vunpack.c.h.b16 %v1526
    %v2530 = vunpack.c.l.b16 %v1527
    %v2531 = vunpack.c.h.b16 %v1527
    %v2532 = vunpack.c.l.b16 %v1528
    %v2533 = vunpack.c.h.b16 %v1528
    %v2534 = vunpack.c.l.b16 %v1529
    %v2535 = vunpack.c.h.b16 %v1529
    %v2536 = vunpack.c.l.b16 %v1530
    %v2537 = vunpack.c.h.b16 %v1530
    %v2538 = vunpack.c.l.b16 %v1531
    %v2539 = vunpack.c.h.b16 %v1531
    %v2540 = vunpack.c.l.b16 %v1532
    %v2541 = vunpack.c.h.b16 %v1532
    %v2542 = vunpack.c.l.b16 %v1533
    %v2543 = vunpack.c.h.b16 %v1533
    %v2544 = vunpack.c.l.b16 %v1534
    %v2545 = vunpack.c.h.b16 %v1534
    %v2546 = vunpack.c.l.b16 %v1535
    %v2547 = vunpack.c.h.b16 %v1535
    %v2548 = vunpack.c.l.b16 %v1536
    %v2549 = vunpack.c.h.b16 %v1536
    %v2550 = vunpack.c.l.b16 %v1537
    %v2551 = vunpack.c.h.b16 %v1537
    %v2552 = vunpack.c.l.b16 %v1538
    %v2553 = vunpack.c.h.b16 %v1538
    %v2554 = vunpack.c.l.b16 %v1539
    %v2555 = vunpack.c.h.b16 %v1539
    %v2556 = vunpack.c.l.b16 %v1540
    %v2557 = vunpack.c.h.b16 %v1540
    %v2558 = vunpack.c.l.b16 %v1541
    %v2559 = vunpack.c.h.b16 %v1541
    %v2560 = vunpack.c.l.b16 %v1542
    %v2561 = vunpack.c.h.b16 %v1542
    %v2562 = vunpack.c.l.b16 %v1543
    %v2563 = vunpack.c.h.b16 %v1543
    %v2564 = vunpack.c.l.b16 %v1544
    %v2565 = vunpack.c.h.b16 %v1544
    %v2566 = vunpack.c.l.b16 %v1545
    %v2567 = vunpack.c.h.b16 %v1545
    %v2568 = vunpack.c.l.b16 %v1546
    %v2569 = vunpack.c.h.b16 %v1546
    %v2570 = vunpack.c.l.b16 %v1547
    %v2571 = vunpack.c.h.b16 %v1547
    %v2572 = vunpack.c.l.b16 %v1548
    %v2573 = vunpack.c.h.b16 %v1548
    %v2574 = vunpack.c.l.b16 %v1549
    %v2575 = vunpack.c.h.b16 %v1549
    %v2576 = vunpack.c.l.b16 %v1550
    %v2577 = vunpack.c.h.b16 %v1550
    %v2578 = vunpack.c.l.b16 %v1551
    %v2579 = vunpack.c.h.b16 %v1551
    %v2580 = vunpack.c.l.b16 %v1552
    %v2581 = vunpack.c.h.b16 %v1552
    %v2582 = vunpack.c.l.b16 %v1553
    %v2583 = vunpack.c.h.b16 %v1553
    %v2584 = vunpack.c.l.b16 %v1554
    %v2585 = vunpack.c.h.b16 %v1554
    %v2586 = vunpack.c.l.b16 %v1555
    %v2587 = vunpack.c.h.b16 %v1555
    %v2588 = vunpack.c.l.b16 %v1556
    %v2589 = vunpack.c.h.b16 %v1556
    %v2590 = vunpack.c.l.b16 %v1557
    %v2591 = vunpack.c.h.b16 %v1557
    %v2592 = vunpack.c.l.b16 %v1558
    %v2593 = vunpack.c.h.b16 %v1558
    %v2594 = vunpack.c.l.b16 %v1559
    %v2595 = vunpack.c.h.b16 %v1559
    %v2596 = vunpack.c.l.b16 %v1560
    %v2597 = vunpack.c.h.b16 %v1560
    %v2598 = vunpack.c.l.b16 %v1561
    %v2599 = vunpack.c.h.b16 %v1561
    %v2600 = vunpack.c.l.b16 %v1562
    %v2601 = vunpack.c.h.b16 %v1562
    %v2602 = vunpack.c.l.b16 %v1563
    %v2603 = vunpack.c.h.b16 %v1563
    %v2604 = vunpack.c.l.b16 %v1564
    %v2605 = vunpack.c.h.b16 %v1564
    %v2606 = vunpack.c.l.b16 %v1565
    %v2607 = vunpack.c.h.b16 %v1565
    %v2608 = vunpack.c.l.b16 %v1566
    %v2609 = vunpack.c.h.b16 %v1566
    %v2610 = vunpack.c.l.b16 %v1567
    %v2611 = vunpack.c.h.b16 %v1567
    %v2612 = vunpack.c.l.b16 %v1568
    %v2613 = vunpack.c.h.b16 %v1568
    %v2614 = vunpack.c.l.b16 %v1569
    %v2615 = vunpack.c.h.b16 %v1569
    %v2616 = vunpack.c.l.b16 %v1570
    %v2617 = vunpack.c.h.b16 %v1570
    %v2618 = vunpack.c.l.b16 %v1571
    %v2619 = vunpack.c.h.b16 %v1571
    %v2620 = vunpack.c.l.b16 %v1572
    %v2621 = vunpack.c.h.b16 %v1572
    %v2622 = vunpack.c.l.b16 %v1573
    %v2623 = vunpack.c.h.b16 %v1573
    %v2624 = vunpack.c.l.b16 %v1574
    %v2625 = vunpack.c.h.b16 %v1574
    %v2626 = vunpack.c.l.b16 %v1575
    %v2627 = vunpack.c.h.b16 %v1575
    %v2628 = vunpack.c.l.b16 %v1576
    %v2629 = vunpack.c.h.b16 %v1576
    %v2630 = vunpack.c.l.b16 %v1577
    %v2631 = vunpack.c.h.b16 %v1577
    %v2632 = vunpack.c.l.b16 %v1578
    %v2633 = vunpack.c.h.b16 %v1578
    %v2634 = vunpack.c.l.b16 %v1579
    %v2635 = vunpack.c.h.b16 %v1579
    %v2636 = vunpack.c.l.b16 %v1580
    %v2637 = vunpack.c.h.b16 %v1580
    %v2638 = vunpack.c.l.b16 %v1581
    %v2639 = vunpack.c.h.b16 %v1581
    %v2640 = vunpack.c.l.b16 %v1582
    %v2641 = vunpack.c.h.b16 %v1582
    %v2642 = vunpack.c.l.b16 %v1583
    %v2643 = vunpack.c.h.b16 %v1583
    %v2644 = vunpack.c.l.b16 %v1584
    %v2645 = vunpack.c.h.b16 %v1584
    %v2646 = vunpack.c.l.b16 %v1585
    %v2647 = vunpack.c.h.b16 %v1585
    %v2648 = vunpack.c.l.b16 %v1586
    %v2649 = vunpack.c.h.b16 %v1586
    %v2650 = vunpack.c.l.b16 %v1587
    %v2651 = vunpack.c.h.b16 %v1587
    %v2652 = vunpack.c.l.b16 %v1588
    %v2653 = vunpack.c.h.b16 %v1588
    %v2654 = vunpack.c.l.b16 %v1589
    %v2655 = vunpack.c.h.b16 %v1589
    %v2656 = vunpack.c.l.b16 %v1590
    %v2657 = vunpack.c.h.b16 %v1590
    %v2658 = vunpack.c.l.b16 %v1591
    %v2659 = vunpack.c.h.b16 %v1591
    %v2660 = vunpack.c.l.b16 %v1592
    %v2661 = vunpack.c.h.b16 %v1592
    %v2662 = vunpack.c.l.b16 %v1593
    %v2663 = vunpack.c.h.b16 %v1593
    %v2664 = vunpack.c.l.b16 %v1594
    %v2665 = vunpack.c.h.b16 %v1594
    %v2666 = vunpack.c.l.b16 %v1595
    %v2667 = vunpack.c.h.b16 %v1595
    %v2668 = vunpack.c.l.b16 %v1596
    %v2669 = vunpack.c.h.b16 %v1596
    %v2670 = vunpack.c.l.b16 %v1597
    %v2671 = vunpack.c.h.b16 %v1597
    %v2672 = vunpack.c.l.b16 %v1598
    %v2673 = vunpack.c.h.b16 %v1598
    %v2674 = vunpack.c.l.b16 %v1599
    %v2675 = vunpack.c.h.b16 %v1599
    %v2676 = vunpack.c.l.b16 %v1600
    %v2677 = vunpack.c.h.b16 %v1600
    %v2678 = vunpack.c.l.b16 %v1601
    %v2679 = vunpack.c.h.b16 %v1601
    %v2680 = vunpack.c.l.b16 %v1602
    %v2681 = vunpack.c.h.b16 %v1602
    %v2682 = vunpack.c.l.b16 %v1603
    %v2683 = vunpack.c.h.b16 %v1603
    %v2684 = vunpack.c.l.b16 %v1604
    %v2685 = vunpack.c.h.b16 %v1604
    %v2686 = vunpack.c.l.b16 %v1605
    %v2687 = vunpack.c.h.b16 %v1605
    %v2688 = vunpack.c.l.b16 %v1606
    %v2689 = vunpack.c.h.b16 %v1606
    %v2690 = vunpack.c.l.b16 %v1607
    %v2691 = vunpack.c.h.b16 %v1607
    %v2692 = vunpack.c.l.b16 %v1608
    %v2693 = vunpack.c.h.b16 %v1608
    %v2694 = vunpack.c.l.b16 %v1609
    %v2695 = vunpack.c.h.b16 %v1609
    %v2696 = vunpack.c.l.b16 %v1610
    %v2697 = vunpack.c.h.b16 %v1610
    %v2698 = vunpack.c.l.b16 %v1611
    %v2699 = vunpack.c.h.b16 %v1611
    %v2700 = vunpack.c.l.b16 %v1612
    %v2701 = vunpack.c.h.b16 %v1612
    %v2702 = vunpack.c.l.b16 %v1613
    %v2703 = vunpack.c.h.b16 %v1613
    %v2704 = vunpack.c.l.b16 %v1614
    %v2705 = vunpack.c.h.b16 %v1614
    %v2706 = vunpack.c.l.b16 %v1615
    %v2707 = vunpack.c.h.b16 %v1615
    %v2708 = vunpack.c.l.b16 %v1616
    %v2709 = vunpack.c.h.b16 %v1616
    %v2710 = vunpack.c.l.b16 %v1617
    %v2711 = vunpack.c.h.b16 %v1617
    %v2712 = vunpack.c.l.b16 %v1618
    %v2713 = vunpack.c.h.b16 %v1618
    %v2714 = vunpack.c.l.b16 %v1619
    %v2715 = vunpack.c.h.b16 %v1619
    %v2716 = vunpack.c.l.b16 %v1620
    %v2717 = vunpack.c.h.b16 %v1620
    %v2718 = vunpack.c.l.b16 %v1621
    %v2719 = vunpack.c.h.b16 %v1621
    %v2720 = vunpack.c.l.b16 %v1622
    %v2721 = vunpack.c.h.b16 %v1622
    %v2722 = vunpack.c.l.b16 %v1623
    %v2723 = vunpack.c.h.b16 %v1623
    %v2724 = vunpack.c.l.b16 %v1624
    %v2725 = vunpack.c.h.b16 %v1624
    %v2726 = vunpack.c.l.b16 %v1625
    %v2727 = vunpack.c.h.b16 %v1625
    %v2728 = vunpack.c.l.b16 %v1626
    %v2729 = vunpack.c.h.b16 %v1626
    %v2730 = vunpack.c.l.b16 %v1627
    %v2731 = vunpack.c.h.b16 %v1627
    %v2732 = vunpack.c.l.b16 %v1628
    %v2733 = vunpack.c.h.b16 %v1628
    %v2734 = vunpack.c.l.b16 %v1629
    %v2735 = vunpack.c.h.b16 %v1629
    %v2736 = vunpack.c.l.b16 %v1630
    %v2737 = vunpack.c.h.b16 %v1630
    %v2738 = vunpack.c.l.b16 %v1631
    %v2739 = vunpack.c.h.b16 %v1631
    %v2740 = vunpack.c.l.b16 %v1632
    %v2741 = vunpack.c.h.b16 %v1632
    %v2742 = vunpack.c.l.b16 %v1633
    %v2743 = vunpack.c.h.b16 %v1633
    %v2744 = vunpack.c.l.b16 %v1634
    %v2745 = vunpack.c.h.b16 %v1634
    %v2746 = vunpack.c.l.b16 %v1635
    %v2747 = vunpack.c.h.b16 %v1635
    %v2748 = vunpack.c.l.b16 %v1636
    %v2749 = vunpack.c.h.b16 %v1636
    %v2750 = vunpack.c.l.b16 %v1637
    %v2751 = vunpack.c.h.b16 %v1637
    %v2752 = vunpack.c.l.b16 %v1638
    %v2753 = vunpack.c.h.b16 %v1638
    %v2754 = vunpack.c.l.b16 %v1639
    %v2755 = vunpack.c.h.b16 %v1639
    %v2756 = vunpack.c.l.b16 %v1640
    %v2757 = vunpack.c.h.b16 %v1640
    %v2758 = vunpack.c.l.b16 %v1641
    %v2759 = vunpack.c.h.b16 %v1641
    %v2760 = vunpack.c.l.b16 %v1642
    %v2761 = vunpack.c.h.b16 %v1642
    %v2762 = vunpack.c.l.b16 %v1643
    %v2763 = vunpack.c.h.b16 %v1643
    %v2764 = vunpack.c.l.b16 %v1644
    %v2765 = vunpack.c.h.b16 %v1644
    %v2766 = vunpack.c.l.b16 %v1645
    %v2767 = vunpack.c.h.b16 %v1645
    %v2768 = vunpack.c.l.b16 %v1646
    %v2769 = vunpack.c.h.b16 %v1646
    %v2770 = vunpack.c.l.b16 %v1647
    %v2771 = vunpack.c.h.b16 %v1647
    %v2772 = vunpack.c.l.b16 %v1648
    %v2773 = vunpack.c.h.b16 %v1648
    %v2774 = vunpack.c.l.b16 %v1649
    %v2775 = vunpack.c.h.b16 %v1649
    %v2776 = vunpack.c.l.b16 %v1650
    %v2777 = vunpack.c.h.b16 %v1650
    %v2778 = vunpack.c.l.b16 %v1651
    %v2779 = vunpack.c.h.b16 %v1651
    %v2780 = vunpack.c.l.b16 %v1652
    %v2781 = vunpack.c.h.b16 %v1652
    %v2782 = vunpack.c.l.b16 %v1653
    %v2783 = vunpack.c.h.b16 %v1653
    %v2784 = vunpack.c.l.b16 %v1654
    %v2785 = vunpack.c.h.b16 %v1654
    %v2786 = vunpack.c.l.b16 %v1655
    %v2787 = vunpack.c.h.b16 %v1655
    %v2788 = vunpack.c.l.b16 %v1656
    %v2789 = vunpack.c.h.b16 %v1656
    %v2790 = vunpack.c.l.b16 %v1657
    %v2791 = vunpack.c.h.b16 %v1657
    %v2792 = vunpack.c.l.b16 %v1658
    %v2793 = vunpack.c.h.b16 %v1658
    %v2794 = vunpack.c.l.b16 %v1659
    %v2795 = vunpack.c.h.b16 %v1659
    %v2796 = vunpack.c.l.b16 %v1660
    %v2797 = vunpack.c.h.b16 %v1660
    %v2798 = vunpack.c.l.b16 %v1661
    %v2799 = vunpack.c.h.b16 %v1661
    %v2800 = vunpack.c.l.b16 %v1662
    %v2801 = vunpack.c.h.b16 %v1662
    %v2802 = vunpack.c.l.b16 %v1663
    %v2803 = vunpack.c.h.b16 %v1663
    %v2804 = vunpack.c.l.b16 %v1664
    %v2805 = vunpack.c.h.b16 %v1664
    %v2806 = vunpack.c.l.b16 %v1665
    %v2807 = vunpack.c.h.b16 %v1665
    %v2808 = vunpack.c.l.b16 %v1666
    %v2809 = vunpack.c.h.b16 %v1666
    %v2810 = vunpack.c.l.b16 %v1667
    %v2811 = vunpack.c.h.b16 %v1667
    %v2812 = vunpack.c.l.b16 %v1668
    %v2813 = vunpack.c.h.b16 %v1668
    %v2814 = vunpack.c.l.b16 %v1669
    %v2815 = vunpack.c.h.b16 %v1669
    %v2816 = vunpack.c.l.b16 %v1670
    %v2817 = vunpack.c.h.b16 %v1670
    %v2818 = vunpack.c.l.b16 %v1671
    %v2819 = vunpack.c.h.b16 %v1671
    %v2820 = vunpack.c.l.b16 %v1672
    %v2821 = vunpack.c.h.b16 %v1672
    %v2822 = vunpack.c.l.b16 %v1673
    %v2823 = vunpack.c.h.b16 %v1673
    %v2824 = vunpack.c.l.b16 %v1674
    %v2825 = vunpack.c.h.b16 %v1674
    %v2826 = vunpack.c.l.b16 %v1675
    %v2827 = vunpack.c.h.b16 %v1675
    %v2828 = vunpack.c.l.b16 %v1676
    %v2829 = vunpack.c.h.b16 %v1676
    %v2830 = vunpack.c.l.b16 %v1677
    %v2831 = vunpack.c.h.b16 %v1677
    %v2832 = vunpack.c.l.b16 %v1678
    %v2833 = vunpack.c.h.b16 %v1678
    %v2834 = vunpack.c.l.b16 %v1679
    %v2835 = vunpack.c.h.b16 %v1679
    %v2836 = vunpack.c.l.b16 %v1680
    %v2837 = vunpack.c.h.b16 %v1680
    %v2838 = vunpack.c.l.b16 %v1681
    %v2839 = vunpack.c.h.b16 %v1681
    %v2840 = vunpack.c.l.b16 %v1682
    %v2841 = vunpack.c.h.b16 %v1682
    %v2842 = vunpack.c.l.b16 %v1683
    %v2843 = vunpack.c.h.b16 %v1683
    %v2844 = vunpack.c.l.b16 %v1684
    %v2845 = vunpack.c.h.b16 %v1684
    %v2846 = vunpack.c.l.b16 %v1685
    %v2847 = vunpack.c.h.b16 %v1685
    %v2848 = vunpack.c.l.b16 %v1686
    %v2849 = vunpack.c.h.b16 %v1686
    %v2850 = vunpack.c.l.b16 %v1687
    %v2851 = vunpack.c.h.b16 %v1687
    %v2852 = vpack.c.b16 %v2086, %v2084
    %v2853 = vpack.c.b16 %v2087, %v2085
    %v2854 = vpack.c.b16 %v2090, %v2088
    %v2855 = vpack.c.b16 %v2091, %v2089
    %v2856 = vpack.c.b16 %v2094, %v2092
    %v2857 = vpack.c.b16 %v2095, %v2093
    %v2858 = vpack.c.b16 %v2098, %v2096
    %v2859 = vpack.c.b16 %v2099, %v2097
    %v2860 = vpack.c.b16 %v2102, %v2100
    %v2861 = vpack.c.b16 %v2103, %v2101
    %v2862 = vpack.c.b16 %v2106, %v2104
    %v2863 = vpack.c.b16 %v2107, %v2105
    %v2864 = vpack.c.b16 %v2110, %v2108
    %v2865 = vpack.c.b16 %v2111, %v2109
    %v2866 = vpack.c.b16 %v2114, %v2112
    %v2867 = vpack.c.b16 %v2115, %v2113
    %v2868 = vpack.c.b16 %v2118, %v2116
    %v2869 = vpack.c.b16 %v2119, %v2117
    %v2870 = vpack.c.b16 %v2122, %v2120
    %v2871 = vpack.c.b16 %v2123, %v2121
    %v2872 = vpack.c.b16 %v2126, %v2124
    %v2873 = vpack.c.b16 %v2127, %v2125
    %v2874 = vpack.c.b16 %v2130, %v2128
    %v2875 = vpack.c.b16 %v2131, %v2129
    %v2876 = vpack.c.b16 %v2134, %v2132
    %v2877 = vpack.c.b16 %v2135, %v2133
    %v2878 = vpack.c.b16 %v2138, %v2136
    %v2879 = vpack.c.b16 %v2139, %v2137
    %v2880 = vpack.c.b16 %v2142, %v2140
    %v2881 = vpack.c.b16 %v2143, %v2141
    %v2882 = vpack.c.b16 %v2146, %v2144
    %v2883 = vpack.c.b16 %v2147, %v2145
    %v2884 = vpack.c.b16 %v2150, %v2148
    %v2885 = vpack.c.b16 %v2151, %v2149
    %v2886 = vpack.c.b16 %v2154, %v2152
    %v2887 = vpack.c.b16 %v2155, %v2153
    %v2888 = vpack.c.b16 %v2158, %v2156
    %v2889 = vpack.c.b16 %v2159, %v2157
    %v2890 = vpack.c.b16 %v2162, %v2160
    %v2891 = vpack.c.b16 %v2163, %v2161
    %v2892 = vpack.c.b16 %v2166, %v2164
    %v2893 = vpack.c.b16 %v2167, %v2165
    %v2894 = vpack.c.b16 %v2170, %v2168
    %v2895 = vpack.c.b16 %v2171, %v2169
    %v2896 = vpack.c.b16 %v2174, %v2172
    %v2897 = vpack.c.b16 %v2175, %v2173
    %v2898 = vpack.c.b16 %v2178, %v2176
    %v2899 = vpack.c.b16 %v2179, %v2177
    %v2900 = vpack.c.b16 %v2182, %v2180
    %v2901 = vpack.c.b16 %v2183, %v2181
    %v2902 = vpack.c.b16 %v2186, %v2184
    %v2903 = vpack.c.b16 %v2187, %v2185
    %v2904 = vpack.c.b16 %v2190, %v2188
    %v2905 = vpack.c.b16 %v2191, %v2189
    %v2906 = vpack.c.b16 %v2194, %v2192
    %v2907 = vpack.c.b16 %v2195, %v2193
    %v2908 = vpack.c.b16 %v2198, %v2196
    %v2909 = vpack.c.b16 %v2199, %v2197
    %v2910 = vpack.c.b16 %v2202, %v2200
    %v2911 = vpack.c.b16 %v2203, %v2201
    %v2912 = vpack.c.b16 %v2206, %v2204
    %v2913 = vpack.c.b16 %v2207, %v2205
    %v2914 = vpack.c.b16 %v2210, %v2208
    %v2915 = vpack.c.b16 %v2211, %v2209
    %v2916 = vpack.c.b16 %v2214, %v2212
    %v2917 = vpack.c.b16 %v2215, %v2213
    %v2918 = vpack.c.b16 %v2218, %v2216
    %v2919 = vpack.c.b16 %v2219, %v2217
    %v2920 = vpack.c.b16 %v2222, %v2220
    %v2921 = vpack.c.b16 %v2223, %v2221
    %v2922 = vpack.c.b16 %v2226, %v2224
    %v2923 = vpack.c.b16 %v2227, %v2225
    %v2924 = vpack.c.b16 %v2230, %v2228
    %v2925 = vpack.c.b16 %v2231, %v2229
    %v2926 = vpack.c.b16 %v2234, %v2232
    %v2927 = vpack.c.b16 %v2235, %v2233
    %v2928 = vpack.c.b16 %v2238, %v2236
    %v2929 = vpack.c.b16 %v2239, %v2237
    %v2930 = vpack.c.b16 %v2242, %v2240
    %v2931 = vpack.c.b16 %v2243, %v2241
    %v2932 = vpack.c.b16 %v2246, %v2244
    %v2933 = vpack.c.b16 %v2247, %v2245
    %v2934 = vpack.c.b16 %v2250, %v2248
    %v2935 = vpack.c.b16 %v2251, %v2249
    %v2936 = vpack.c.b16 %v2254, %v2252
    %v2937 = vpack.c.b16 %v2255, %v2253
    %v2938 = vpack.c.b16 %v2258, %v2256
    %v2939 = vpack.c.b16 %v2259, %v2257
    %v2940 = vpack.c.b16 %v2262, %v2260
    %v2941 = vpack.c.b16 %v2263, %v2261
    %v2942 = vpack.c.b16 %v2266, %v2264
    %v2943 = vpack.c.b16 %v2267, %v2265
    %v2944 = vpack.c.b16 %v2270, %v2268
    %v2945 = vpack.c.b16 %v2271, %v2269
    %v2946 = vpack.c.b16 %v2274, %v2272
    %v2947 = vpack.c.b16 %v2275, %v2273
    %v2948 = vpack.c.b16 %v2278, %v2276
    %v2949 = vpack.c.b16 %v2279, %v2277
    %v2950 = vpack.c.b16 %v2282, %v2280
    %v2951 = vpack.c.b16 %v2283, %v2281
    %v2952 = vpack.c.b16 %v2286, %v2284
    %v2953 = vpack.c.b16 %v2287, %v2285
    %v2954 = vpack.c.b16 %v2290, %v2288
    %v2955 = vpack.c.b16 %v2291, %v2289
    %v2956 = vpack.c.b16 %v2294, %v2292
    %v2957 = vpack.c.b16 %v2295, %v2293
    %v2958 = vpack.c.b16 %v2298, %v2296
    %v2959 = vpack.c.b16 %v2299, %v2297
    %v2960 = vpack.c.b16 %v2302, %v2300
    %v2961 = vpack.c.b16 %v2303, %v2301
    %v2962 = vpack.c.b16 %v2306, %v2304
    %v2963 = vpack.c.b16 %v2307, %v2305
    %v2964 = vpack.c.b16 %v2310, %v2308
    %v2965 = vpack.c.b16 %v2311, %v2309
    %v2966 = vpack.c.b16 %v2314, %v2312
    %v2967 = vpack.c.b16 %v2315, %v2313
    %v2968 = vpack.c.b16 %v2318, %v2316
    %v2969 = vpack.c.b16 %v2319, %v2317
    %v2970 = vpack.c.b16 %v2322, %v2320
    %v2971 = vpack.c.b16 %v2323, %v2321
    %v2972 = vpack.c.b16 %v2326, %v2324
    %v2973 = vpack.c.b16 %v2327, %v2325
    %v2974 = vpack.c.b16 %v2330, %v2328
    %v2975 = vpack.c.b16 %v2331, %v2329
    %v2976 = vpack.c.b16 %v2334, %v2332
    %v2977 = vpack.c.b16 %v2335, %v2333
    %v2978 = vpack.c.b16 %v2338, %v2336
    %v2979 = vpack.c.b16 %v2339, %v2337
    %v2980 = vpack.c.b16 %v2342, %v2340
    %v2981 = vpack.c.b16 %v2343, %v2341
    %v2982 = vpack.c.b16 %v2346, %v2344
    %v2983 = vpack.c.b16 %v2347, %v2345
    %v2984 = vpack.c.b16 %v2350, %v2348
    %v2985 = vpack.c.b16 %v2351, %v2349
    %v2986 = vpack.c.b16 %v2354, %v2352
    %v2987 = vpack.c.b16 %v2355, %v2353
    %v2988 = vpack.c.b16 %v2358, %v2356
    %v2989 = vpack.c.b16 %v2359, %v2357
    %v2990 = vpack.c.b16 %v2362, %v2360
    %v2991 = vpack.c.b16 %v2363, %v2361
    %v2992 = vpack.c.b16 %v2366, %v2364
    %v2993 = vpack.c.b16 %v2367, %v2365
    %v2994 = vpack.c.b16 %v2370, %v2368
    %v2995 = vpack.c.b16 %v2371, %v2369
    %v2996 = vpack.c.b16 %v2374, %v2372
    %v2997 = vpack.c.b16 %v2375, %v2373
    %v2998 = vpack.c.b16 %v2378, %v2376
    %v2999 = vpack.c.b16 %v2379, %v2377
    %v3000 = vpack.c.b16 %v2382, %v2380
    %v3001 = vpack.c.b16 %v2383, %v2381
    %v3002 = vpack.c.b16 %v2386, %v2384
    %v3003 = vpack.c.b16 %v2387, %v2385
    %v3004 = vpack.c.b16 %v2390, %v2388
    %v3005 = vpack.c.b16 %v2391, %v2389
    %v3006 = vpack.c.b16 %v2394, %v2392
    %v3007 = vpack.c.b16 %v2395, %v2393
    %v3008 = vpack.c.b16 %v2398, %v2396
    %v3009 = vpack.c.b16 %v2399, %v2397
    %v3010 = vpack.c.b16 %v2402, %v2400
    %v3011 = vpack.c.b16 %v2403, %v2401
    %v3012 = vpack.c.b16 %v2406, %v2404
    %v3013 = vpack.c.b16 %v2407, %v2405
    %v3014 = vpack.c.b16 %v2410, %v2408
    %v3015 = vpack.c.b16 %v2411, %v2409
    %v3016 = vpack.c.b16 %v2414, %v2412
    %v3017 = vpack.c.b16 %v2415, %v2413
    %v3018 = vpack.c.b16 %v2418, %v2416
    %v3019 = vpack.c.b16 %v2419, %v2417
    %v3020 = vpack.c.b16 %v2422, %v2420
    %v3021 = vpack.c.b16 %v2423, %v2421
    %v3022 = vpack.c.b16 %v2426, %v2424
    %v3023 = vpack.c.b16 %v2427, %v2425
    %v3024 = vpack.c.b16 %v2430, %v2428
    %v3025 = vpack.c.b16 %v2431, %v2429
    %v3026 = vpack.c.b16 %v2434, %v2432
    %v3027 = vpack.c.b16 %v2435, %v2433
    %v3028 = vpack.c.b16 %v2438, %v2436
    %v3029 = vpack.c.b16 %v2439, %v2437
    %v3030 = vpack.c.b16 %v2442, %v2440
    %v3031 = vpack.c.b16 %v2443, %v2441
    %v3032 = vpack.c.b16 %v2446, %v2444
    %v3033 = vpack.c.b16 %v2447, %v2445
    %v3034 = vpack.c.b16 %v2450, %v2448
    %v3035 = vpack.c.b16 %v2451, %v2449
    %v3036 = vpack.c.b16 %v2454, %v2452
    %v3037 = vpack.c.b16 %v2455, %v2453
    %v3038 = vpack.c.b16 %v2458, %v2456
    %v3039 = vpack.c.b16 %v2459, %v2457
    %v3040 = vpack.c.b16 %v2462, %v2460
    %v3041 = vpack.c.b16 %v2463, %v2461
    %v3042 = vpack.c.b16 %v2466, %v2464
    %v3043 = vpack.c.b16 %v2467, %v2465
    %v3044 = vpack.c.b16 %v2470, %v2468
    %v3045 = vpack.c.b16 %v2471, %v2469
    %v3046 = vpack.c.b16 %v2474, %v2472
    %v3047 = vpack.c.b16 %v2475, %v2473
    %v3048 = vpack.c.b16 %v2478, %v2476
    %v3049 = vpack.c.b16 %v2479, %v2477
    %v3050 = vpack.c.b16 %v2482, %v2480
    %v3051 = vpack.c.b16 %v2483, %v2481
    %v3052 = vpack.c.b16 %v2486, %v2484
    %v3053 = vpack.c.b16 %v2487, %v2485
    %v3054 = vpack.c.b16 %v2490, %v2488
    %v3055 = vpack.c.b16 %v2491, %v2489
    %v3056 = vpack.c.b16 %v2494, %v2492
    %v3057 = vpack.c.b16 %v2495, %v2493
    %v3058 = vpack.c.b16 %v2498, %v2496
    %v3059 = vpack.c.b16 %v2499, %v2497
    %v3060 = vpack.c.b16 %v2502, %v2500
    %v3061 = vpack.c.b16 %v2503, %v2501
    %v3062 = vpack.c.b16 %v2506, %v2504
    %v3063 = vpack.c.b16 %v2507, %v2505
    %v3064 = vpack.c.b16 %v2510, %v2508
    %v3065 = vpack.c.b16 %v2511, %v2509
    %v3066 = vpack.c.b16 %v2514, %v2512
    %v3067 = vpack.c.b16 %v2515, %v2513
    %v3068 = vpack.c.b16 %v2518, %v2516
    %v3069 = vpack.c.b16 %v2519, %v2517
    %v3070 = vpack.c.b16 %v2522, %v2520
    %v3071 = vpack.c.b16 %v2523, %v2521
    %v3072 = vpack.c.b16 %v2526, %v2524
    %v3073 = vpack.c.b16 %v2527, %v2525
    %v3074 = vpack.c.b16 %v2530, %v2528
    %v3075 = vpack.c.b16 %v2531, %v2529
    %v3076 = vpack.c.b16 %v2534, %v2532
    %v3077 = vpack.c.b16 %v2535, %v2533
    %v3078 = vpack.c.b16 %v2538, %v2536
    %v3079 = vpack.c.b16 %v2539, %v2537
    %v3080 = vpack.c.b16 %v2542, %v2540
    %v3081 = vpack.c.b16 %v2543, %v2541
    %v3082 = vpack.c.b16 %v2546, %v2544
    %v3083 = vpack.c.b16 %v2547, %v2545
    %v3084 = vpack.c.b16 %v2550, %v2548
    %v3085 = vpack.c.b16 %v2551, %v2549
    %v3086 = vpack.c.b16 %v2554, %v2552
    %v3087 = vpack.c.b16 %v2555, %v2553
    %v3088 = vpack.c.b16 %v2558, %v2556
    %v3089 = vpack.c.b16 %v2559, %v2557
    %v3090 = vpack.c.b16 %v2562, %v2560
    %v3091 = vpack.c.b16 %v2563, %v2561
    %v3092 = vpack.c.b16 %v2566, %v2564
    %v3093 = vpack.c.b16 %v2567, %v2565
    %v3094 = vpack.c.b16 %v2570, %v2568
    %v3095 = vpack.c.b16 %v2571, %v2569
    %v3096 = vpack.c.b16 %v2574, %v2572
    %v3097 = vpack.c.b16 %v2575, %v2573
    %v3098 = vpack.c.b16 %v2578, %v2576
    %v3099 = vpack.c.b16 %v2579, %v2577
    %v3100 = vpack.c.b16 %v2582, %v2580
    %v3101 = vpack.c.b16 %v2583, %v2581
    %v3102 = vpack.c.b16 %v2586, %v2584
    %v3103 = vpack.c.b16 %v2587, %v2585
    %v3104 = vpack.c.b16 %v2590, %v2588
    %v3105 = vpack.c.b16 %v2591, %v2589
    %v3106 = vpack.c.b16 %v2594, %v2592
    %v3107 = vpack.c.b16 %v2595, %v2593
    %v3108 = vpack.c.b16 %v2598, %v2596
    %v3109 = vpack.c.b16 %v2599, %v2597
    %v3110 = vpack.c.b16 %v2602, %v2600
    %v3111 = vpack.c.b16 %v2603, %v2601
    %v3112 = vpack.c.b16 %v2606, %v2604
    %v3113 = vpack.c.b16 %v2607, %v2605
    %v3114 = vpack.c.b16 %v2610, %v2608
    %v3115 = vpack.c.b16 %v2611, %v2609
    %v3116 = vpack.c.b16 %v2614, %v2612
    %v3117 = vpack.c.b16 %v2615, %v2613
    %v3118 = vpack.c.b16 %v2618, %v2616
    %v3119 = vpack.c.b16 %v2619, %v2617
    %v3120 = vpack.c.b16 %v2622, %v2620
    %v3121 = vpack.c.b16 %v2623, %v2621
    %v3122 = vpack.c.b16 %v2626, %v2624
    %v3123 = vpack.c.b16 %v2627, %v2625
    %v3124 = vpack.c.b16 %v2630, %v2628
    %v3125 = vpack.c.b16 %v2631, %v2629
    %v3126 = vpack.c.b16 %v2634, %v2632
    %v3127 = vpack.c.b16 %v2635, %v2633
    %v3128 = vpack.c.b16 %v2638, %v2636
    %v3129 = vpack.c.b16 %v2639, %v2637
    %v3130 = vpack.c.b16 %v2642, %v2640
    %v3131 = vpack.c.b16 %v2643, %v2641
    %v3132 = vpack.c.b16 %v2646, %v2644
    %v3133 = vpack.c.b16 %v2647, %v2645
    %v3134 = vpack.c.b16 %v2650, %v2648
    %v3135 = vpack.c.b16 %v2651, %v2649
    %v3136 = vpack.c.b16 %v2654, %v2652
    %v3137 = vpack.c.b16 %v2655, %v2653
    %v3138 = vpack.c.b16 %v2658, %v2656
    %v3139 = vpack.c.b16 %v2659, %v2657
    %v3140 = vpack.c.b16 %v2662, %v2660
    %v3141 = vpack.c.b16 %v2663, %v2661
    %v3142 = vpack.c.b16 %v2666, %v2664
    %v3143 = vpack.c.b16 %v2667, %v2665
    %v3144 = vpack.c.b16 %v2670, %v2668
    %v3145 = vpack.c.b16 %v2671, %v2669
    %v3146 = vpack.c.b16 %v2674, %v2672
    %v3147 = vpack.c.b16 %v2675, %v2673
    %v3148 = vpack.c.b16 %v2678, %v2676
    %v3149 = vpack.c.b16 %v2679, %v2677
    %v3150 = vpack.c.b16 %v2682, %v2680
    %v3151 = vpack.c.b16 %v2683, %v2681
    %v3152 = vpack.c.b16 %v2686, %v2684
    %v3153 = vpack.c.b16 %v2687, %v2685
    %v3154 = vpack.c.b16 %v2690, %v2688
    %v3155 = vpack.c.b16 %v2691, %v2689
    %v3156 = vpack.c.b16 %v2694, %v2692
    %v3157 = vpack.c.b16 %v2695, %v2693
    %v3158 = vpack.c.b16 %v2698, %v2696
    %v3159 = vpack.c.b16 %v2699, %v2697
    %v3160 = vpack.c.b16 %v2702, %v2700
    %v3161 = vpack.c.b16 %v2703, %v2701
    %v3162 = vpack.c.b16 %v2706, %v2704
    %v3163 = vpack.c.b16 %v2707, %v2705
    %v3164 = vpack.c.b16 %v2710, %v2708
    %v3165 = vpack.c.b16 %v2711, %v2709
    %v3166 = vpack.c.b16 %v2714, %v2712
    %v3167 = vpack.c.b16 %v2715, %v2713
    %v3168 = vpack.c.b16 %v2718, %v2716
    %v3169 = vpack.c.b16 %v2719, %v2717
    %v3170 = vpack.c.b16 %v2722, %v2720
    %v3171 = vpack.c.b16 %v2723, %v2721
    %v3172 = vpack.c.b16 %v2726, %v2724
    %v3173 = vpack.c.b16 %v2727, %v2725
    %v3174 = vpack.c.b16 %v2730, %v2728
    %v3175 = vpack.c.b16 %v2731, %v2729
    %v3176 = vpack.c.b16 %v2734, %v2732
    %v3177 = vpack.c.b16 %v2735, %v2733
    %v3178 = vpack.c.b16 %v2738, %v2736
    %v3179 = vpack.c.b16 %v2739, %v2737
    %v3180 = vpack.c.b16 %v2742, %v2740
    %v3181 = vpack.c.b16 %v2743, %v2741
    %v3182 = vpack.c.b16 %v2746, %v2744
    %v3183 = vpack.c.b16 %v2747, %v2745
    %v3184 = vpack.c.b16 %v2750, %v2748
    %v3185 = vpack.c.b16 %v2751, %v2749
    %v3186 = vpack.c.b16 %v2754, %v2752
    %v3187 = vpack.c.b16 %v2755, %v2753
    %v3188 = vpack.c.b16 %v2758, %v2756
    %v3189 = vpack.c.b16 %v2759, %v2757
    %v3190 = vpack.c.b16 %v2762, %v2760
    %v3191 = vpack.c.b16 %v2763, %v2761
    %v3192 = vpack.c.b16 %v2766, %v2764
    %v3193 = vpack.c.b16 %v2767, %v2765
    %v3194 = vpack.c.b16 %v2770, %v2768
    %v3195 = vpack.c.b16 %v2771, %v2769
    %v3196 = vpack.c.b16 %v2774, %v2772
    %v3197 = vpack.c.b16 %v2775, %v2773
    %v3198 = vpack.c.b16 %v2778, %v2776
    %v3199 = vpack.c.b16 %v2779, %v2777
    %v3200 = vpack.c.b16 %v2782, %v2780
    %v3201 = vpack.c.b16 %v2783, %v2781
    %v3202 = vpack.c.b16 %v2786, %v2784
    %v3203 = vpack.c.b16 %v2787, %v2785
    %v3204 = vpack.c.b16 %v2790, %v2788
    %v3205 = vpack.c.b16 %v2791, %v2789
    %v3206 = vpack.c.b16 %v2794, %v2792
    %v3207 = vpack.c.b16 %v2795, %v2793
    %v3208 = vpack.c.b16 %v2798, %v2796
    %v3209 = vpack.c.b16 %v2799, %v2797
    %v3210 = vpack.c.b16 %v2802, %v2800
    %v3211 = vpack.c.b16 %v2803, %v2801
    %v3212 = vpack.c.b16 %v2806, %v2804
    %v3213 = vpack.c.b16 %v2807, %v2805
    %v3214 = vpack.c.b16 %v2810, %v2808
    %v3215 = vpack.c.b16 %v2811, %v2809
    %v3216 = vpack.c.b16 %v2814, %v2812
    %v3217 = vpack.c.b16 %v2815, %v2813
    %v3218 = vpack.c.b16 %v2818, %v2816
    %v3219 = vpack.c.b16 %v2819, %v2817
    %v3220 = vpack.c.b16 %v2822, %v2820
    %v3221 = vpack.c.b16 %v2823, %v2821
    %v3222 = vpack.c.b16 %v2826, %v2824
    %v3223 = vpack.c.b16 %v2827, %v2825
    %v3224 = vpack.c.b16 %v2830, %v2828
    %v3225 = vpack.c.b16 %v2831, %v2829
    %v3226 = vpack.c.b16 %v2834, %v2832
    %v3227 = vpack.c.b16 %v2835, %v2833
    %v3228 = vpack.c.b16 %v2838, %v2836
    %v3229 = vpack.c.b16 %v2839, %v2837
    %v3230 = vpack.c.b16 %v2842, %v2840
    %v3231 = vpack.c.b16 %v2843, %v2841
    %v3232 = vpack.c.b16 %v2846, %v2844
    %v3233 = vpack.c.b16 %v2847, %v2845
    %v3234 = vpack.c.b16 %v2850, %v2848
    %v3235 = vpack.c.b16 %v2851, %v2849
    %3620 = vmatprep.subr.bf16.mxu0 %v2867
    %3621 = vmatpush1.bf16.msra.mxu0 %v2866
    %3622 = vmatprep.subr.bf16.mxu0 %v2865
    %3623 = vmatpush1.bf16.msra.mxu0 %v2864
    %3624 = vmatprep.subr.bf16.mxu0 %v2863
    %3625 = vmatpush1.bf16.msra.mxu0 %v2862
    %3626 = vmatprep.subr.bf16.mxu0 %v2861
    %3627 = vmatpush1.bf16.msra.mxu0 %v2860
    %3628 = vmatprep.subr.bf16.mxu0 %v2859
    %3629 = vmatpush1.bf16.msra.mxu0 %v2858
    %3630 = vmatprep.subr.bf16.mxu0 %v2857
    %3631 = vmatpush1.bf16.msra.mxu0 %v2856
    %3632 = vmatprep.subr.bf16.mxu0 %v2855
    %3633 = vmatpush1.bf16.msra.mxu0 %v2854
    %3634 = vmatprep.subr.bf16.mxu0 %v2853
    %3635 = vmatpush1.bf16.msra.mxu0 %v2852
    %3636 = vmatprep.subr.bf16.mxu0 %v2883
    %3637 = vmatpush2.bf16.msra.mxu0 %v2882
    %3638 = vmatprep.subr.bf16.mxu0 %v2881
    %3639 = vmatpush2.bf16.msra.mxu0 %v2880
    %3640 = vmatprep.subr.bf16.mxu0 %v2879
    %3641 = vmatpush2.bf16.msra.mxu0 %v2878
    %3642 = vmatprep.subr.bf16.mxu0 %v2877
    %3643 = vmatpush2.bf16.msra.mxu0 %v2876
    %3644 = vmatprep.subr.bf16.mxu0 %v2875
    %3645 = vmatpush2.bf16.msra.mxu0 %v2874
    %3646 = vmatprep.subr.bf16.mxu0 %v2873
    %3647 = vmatpush2.bf16.msra.mxu0 %v2872
    %3648 = vmatprep.subr.bf16.mxu0 %v2871
    %3649 = vmatpush2.bf16.msra.mxu0 %v2870
    %3650 = vmatprep.subr.bf16.mxu0 %v2869
    %3651 = vmatpush2.bf16.msra.mxu0 %v2868
    %3652 = vmatprep.mubr.bf16.mxu0 %v1257
    %3653 = vmatmul.mubr.bf16.gmra.mxu0 %v1256
    %v3654 = vpop.f32.mrf.mxu0
    %v3655 = vadd.f32 %v1693, %v3654
    %v3656 = vpop.f32.mrf.mxu0
    %v3657 = vadd.f32 %v1697, %v3656
    %v3658 = vpop.f32.mrf.mxu0
    %v3659 = vadd.f32 %v1693, %v3658
    %v3660 = vpop.f32.mrf.mxu0
    %v3661 = vadd.f32 %v1697, %v3660
    %3662 = vmatprep.mubr.bf16.mxu0 %v1281
    %3663 = vmatmul.mubr.bf16.gmra.mxu0 %v1280
    %v3664 = vpop.f32.mrf.mxu0
    %v3665 = vadd.f32 %v1693, %v3664
    %v3666 = vpop.f32.mrf.mxu0
    %v3667 = vadd.f32 %v1697, %v3666
    %v3668 = vpop.f32.mrf.mxu0
    %v3669 = vadd.f32 %v1693, %v3668
    %v3670 = vpop.f32.mrf.mxu0
    %v3671 = vadd.f32 %v1697, %v3670
    %3672 = vdwg.mxu0
    %3673 = vmatprep.subr.bf16.mxu0 %v2899
    %3674 = vmatpush1.bf16.msra.mxu0 %v2898
    %3675 = vmatprep.subr.bf16.mxu0 %v2897
    %3676 = vmatpush1.bf16.msra.mxu0 %v2896
    %3677 = vmatprep.subr.bf16.mxu0 %v2895
    %3678 = vmatpush1.bf16.msra.mxu0 %v2894
    %3679 = vmatprep.subr.bf16.mxu0 %v2893
    %3680 = vmatpush1.bf16.msra.mxu0 %v2892
    %3681 = vmatprep.subr.bf16.mxu0 %v2891
    %3682 = vmatpush1.bf16.msra.mxu0 %v2890
    %3683 = vmatprep.subr.bf16.mxu0 %v2889
    %3684 = vmatpush1.bf16.msra.mxu0 %v2888
    %3685 = vmatprep.subr.bf16.mxu0 %v2887
    %3686 = vmatpush1.bf16.msra.mxu0 %v2886
    %3687 = vmatprep.subr.bf16.mxu0 %v2885
    %3688 = vmatpush1.bf16.msra.mxu0 %v2884
    %3689 = vmatprep.subr.bf16.mxu0 %v2915
    %3690 = vmatpush2.bf16.msra.mxu0 %v2914
    %3691 = vmatprep.subr.bf16.mxu0 %v2913
    %3692 = vmatpush2.bf16.msra.mxu0 %v2912
    %3693 = vmatprep.subr.bf16.mxu0 %v2911
    %3694 = vmatpush2.bf16.msra.mxu0 %v2910
    %3695 = vmatprep.subr.bf16.mxu0 %v2909
    %3696 = vmatpush2.bf16.msra.mxu0 %v2908
    %3697 = vmatprep.subr.bf16.mxu0 %v2907
    %3698 = vmatpush2.bf16.msra.mxu0 %v2906
    %3699 = vmatprep.subr.bf16.mxu0 %v2905
    %3700 = vmatpush2.bf16.msra.mxu0 %v2904
    %3701 = vmatprep.subr.bf16.mxu0 %v2903
    %3702 = vmatpush2.bf16.msra.mxu0 %v2902
    %3703 = vmatprep.subr.bf16.mxu0 %v2901
    %3704 = vmatpush2.bf16.msra.mxu0 %v2900
    %3705 = vmatprep.mubr.bf16.mxu0 %v1259
    %3706 = vmatmul.mubr.bf16.gmra.mxu0 %v1258
    %v3707 = vpop.f32.mrf.mxu0
    %v3708 = vadd.f32 %v3655, %v3707
    %v3709 = vpop.f32.mrf.mxu0
    %v3710 = vadd.f32 %v3657, %v3709
    %v3711 = vpop.f32.mrf.mxu0
    %v3712 = vadd.f32 %v3659, %v3711
    %v3713 = vpop.f32.mrf.mxu0
    %v3714 = vadd.f32 %v3661, %v3713
    %3715 = vmatprep.mubr.bf16.mxu0 %v1283
    %3716 = vmatmul.mubr.bf16.gmra.mxu0 %v1282
    %v3717 = vpop.f32.mrf.mxu0
    %v3718 = vadd.f32 %v3665, %v3717
    %v3719 = vpop.f32.mrf.mxu0
    %v3720 = vadd.f32 %v3667, %v3719
    %v3721 = vpop.f32.mrf.mxu0
    %v3722 = vadd.f32 %v3669, %v3721
    %v3723 = vpop.f32.mrf.mxu0
    %v3724 = vadd.f32 %v3671, %v3723
    %3725 = vdwg.mxu0
    %3726 = vmatprep.subr.bf16.mxu0 %v2931
    %3727 = vmatpush1.bf16.msra.mxu0 %v2930
    %3728 = vmatprep.subr.bf16.mxu0 %v2929
    %3729 = vmatpush1.bf16.msra.mxu0 %v2928
    %3730 = vmatprep.subr.bf16.mxu0 %v2927
    %3731 = vmatpush1.bf16.msra.mxu0 %v2926
    %3732 = vmatprep.subr.bf16.mxu0 %v2925
    %3733 = vmatpush1.bf16.msra.mxu0 %v2924
    %3734 = vmatprep.subr.bf16.mxu0 %v2923
    %3735 = vmatpush1.bf16.msra.mxu0 %v2922
    %3736 = vmatprep.subr.bf16.mxu0 %v2921
    %3737 = vmatpush1.bf16.msra.mxu0 %v2920
    %3738 = vmatprep.subr.bf16.mxu0 %v2919
    %3739 = vmatpush1.bf16.msra.mxu0 %v2918
    %3740 = vmatprep.subr.bf16.mxu0 %v2917
    %3741 = vmatpush1.bf16.msra.mxu0 %v2916
    %3742 = vmatprep.subr.bf16.mxu0 %v2947
    %3743 = vmatpush2.bf16.msra.mxu0 %v2946
    %3744 = vmatprep.subr.bf16.mxu0 %v2945
    %3745 = vmatpush2.bf16.msra.mxu0 %v2944
    %3746 = vmatprep.subr.bf16.mxu0 %v2943
    %3747 = vmatpush2.bf16.msra.mxu0 %v2942
    %3748 = vmatprep.subr.bf16.mxu0 %v2941
    %3749 = vmatpush2.bf16.msra.mxu0 %v2940
    %3750 = vmatprep.subr.bf16.mxu0 %v2939
    %3751 = vmatpush2.bf16.msra.mxu0 %v2938
    %3752 = vmatprep.subr.bf16.mxu0 %v2937
    %3753 = vmatpush2.bf16.msra.mxu0 %v2936
    %3754 = vmatprep.subr.bf16.mxu0 %v2935
    %3755 = vmatpush2.bf16.msra.mxu0 %v2934
    %3756 = vmatprep.subr.bf16.mxu0 %v2933
    %3757 = vmatpush2.bf16.msra.mxu0 %v2932
    %3758 = vmatprep.mubr.bf16.mxu0 %v1261
    %3759 = vmatmul.mubr.bf16.gmra.mxu0 %v1260
    %v3760 = vpop.f32.mrf.mxu0
    %v3761 = vadd.f32 %v3708, %v3760
    %v3762 = vpop.f32.mrf.mxu0
    %v3763 = vadd.f32 %v3710, %v3762
    %v3764 = vpop.f32.mrf.mxu0
    %v3765 = vadd.f32 %v3712, %v3764
    %v3766 = vpop.f32.mrf.mxu0
    %v3767 = vadd.f32 %v3714, %v3766
    %3768 = vmatprep.mubr.bf16.mxu0 %v1285
    %3769 = vmatmul.mubr.bf16.gmra.mxu0 %v1284
    %v3770 = vpop.f32.mrf.mxu0
    %v3771 = vadd.f32 %v3718, %v3770
    %v3772 = vpop.f32.mrf.mxu0
    %v3773 = vadd.f32 %v3720, %v3772
    %v3774 = vpop.f32.mrf.mxu0
    %v3775 = vadd.f32 %v3722, %v3774
    %v3776 = vpop.f32.mrf.mxu0
    %v3777 = vadd.f32 %v3724, %v3776
    %3778 = vdwg.mxu0
    %3779 = vmatprep.subr.bf16.mxu0 %v2963
    %3780 = vmatpush1.bf16.msra.mxu0 %v2962
    %3781 = vmatprep.subr.bf16.mxu0 %v2961
    %3782 = vmatpush1.bf16.msra.mxu0 %v2960
    %3783 = vmatprep.subr.bf16.mxu0 %v2959
    %3784 = vmatpush1.bf16.msra.mxu0 %v2958
    %3785 = vmatprep.subr.bf16.mxu0 %v2957
    %3786 = vmatpush1.bf16.msra.mxu0 %v2956
    %3787 = vmatprep.subr.bf16.mxu0 %v2955
    %3788 = vmatpush1.bf16.msra.mxu0 %v2954
    %3789 = vmatprep.subr.bf16.mxu0 %v2953
    %3790 = vmatpush1.bf16.msra.mxu0 %v2952
    %3791 = vmatprep.subr.bf16.mxu0 %v2951
    %3792 = vmatpush1.bf16.msra.mxu0 %v2950
    %3793 = vmatprep.subr.bf16.mxu0 %v2949
    %3794 = vmatpush1.bf16.msra.mxu0 %v2948
    %3795 = vmatprep.subr.bf16.mxu0 %v2979
    %3796 = vmatpush2.bf16.msra.mxu0 %v2978
    %3797 = vmatprep.subr.bf16.mxu0 %v2977
    %3798 = vmatpush2.bf16.msra.mxu0 %v2976
    %3799 = vmatprep.subr.bf16.mxu0 %v2975
    %3800 = vmatpush2.bf16.msra.mxu0 %v2974
    %3801 = vmatprep.subr.bf16.mxu0 %v2973
    %3802 = vmatpush2.bf16.msra.mxu0 %v2972
    %3803 = vmatprep.subr.bf16.mxu0 %v2971
    %3804 = vmatpush2.bf16.msra.mxu0 %v2970
    %3805 = vmatprep.subr.bf16.mxu0 %v2969
    %3806 = vmatpush2.bf16.msra.mxu0 %v2968
    %3807 = vmatprep.subr.bf16.mxu0 %v2967
    %3808 = vmatpush2.bf16.msra.mxu0 %v2966
    %3809 = vmatprep.subr.bf16.mxu0 %v2965
    %3810 = vmatpush2.bf16.msra.mxu0 %v2964
    %3811 = vmatprep.mubr.bf16.mxu0 %v1263
    %3812 = vmatmul.mubr.bf16.gmra.mxu0 %v1262
    %v3813 = vpop.f32.mrf.mxu0
    %v3814 = vadd.f32 %v3761, %v3813
    %v3815 = vpop.f32.mrf.mxu0
    %v3816 = vadd.f32 %v3763, %v3815
    %v3817 = vpop.f32.mrf.mxu0
    %v3818 = vadd.f32 %v3765, %v3817
    %v3819 = vpop.f32.mrf.mxu0
    %v3820 = vadd.f32 %v3767, %v3819
    %3821 = vmatprep.mubr.bf16.mxu0 %v1287
    %3822 = vmatmul.mubr.bf16.gmra.mxu0 %v1286
    %v3823 = vpop.f32.mrf.mxu0
    %v3824 = vadd.f32 %v3771, %v3823
    %v3825 = vpop.f32.mrf.mxu0
    %v3826 = vadd.f32 %v3773, %v3825
    %v3827 = vpop.f32.mrf.mxu0
    %v3828 = vadd.f32 %v3775, %v3827
    %v3829 = vpop.f32.mrf.mxu0
    %v3830 = vadd.f32 %v3777, %v3829
    %3831 = vdwg.mxu0
    %3832 = vmatprep.subr.bf16.mxu0 %v2995
    %3833 = vmatpush1.bf16.msra.mxu0 %v2994
    %3834 = vmatprep.subr.bf16.mxu0 %v2993
    %3835 = vmatpush1.bf16.msra.mxu0 %v2992
    %3836 = vmatprep.subr.bf16.mxu0 %v2991
    %3837 = vmatpush1.bf16.msra.mxu0 %v2990
    %3838 = vmatprep.subr.bf16.mxu0 %v2989
    %3839 = vmatpush1.bf16.msra.mxu0 %v2988
    %3840 = vmatprep.subr.bf16.mxu0 %v2987
    %3841 = vmatpush1.bf16.msra.mxu0 %v2986
    %3842 = vmatprep.subr.bf16.mxu0 %v2985
    %3843 = vmatpush1.bf16.msra.mxu0 %v2984
    %3844 = vmatprep.subr.bf16.mxu0 %v2983
    %3845 = vmatpush1.bf16.msra.mxu0 %v2982
    %3846 = vmatprep.subr.bf16.mxu0 %v2981
    %3847 = vmatpush1.bf16.msra.mxu0 %v2980
    %3848 = vmatprep.subr.bf16.mxu0 %v3011
    %3849 = vmatpush2.bf16.msra.mxu0 %v3010
    %3850 = vmatprep.subr.bf16.mxu0 %v3009
    %3851 = vmatpush2.bf16.msra.mxu0 %v3008
    %3852 = vmatprep.subr.bf16.mxu0 %v3007
    %3853 = vmatpush2.bf16.msra.mxu0 %v3006
    %3854 = vmatprep.subr.bf16.mxu0 %v3005
    %3855 = vmatpush2.bf16.msra.mxu0 %v3004
    %3856 = vmatprep.subr.bf16.mxu0 %v3003
    %3857 = vmatpush2.bf16.msra.mxu0 %v3002
    %3858 = vmatprep.subr.bf16.mxu0 %v3001
    %3859 = vmatpush2.bf16.msra.mxu0 %v3000
    %3860 = vmatprep.subr.bf16.mxu0 %v2999
    %3861 = vmatpush2.bf16.msra.mxu0 %v2998
    %3862 = vmatprep.subr.bf16.mxu0 %v2997
    %3863 = vmatpush2.bf16.msra.mxu0 %v2996
    %3864 = vmatprep.mubr.bf16.mxu0 %v1265
    %3865 = vmatmul.mubr.bf16.gmra.mxu0 %v1264
    %v3866 = vpop.f32.mrf.mxu0
    %v3867 = vadd.f32 %v3814, %v3866
    %v3868 = vpop.f32.mrf.mxu0
    %v3869 = vadd.f32 %v3816, %v3868
    %v3870 = vpop.f32.mrf.mxu0
    %v3871 = vadd.f32 %v3818, %v3870
    %v3872 = vpop.f32.mrf.mxu0
    %v3873 = vadd.f32 %v3820, %v3872
    %3874 = vmatprep.mubr.bf16.mxu0 %v1289
    %3875 = vmatmul.mubr.bf16.gmra.mxu0 %v1288
    %v3876 = vpop.f32.mrf.mxu0
    %v3877 = vadd.f32 %v3824, %v3876
    %v3878 = vpop.f32.mrf.mxu0
    %v3879 = vadd.f32 %v3826, %v3878
    %v3880 = vpop.f32.mrf.mxu0
    %v3881 = vadd.f32 %v3828, %v3880
    %v3882 = vpop.f32.mrf.mxu0
    %v3883 = vadd.f32 %v3830, %v3882
    %3884 = vdwg.mxu0
    %3885 = vmatprep.subr.bf16.mxu0 %v3027
    %3886 = vmatpush1.bf16.msra.mxu0 %v3026
    %3887 = vmatprep.subr.bf16.mxu0 %v3025
    %3888 = vmatpush1.bf16.msra.mxu0 %v3024
    %3889 = vmatprep.subr.bf16.mxu0 %v3023
    %3890 = vmatpush1.bf16.msra.mxu0 %v3022
    %3891 = vmatprep.subr.bf16.mxu0 %v3021
    %3892 = vmatpush1.bf16.msra.mxu0 %v3020
    %3893 = vmatprep.subr.bf16.mxu0 %v3019
    %3894 = vmatpush1.bf16.msra.mxu0 %v3018
    %3895 = vmatprep.subr.bf16.mxu0 %v3017
    %3896 = vmatpush1.bf16.msra.mxu0 %v3016
    %3897 = vmatprep.subr.bf16.mxu0 %v3015
    %3898 = vmatpush1.bf16.msra.mxu0 %v3014
    %3899 = vmatprep.subr.bf16.mxu0 %v3013
    %3900 = vmatpush1.bf16.msra.mxu0 %v3012
    %3901 = vmatprep.subr.bf16.mxu0 %v3043
    %3902 = vmatpush2.bf16.msra.mxu0 %v3042
    %3903 = vmatprep.subr.bf16.mxu0 %v3041
    %3904 = vmatpush2.bf16.msra.mxu0 %v3040
    %3905 = vmatprep.subr.bf16.mxu0 %v3039
    %3906 = vmatpush2.bf16.msra.mxu0 %v3038
    %3907 = vmatprep.subr.bf16.mxu0 %v3037
    %3908 = vmatpush2.bf16.msra.mxu0 %v3036
    %3909 = vmatprep.subr.bf16.mxu0 %v3035
    %3910 = vmatpush2.bf16.msra.mxu0 %v3034
    %3911 = vmatprep.subr.bf16.mxu0 %v3033
    %3912 = vmatpush2.bf16.msra.mxu0 %v3032
    %3913 = vmatprep.subr.bf16.mxu0 %v3031
    %3914 = vmatpush2.bf16.msra.mxu0 %v3030
    %3915 = vmatprep.subr.bf16.mxu0 %v3029
    %3916 = vmatpush2.bf16.msra.mxu0 %v3028
    %3917 = vmatprep.mubr.bf16.mxu0 %v1267
    %3918 = vmatmul.mubr.bf16.gmra.mxu0 %v1266
    %v3919 = vpop.f32.mrf.mxu0
    %v3920 = vadd.f32 %v3867, %v3919
    %v3921 = vpop.f32.mrf.mxu0
    %v3922 = vadd.f32 %v3869, %v3921
    %v3923 = vpop.f32.mrf.mxu0
    %v3924 = vadd.f32 %v3871, %v3923
    %v3925 = vpop.f32.mrf.mxu0
    %v3926 = vadd.f32 %v3873, %v3925
    %3927 = vmatprep.mubr.bf16.mxu0 %v1291
    %3928 = vmatmul.mubr.bf16.gmra.mxu0 %v1290
    %v3929 = vpop.f32.mrf.mxu0
    %v3930 = vadd.f32 %v3877, %v3929
    %v3931 = vpop.f32.mrf.mxu0
    %v3932 = vadd.f32 %v3879, %v3931
    %v3933 = vpop.f32.mrf.mxu0
    %v3934 = vadd.f32 %v3881, %v3933
    %v3935 = vpop.f32.mrf.mxu0
    %v3936 = vadd.f32 %v3883, %v3935
    %3937 = vdwg.mxu0
    %3938 = vmatprep.subr.bf16.mxu0 %v3059
    %3939 = vmatpush1.bf16.msra.mxu0 %v3058
    %3940 = vmatprep.subr.bf16.mxu0 %v3057
    %3941 = vmatpush1.bf16.msra.mxu0 %v3056
    %3942 = vmatprep.subr.bf16.mxu0 %v3055
    %3943 = vmatpush1.bf16.msra.mxu0 %v3054
    %3944 = vmatprep.subr.bf16.mxu0 %v3053
    %3945 = vmatpush1.bf16.msra.mxu0 %v3052
    %3946 = vmatprep.subr.bf16.mxu0 %v3051
    %3947 = vmatpush1.bf16.msra.mxu0 %v3050
    %3948 = vmatprep.subr.bf16.mxu0 %v3049
    %3949 = vmatpush1.bf16.msra.mxu0 %v3048
    %3950 = vmatprep.subr.bf16.mxu0 %v3047
    %3951 = vmatpush1.bf16.msra.mxu0 %v3046
    %3952 = vmatprep.subr.bf16.mxu0 %v3045
    %3953 = vmatpush1.bf16.msra.mxu0 %v3044
    %3954 = vmatprep.subr.bf16.mxu0 %v3075
    %3955 = vmatpush2.bf16.msra.mxu0 %v3074
    %3956 = vmatprep.subr.bf16.mxu0 %v3073
    %3957 = vmatpush2.bf16.msra.mxu0 %v3072
    %3958 = vmatprep.subr.bf16.mxu0 %v3071
    %3959 = vmatpush2.bf16.msra.mxu0 %v3070
    %3960 = vmatprep.subr.bf16.mxu0 %v3069
    %3961 = vmatpush2.bf16.msra.mxu0 %v3068
    %3962 = vmatprep.subr.bf16.mxu0 %v3067
    %3963 = vmatpush2.bf16.msra.mxu0 %v3066
    %3964 = vmatprep.subr.bf16.mxu0 %v3065
    %3965 = vmatpush2.bf16.msra.mxu0 %v3064
    %3966 = vmatprep.subr.bf16.mxu0 %v3063
    %3967 = vmatpush2.bf16.msra.mxu0 %v3062
    %3968 = vmatprep.subr.bf16.mxu0 %v3061
    %3969 = vmatpush2.bf16.msra.mxu0 %v3060
    %3970 = vmatprep.mubr.bf16.mxu0 %v1269
    %3971 = vmatmul.mubr.bf16.gmra.mxu0 %v1268
    %v3972 = vpop.f32.mrf.mxu0
    %v3973 = vadd.f32 %v3920, %v3972
    %v3974 = vpop.f32.mrf.mxu0
    %v3975 = vadd.f32 %v3922, %v3974
    %v3976 = vpop.f32.mrf.mxu0
    %v3977 = vadd.f32 %v3924, %v3976
    %v3978 = vpop.f32.mrf.mxu0
    %v3979 = vadd.f32 %v3926, %v3978
    %3980 = vmatprep.mubr.bf16.mxu0 %v1293
    %3981 = vmatmul.mubr.bf16.gmra.mxu0 %v1292
    %v3982 = vpop.f32.mrf.mxu0
    %v3983 = vadd.f32 %v3930, %v3982
    %v3984 = vpop.f32.mrf.mxu0
    %v3985 = vadd.f32 %v3932, %v3984
    %v3986 = vpop.f32.mrf.mxu0
    %v3987 = vadd.f32 %v3934, %v3986
    %v3988 = vpop.f32.mrf.mxu0
    %v3989 = vadd.f32 %v3936, %v3988
    %3990 = vdwg.mxu0
    %3991 = vmatprep.subr.bf16.mxu0 %v3091
    %3992 = vmatpush1.bf16.msra.mxu0 %v3090
    %3993 = vmatprep.subr.bf16.mxu0 %v3089
    %3994 = vmatpush1.bf16.msra.mxu0 %v3088
    %3995 = vmatprep.subr.bf16.mxu0 %v3087
    %3996 = vmatpush1.bf16.msra.mxu0 %v3086
    %3997 = vmatprep.subr.bf16.mxu0 %v3085
    %3998 = vmatpush1.bf16.msra.mxu0 %v3084
    %3999 = vmatprep.subr.bf16.mxu0 %v3083
    %4000 = vmatpush1.bf16.msra.mxu0 %v3082
    %4001 = vmatprep.subr.bf16.mxu0 %v3081
    %4002 = vmatpush1.bf16.msra.mxu0 %v3080
    %4003 = vmatprep.subr.bf16.mxu0 %v3079
    %4004 = vmatpush1.bf16.msra.mxu0 %v3078
    %4005 = vmatprep.subr.bf16.mxu0 %v3077
    %4006 = vmatpush1.bf16.msra.mxu0 %v3076
    %4007 = vmatprep.subr.bf16.mxu0 %v3107
    %4008 = vmatpush2.bf16.msra.mxu0 %v3106
    %4009 = vmatprep.subr.bf16.mxu0 %v3105
    %4010 = vmatpush2.bf16.msra.mxu0 %v3104
    %4011 = vmatprep.subr.bf16.mxu0 %v3103
    %4012 = vmatpush2.bf16.msra.mxu0 %v3102
    %4013 = vmatprep.subr.bf16.mxu0 %v3101
    %4014 = vmatpush2.bf16.msra.mxu0 %v3100
    %4015 = vmatprep.subr.bf16.mxu0 %v3099
    %4016 = vmatpush2.bf16.msra.mxu0 %v3098
    %4017 = vmatprep.subr.bf16.mxu0 %v3097
    %4018 = vmatpush2.bf16.msra.mxu0 %v3096
    %4019 = vmatprep.subr.bf16.mxu0 %v3095
    %4020 = vmatpush2.bf16.msra.mxu0 %v3094
    %4021 = vmatprep.subr.bf16.mxu0 %v3093
    %4022 = vmatpush2.bf16.msra.mxu0 %v3092
    %4023 = vmatprep.mubr.bf16.mxu0 %v1271
    %4024 = vmatmul.mubr.bf16.gmra.mxu0 %v1270
    %v4025 = vpop.f32.mrf.mxu0
    %v4026 = vadd.f32 %v3973, %v4025
    %v4027 = vpop.f32.mrf.mxu0
    %v4028 = vadd.f32 %v3975, %v4027
    %v4029 = vpop.f32.mrf.mxu0
    %v4030 = vadd.f32 %v3977, %v4029
    %v4031 = vpop.f32.mrf.mxu0
    %v4032 = vadd.f32 %v3979, %v4031
    %4033 = vmatprep.mubr.bf16.mxu0 %v1295
    %4034 = vmatmul.mubr.bf16.gmra.mxu0 %v1294
    %v4035 = vpop.f32.mrf.mxu0
    %v4036 = vadd.f32 %v3983, %v4035
    %v4037 = vpop.f32.mrf.mxu0
    %v4038 = vadd.f32 %v3985, %v4037
    %v4039 = vpop.f32.mrf.mxu0
    %v4040 = vadd.f32 %v3987, %v4039
    %v4041 = vpop.f32.mrf.mxu0
    %v4042 = vadd.f32 %v3989, %v4041
    %4043 = vdwg.mxu0
    %4044 = vmatprep.subr.bf16.mxu0 %v3123
    %4045 = vmatpush1.bf16.msra.mxu0 %v3122
    %4046 = vmatprep.subr.bf16.mxu0 %v3121
    %4047 = vmatpush1.bf16.msra.mxu0 %v3120
    %4048 = vmatprep.subr.bf16.mxu0 %v3119
    %4049 = vmatpush1.bf16.msra.mxu0 %v3118
    %4050 = vmatprep.subr.bf16.mxu0 %v3117
    %4051 = vmatpush1.bf16.msra.mxu0 %v3116
    %4052 = vmatprep.subr.bf16.mxu0 %v3115
    %4053 = vmatpush1.bf16.msra.mxu0 %v3114
    %4054 = vmatprep.subr.bf16.mxu0 %v3113
    %4055 = vmatpush1.bf16.msra.mxu0 %v3112
    %4056 = vmatprep.subr.bf16.mxu0 %v3111
    %4057 = vmatpush1.bf16.msra.mxu0 %v3110
    %4058 = vmatprep.subr.bf16.mxu0 %v3109
    %4059 = vmatpush1.bf16.msra.mxu0 %v3108
    %4060 = vmatprep.subr.bf16.mxu0 %v3139
    %4061 = vmatpush2.bf16.msra.mxu0 %v3138
    %4062 = vmatprep.subr.bf16.mxu0 %v3137
    %4063 = vmatpush2.bf16.msra.mxu0 %v3136
    %4064 = vmatprep.subr.bf16.mxu0 %v3135
    %4065 = vmatpush2.bf16.msra.mxu0 %v3134
    %4066 = vmatprep.subr.bf16.mxu0 %v3133
    %4067 = vmatpush2.bf16.msra.mxu0 %v3132
    %4068 = vmatprep.subr.bf16.mxu0 %v3131
    %4069 = vmatpush2.bf16.msra.mxu0 %v3130
    %4070 = vmatprep.subr.bf16.mxu0 %v3129
    %4071 = vmatpush2.bf16.msra.mxu0 %v3128
    %4072 = vmatprep.subr.bf16.mxu0 %v3127
    %4073 = vmatpush2.bf16.msra.mxu0 %v3126
    %4074 = vmatprep.subr.bf16.mxu0 %v3125
    %4075 = vmatpush2.bf16.msra.mxu0 %v3124
    %4076 = vmatprep.mubr.bf16.mxu0 %v1273
    %4077 = vmatmul.mubr.bf16.gmra.mxu0 %v1272
    %v4078 = vpop.f32.mrf.mxu0
    %v4079 = vadd.f32 %v4026, %v4078
    %v4080 = vpop.f32.mrf.mxu0
    %v4081 = vadd.f32 %v4028, %v4080
    %v4082 = vpop.f32.mrf.mxu0
    %v4083 = vadd.f32 %v4030, %v4082
    %v4084 = vpop.f32.mrf.mxu0
    %v4085 = vadd.f32 %v4032, %v4084
    %4086 = vmatprep.mubr.bf16.mxu0 %v1297
    %4087 = vmatmul.mubr.bf16.gmra.mxu0 %v1296
    %v4088 = vpop.f32.mrf.mxu0
    %v4089 = vadd.f32 %v4036, %v4088
    %v4090 = vpop.f32.mrf.mxu0
    %v4091 = vadd.f32 %v4038, %v4090
    %v4092 = vpop.f32.mrf.mxu0
    %v4093 = vadd.f32 %v4040, %v4092
    %v4094 = vpop.f32.mrf.mxu0
    %v4095 = vadd.f32 %v4042, %v4094
    %4096 = vdwg.mxu0
    %4097 = vmatprep.subr.bf16.mxu0 %v3155
    %4098 = vmatpush1.bf16.msra.mxu0 %v3154
    %4099 = vmatprep.subr.bf16.mxu0 %v3153
    %4100 = vmatpush1.bf16.msra.mxu0 %v3152
    %4101 = vmatprep.subr.bf16.mxu0 %v3151
    %4102 = vmatpush1.bf16.msra.mxu0 %v3150
    %4103 = vmatprep.subr.bf16.mxu0 %v3149
    %4104 = vmatpush1.bf16.msra.mxu0 %v3148
    %4105 = vmatprep.subr.bf16.mxu0 %v3147
    %4106 = vmatpush1.bf16.msra.mxu0 %v3146
    %4107 = vmatprep.subr.bf16.mxu0 %v3145
    %4108 = vmatpush1.bf16.msra.mxu0 %v3144
    %4109 = vmatprep.subr.bf16.mxu0 %v3143
    %4110 = vmatpush1.bf16.msra.mxu0 %v3142
    %4111 = vmatprep.subr.bf16.mxu0 %v3141
    %4112 = vmatpush1.bf16.msra.mxu0 %v3140
    %4113 = vmatprep.subr.bf16.mxu0 %v3171
    %4114 = vmatpush2.bf16.msra.mxu0 %v3170
    %4115 = vmatprep.subr.bf16.mxu0 %v3169
    %4116 = vmatpush2.bf16.msra.mxu0 %v3168
    %4117 = vmatprep.subr.bf16.mxu0 %v3167
    %4118 = vmatpush2.bf16.msra.mxu0 %v3166
    %4119 = vmatprep.subr.bf16.mxu0 %v3165
    %4120 = vmatpush2.bf16.msra.mxu0 %v3164
    %4121 = vmatprep.subr.bf16.mxu0 %v3163
    %4122 = vmatpush2.bf16.msra.mxu0 %v3162
    %4123 = vmatprep.subr.bf16.mxu0 %v3161
    %4124 = vmatpush2.bf16.msra.mxu0 %v3160
    %4125 = vmatprep.subr.bf16.mxu0 %v3159
    %4126 = vmatpush2.bf16.msra.mxu0 %v3158
    %4127 = vmatprep.subr.bf16.mxu0 %v3157
    %4128 = vmatpush2.bf16.msra.mxu0 %v3156
    %4129 = vmatprep.mubr.bf16.mxu0 %v1275
    %4130 = vmatmul.mubr.bf16.gmra.mxu0 %v1274
    %v4131 = vpop.f32.mrf.mxu0
    %v4132 = vadd.f32 %v4079, %v4131
    %v4133 = vpop.f32.mrf.mxu0
    %v4134 = vadd.f32 %v4081, %v4133
    %v4135 = vpop.f32.mrf.mxu0
    %v4136 = vadd.f32 %v4083, %v4135
    %v4137 = vpop.f32.mrf.mxu0
    %v4138 = vadd.f32 %v4085, %v4137
    %4139 = vmatprep.mubr.bf16.mxu0 %v1299
    %4140 = vmatmul.mubr.bf16.gmra.mxu0 %v1298
    %v4141 = vpop.f32.mrf.mxu0
    %v4142 = vadd.f32 %v4089, %v4141
    %v4143 = vpop.f32.mrf.mxu0
    %v4144 = vadd.f32 %v4091, %v4143
    %v4145 = vpop.f32.mrf.mxu0
    %v4146 = vadd.f32 %v4093, %v4145
    %v4147 = vpop.f32.mrf.mxu0
    %v4148 = vadd.f32 %v4095, %v4147
    %4149 = vdwg.mxu0
    %4150 = vmatprep.subr.bf16.mxu0 %v3187
    %4151 = vmatpush1.bf16.msra.mxu0 %v3186
    %4152 = vmatprep.subr.bf16.mxu0 %v3185
    %4153 = vmatpush1.bf16.msra.mxu0 %v3184
    %4154 = vmatprep.subr.bf16.mxu0 %v3183
    %4155 = vmatpush1.bf16.msra.mxu0 %v3182
    %4156 = vmatprep.subr.bf16.mxu0 %v3181
    %4157 = vmatpush1.bf16.msra.mxu0 %v3180
    %4158 = vmatprep.subr.bf16.mxu0 %v3179
    %4159 = vmatpush1.bf16.msra.mxu0 %v3178
    %4160 = vmatprep.subr.bf16.mxu0 %v3177
    %4161 = vmatpush1.bf16.msra.mxu0 %v3176
    %4162 = vmatprep.subr.bf16.mxu0 %v3175
    %4163 = vmatpush1.bf16.msra.mxu0 %v3174
    %4164 = vmatprep.subr.bf16.mxu0 %v3173
    %4165 = vmatpush1.bf16.msra.mxu0 %v3172
    %4166 = vmatprep.subr.bf16.mxu0 %v3203
    %4167 = vmatpush2.bf16.msra.mxu0 %v3202
    %4168 = vmatprep.subr.bf16.mxu0 %v3201
    %4169 = vmatpush2.bf16.msra.mxu0 %v3200
    %4170 = vmatprep.subr.bf16.mxu0 %v3199
    %4171 = vmatpush2.bf16.msra.mxu0 %v3198
    %4172 = vmatprep.subr.bf16.mxu0 %v3197
    %4173 = vmatpush2.bf16.msra.mxu0 %v3196
    %4174 = vmatprep.subr.bf16.mxu0 %v3195
    %4175 = vmatpush2.bf16.msra.mxu0 %v3194
    %4176 = vmatprep.subr.bf16.mxu0 %v3193
    %4177 = vmatpush2.bf16.msra.mxu0 %v3192
    %4178 = vmatprep.subr.bf16.mxu0 %v3191
    %4179 = vmatpush2.bf16.msra.mxu0 %v3190
    %4180 = vmatprep.subr.bf16.mxu0 %v3189
    %4181 = vmatpush2.bf16.msra.mxu0 %v3188
    %4182 = vmatprep.mubr.bf16.mxu0 %v1277
    %4183 = vmatmul.mubr.bf16.gmra.mxu0 %v1276
    %v4184 = vpop.f32.mrf.mxu0
    %v4185 = vadd.f32 %v4132, %v4184
    %v4186 = vpop.f32.mrf.mxu0
    %v4187 = vadd.f32 %v4134, %v4186
    %v4188 = vpop.f32.mrf.mxu0
    %v4189 = vadd.f32 %v4136, %v4188
    %v4190 = vpop.f32.mrf.mxu0
    %v4191 = vadd.f32 %v4138, %v4190
    %4192 = vmatprep.mubr.bf16.mxu0 %v1301
    %4193 = vmatmul.mubr.bf16.gmra.mxu0 %v1300
    %v4194 = vpop.f32.mrf.mxu0
    %v4195 = vadd.f32 %v4142, %v4194
    %v4196 = vpop.f32.mrf.mxu0
    %v4197 = vadd.f32 %v4144, %v4196
    %v4198 = vpop.f32.mrf.mxu0
    %v4199 = vadd.f32 %v4146, %v4198
    %v4200 = vpop.f32.mrf.mxu0
    %v4201 = vadd.f32 %v4148, %v4200
    %4202 = vdwg.mxu0
    %4203 = vmatprep.subr.bf16.mxu0 %v3219
    %4204 = vmatpush1.bf16.msra.mxu0 %v3218
    %4205 = vmatprep.subr.bf16.mxu0 %v3217
    %4206 = vmatpush1.bf16.msra.mxu0 %v3216
    %4207 = vmatprep.subr.bf16.mxu0 %v3215
    %4208 = vmatpush1.bf16.msra.mxu0 %v3214
    %4209 = vmatprep.subr.bf16.mxu0 %v3213
    %4210 = vmatpush1.bf16.msra.mxu0 %v3212
    %4211 = vmatprep.subr.bf16.mxu0 %v3211
    %4212 = vmatpush1.bf16.msra.mxu0 %v3210
    %4213 = vmatprep.subr.bf16.mxu0 %v3209
    %4214 = vmatpush1.bf16.msra.mxu0 %v3208
    %4215 = vmatprep.subr.bf16.mxu0 %v3207
    %4216 = vmatpush1.bf16.msra.mxu0 %v3206
    %4217 = vmatprep.subr.bf16.mxu0 %v3205
    %4218 = vmatpush1.bf16.msra.mxu0 %v3204
    %4219 = vmatprep.subr.bf16.mxu0 %v3235
    %4220 = vmatpush2.bf16.msra.mxu0 %v3234
    %4221 = vmatprep.subr.bf16.mxu0 %v3233
    %4222 = vmatpush2.bf16.msra.mxu0 %v3232
    %4223 = vmatprep.subr.bf16.mxu0 %v3231
    %4224 = vmatpush2.bf16.msra.mxu0 %v3230
    %4225 = vmatprep.subr.bf16.mxu0 %v3229
    %4226 = vmatpush2.bf16.msra.mxu0 %v3228
    %4227 = vmatprep.subr.bf16.mxu0 %v3227
    %4228 = vmatpush2.bf16.msra.mxu0 %v3226
    %4229 = vmatprep.subr.bf16.mxu0 %v3225
    %4230 = vmatpush2.bf16.msra.mxu0 %v3224
    %4231 = vmatprep.subr.bf16.mxu0 %v3223
    %4232 = vmatpush2.bf16.msra.mxu0 %v3222
    %4233 = vmatprep.subr.bf16.mxu0 %v3221
    %4234 = vmatpush2.bf16.msra.mxu0 %v3220
    %4235 = vmatprep.mubr.bf16.mxu0 %v1279
    %4236 = vmatmul.mubr.bf16.gmra.mxu0 %v1278
    %v4237 = vpop.f32.mrf.mxu0
    %v4238 = vadd.f32 %v4185, %v4237
    %v4239 = vpop.f32.mrf.mxu0
    %v4240 = vadd.f32 %v4187, %v4239
    %v4241 = vpop.f32.mrf.mxu0
    %v4242 = vadd.f32 %v4189, %v4241
    %v4243 = vpop.f32.mrf.mxu0
    %v4244 = vadd.f32 %v4191, %v4243
    %4245 = vmatprep.mubr.bf16.mxu0 %v1303
    %4246 = vmatmul.mubr.bf16.gmra.mxu0 %v1302
    %v4247 = vpop.f32.mrf.mxu0
    %v4248 = vadd.f32 %v4195, %v4247
    %v4249 = vpop.f32.mrf.mxu0
    %v4250 = vadd.f32 %v4197, %v4249
    %v4251 = vpop.f32.mrf.mxu0
    %v4252 = vadd.f32 %v4199, %v4251
    %v4253 = vpop.f32.mrf.mxu0
    %v4254 = vadd.f32 %v4201, %v4253
    %4255 = vdwg.mxu0
    %v4256 = vmax.f32 %v4238, 0.0
    %v4257 = vmax.f32 %v4240, 0.0
    %v4258 = vmax.f32 %v4242, 0.0
    %v4259 = vmax.f32 %v4244, 0.0
    %v4260 = vmax.f32 %v4248, 0.0
    %v4261 = vmax.f32 %v4250, 0.0
    %v4262 = vmax.f32 %v4252, 0.0
    %v4263 = vmax.f32 %v4254, 0.0
    %v4264 = vpack.c.bf16 %v4258, %v4256
    %v4265 = vpack.c.bf16 %v4259, %v4257
    %v4266 = vpack.c.bf16 %v4262, %v4260
    %v4267 = vpack.c.bf16 %v4263, %v4261
    %v4268 = vld [vmem:[#allocation7] sm:$0xff]
    %v4269 = vld [vmem:[#allocation7 + $0x8] sm:$0xff]
    %v4270 = vld [vmem:[#allocation7 + $0x10] sm:$0xff]
    %v4271 = vld [vmem:[#allocation7 + $0x18] sm:$0xff]
    %v4272 = vld [vmem:[#allocation7 + $0x20] sm:$0xff]
    %v4273 = vld [vmem:[#allocation7 + $0x28] sm:$0xff]
    %v4274 = vld [vmem:[#allocation7 + $0x30] sm:$0xff]
    %v4275 = vld [vmem:[#allocation7 + $0x38] sm:$0xff]
    %v4276 = vld [vmem:[#allocation7 + $0x40] sm:$0xff]
    %v4277 = vld [vmem:[#allocation7 + $0x48] sm:$0xff]
    %v4278 = vld [vmem:[#allocation7 + $0x50] sm:$0xff]
    %v4279 = vld [vmem:[#allocation7 + $0x58] sm:$0xff]
    %v4280 = vld [vmem:[#allocation7 + $0x60] sm:$0xff]
    %v4281 = vld [vmem:[#allocation7 + $0x68] sm:$0xff]
    %v4282 = vld [vmem:[#allocation7 + $0x70] sm:$0xff]
    %v4283 = vld [vmem:[#allocation7 + $0x78] sm:$0xff]
    %v4284 = vld [vmem:[#allocation7 + $0x80] sm:$0xff]
    %v4285 = vld [vmem:[#allocation7 + $0x88] sm:$0xff]
    %v4286 = vld [vmem:[#allocation7 + $0x90] sm:$0xff]
    %v4287 = vld [vmem:[#allocation7 + $0x98] sm:$0xff]
    %v4288 = vld [vmem:[#allocation7 + $0xa0] sm:$0xff]
    %v4289 = vld [vmem:[#allocation7 + $0xa8] sm:$0xff]
    %v4290 = vld [vmem:[#allocation7 + $0xb0] sm:$0xff]
    %v4291 = vld [vmem:[#allocation7 + $0xb8] sm:$0xff]
    %v4292 = vld [vmem:[#allocation7 + $0xc0] sm:$0xff]
    %v4293 = vld [vmem:[#allocation7 + $0xc8] sm:$0xff]
    %v4294 = vld [vmem:[#allocation7 + $0xd0] sm:$0xff]
    %v4295 = vld [vmem:[#allocation7 + $0xd8] sm:$0xff]
    %v4296 = vld [vmem:[#allocation7 + $0xe0] sm:$0xff]
    %v4297 = vld [vmem:[#allocation7 + $0xe8] sm:$0xff]
    %v4298 = vld [vmem:[#allocation7 + $0xf0] sm:$0xff]
    %v4299 = vld [vmem:[#allocation7 + $0xf8] sm:$0xff]
    %v4300 = vld [vmem:[#allocation8] sm:$0x3]
    %v4302 = vlaneseq
    %v4303 = vshrl.u32 %v4302, 7
    %v4304 = vsub.s32 0, %v4303
    %v4305 = vrot.slane %v4300, %v4304
    %v4306 = vlaneseq
    %v4307 = vshrl.u32 %v4306, 7
    %v4308 = vsub.s32 1, %v4307
    %v4309 = vrot.slane %v4300, %v4308
    %v4344 = vunpack.c.l.b16 %v4268
    %v4345 = vunpack.c.h.b16 %v4268
    %v4346 = vunpack.c.l.b16 %v4269
    %v4347 = vunpack.c.h.b16 %v4269
    %v4348 = vunpack.c.l.b16 %v4270
    %v4349 = vunpack.c.h.b16 %v4270
    %v4350 = vunpack.c.l.b16 %v4271
    %v4351 = vunpack.c.h.b16 %v4271
    %v4352 = vunpack.c.l.b16 %v4272
    %v4353 = vunpack.c.h.b16 %v4272
    %v4354 = vunpack.c.l.b16 %v4273
    %v4355 = vunpack.c.h.b16 %v4273
    %v4356 = vunpack.c.l.b16 %v4274
    %v4357 = vunpack.c.h.b16 %v4274
    %v4358 = vunpack.c.l.b16 %v4275
    %v4359 = vunpack.c.h.b16 %v4275
    %v4360 = vunpack.c.l.b16 %v4276
    %v4361 = vunpack.c.h.b16 %v4276
    %v4362 = vunpack.c.l.b16 %v4277
    %v4363 = vunpack.c.h.b16 %v4277
    %v4364 = vunpack.c.l.b16 %v4278
    %v4365 = vunpack.c.h.b16 %v4278
    %v4366 = vunpack.c.l.b16 %v4279
    %v4367 = vunpack.c.h.b16 %v4279
    %v4368 = vunpack.c.l.b16 %v4280
    %v4369 = vunpack.c.h.b16 %v4280
    %v4370 = vunpack.c.l.b16 %v4281
    %v4371 = vunpack.c.h.b16 %v4281
    %v4372 = vunpack.c.l.b16 %v4282
    %v4373 = vunpack.c.h.b16 %v4282
    %v4374 = vunpack.c.l.b16 %v4283
    %v4375 = vunpack.c.h.b16 %v4283
    %v4376 = vunpack.c.l.b16 %v4284
    %v4377 = vunpack.c.h.b16 %v4284
    %v4378 = vunpack.c.l.b16 %v4285
    %v4379 = vunpack.c.h.b16 %v4285
    %v4380 = vunpack.c.l.b16 %v4286
    %v4381 = vunpack.c.h.b16 %v4286
    %v4382 = vunpack.c.l.b16 %v4287
    %v4383 = vunpack.c.h.b16 %v4287
    %v4384 = vunpack.c.l.b16 %v4288
    %v4385 = vunpack.c.h.b16 %v4288
    %v4386 = vunpack.c.l.b16 %v4289
    %v4387 = vunpack.c.h.b16 %v4289
    %v4388 = vunpack.c.l.b16 %v4290
    %v4389 = vunpack.c.h.b16 %v4290
    %v4390 = vunpack.c.l.b16 %v4291
    %v4391 = vunpack.c.h.b16 %v4291
    %v4392 = vunpack.c.l.b16 %v4292
    %v4393 = vunpack.c.h.b16 %v4292
    %v4394 = vunpack.c.l.b16 %v4293
    %v4395 = vunpack.c.h.b16 %v4293
    %v4396 = vunpack.c.l.b16 %v4294
    %v4397 = vunpack.c.h.b16 %v4294
    %v4398 = vunpack.c.l.b16 %v4295
    %v4399 = vunpack.c.h.b16 %v4295
    %v4400 = vunpack.c.l.b16 %v4296
    %v4401 = vunpack.c.h.b16 %v4296
    %v4402 = vunpack.c.l.b16 %v4297
    %v4403 = vunpack.c.h.b16 %v4297
    %v4404 = vunpack.c.l.b16 %v4298
    %v4405 = vunpack.c.h.b16 %v4298
    %v4406 = vunpack.c.l.b16 %v4299
    %v4407 = vunpack.c.h.b16 %v4299
    %v4408 = vpack.c.b16 %v4346, %v4344
    %v4409 = vpack.c.b16 %v4347, %v4345
    %v4410 = vpack.c.b16 %v4350, %v4348
    %v4411 = vpack.c.b16 %v4351, %v4349
    %v4412 = vpack.c.b16 %v4354, %v4352
    %v4413 = vpack.c.b16 %v4355, %v4353
    %v4414 = vpack.c.b16 %v4358, %v4356
    %v4415 = vpack.c.b16 %v4359, %v4357
    %v4416 = vpack.c.b16 %v4362, %v4360
    %v4417 = vpack.c.b16 %v4363, %v4361
    %v4418 = vpack.c.b16 %v4366, %v4364
    %v4419 = vpack.c.b16 %v4367, %v4365
    %v4420 = vpack.c.b16 %v4370, %v4368
    %v4421 = vpack.c.b16 %v4371, %v4369
    %v4422 = vpack.c.b16 %v4374, %v4372
    %v4423 = vpack.c.b16 %v4375, %v4373
    %v4424 = vpack.c.b16 %v4378, %v4376
    %v4425 = vpack.c.b16 %v4379, %v4377
    %v4426 = vpack.c.b16 %v4382, %v4380
    %v4427 = vpack.c.b16 %v4383, %v4381
    %v4428 = vpack.c.b16 %v4386, %v4384
    %v4429 = vpack.c.b16 %v4387, %v4385
    %v4430 = vpack.c.b16 %v4390, %v4388
    %v4431 = vpack.c.b16 %v4391, %v4389
    %v4432 = vpack.c.b16 %v4394, %v4392
    %v4433 = vpack.c.b16 %v4395, %v4393
    %v4434 = vpack.c.b16 %v4398, %v4396
    %v4435 = vpack.c.b16 %v4399, %v4397
    %v4436 = vpack.c.b16 %v4402, %v4400
    %v4437 = vpack.c.b16 %v4403, %v4401
    %v4438 = vpack.c.b16 %v4406, %v4404
    %v4439 = vpack.c.b16 %v4407, %v4405
    %4472 = vmatprep.subr.bf16.mxu0 %v4423
    %4473 = vmatpush1.bf16.msra.mxu0 %v4422
    %4474 = vmatprep.subr.bf16.mxu0 %v4421
    %4475 = vmatpush1.bf16.msra.mxu0 %v4420
    %4476 = vmatprep.subr.bf16.mxu0 %v4419
    %4477 = vmatpush1.bf16.msra.mxu0 %v4418
    %4478 = vmatprep.subr.bf16.mxu0 %v4417
    %4479 = vmatpush1.bf16.msra.mxu0 %v4416
    %4480 = vmatprep.subr.bf16.mxu0 %v4415
    %4481 = vmatpush1.bf16.msra.mxu0 %v4414
    %4482 = vmatprep.subr.bf16.mxu0 %v4413
    %4483 = vmatpush1.bf16.msra.mxu0 %v4412
    %4484 = vmatprep.subr.bf16.mxu0 %v4411
    %4485 = vmatpush1.bf16.msra.mxu0 %v4410
    %4486 = vmatprep.subr.bf16.mxu0 %v4409
    %4487 = vmatpush1.bf16.msra.mxu0 %v4408
    %4488 = vmatprep.subr.bf16.mxu0 %v4439
    %4489 = vmatpush2.bf16.msra.mxu0 %v4438
    %4490 = vmatprep.subr.bf16.mxu0 %v4437
    %4491 = vmatpush2.bf16.msra.mxu0 %v4436
    %4492 = vmatprep.subr.bf16.mxu0 %v4435
    %4493 = vmatpush2.bf16.msra.mxu0 %v4434
    %4494 = vmatprep.subr.bf16.mxu0 %v4433
    %4495 = vmatpush2.bf16.msra.mxu0 %v4432
    %4496 = vmatprep.subr.bf16.mxu0 %v4431
    %4497 = vmatpush2.bf16.msra.mxu0 %v4430
    %4498 = vmatprep.subr.bf16.mxu0 %v4429
    %4499 = vmatpush2.bf16.msra.mxu0 %v4428
    %4500 = vmatprep.subr.bf16.mxu0 %v4427
    %4501 = vmatpush2.bf16.msra.mxu0 %v4426
    %4502 = vmatprep.subr.bf16.mxu0 %v4425
    %4503 = vmatpush2.bf16.msra.mxu0 %v4424
    %4504 = vmatprep.mubr.bf16.mxu0 %v4265
    %4505 = vmatmul.mubr.bf16.gmra.mxu0 %v4264
    %v4506 = vpop.f32.mrf.mxu0
    %v4507 = vadd.f32 %v4305, %v4506
    %v4508 = vpop.f32.mrf.mxu0
    %v4509 = vadd.f32 %v4309, %v4508
    %v4510 = vpop.f32.mrf.mxu0
    %v4511 = vadd.f32 %v4305, %v4510
    %v4512 = vpop.f32.mrf.mxu0
    %v4513 = vadd.f32 %v4309, %v4512
    %4514 = vmatprep.mubr.bf16.mxu0 %v4267
    %4515 = vmatmul.mubr.bf16.gmra.mxu0 %v4266
    %v4516 = vpop.f32.mrf.mxu0
    %v4517 = vadd.f32 %v4305, %v4516
    %v4518 = vpop.f32.mrf.mxu0
    %v4519 = vadd.f32 %v4309, %v4518
    %v4520 = vpop.f32.mrf.mxu0
    %v4521 = vadd.f32 %v4305, %v4520
    %v4522 = vpop.f32.mrf.mxu0
    %v4523 = vadd.f32 %v4309, %v4522
    %4524 = vdwg.mxu0
    %v4525 = vmax.f32 %v4507, 0.0
    %v4526 = vmax.f32 %v4509, 0.0
    %v4527 = vmax.f32 %v4511, 0.0
    %v4528 = vmax.f32 %v4513, 0.0
    %v4529 = vmax.f32 %v4517, 0.0
    %v4530 = vmax.f32 %v4519, 0.0
    %v4531 = vmax.f32 %v4521, 0.0
    %v4532 = vmax.f32 %v4523, 0.0
    %v4533 = vpack.c.bf16 %v4527, %v4525
    %v4534 = vpack.c.bf16 %v4528, %v4526
    %v4535 = vpack.c.bf16 %v4531, %v4529
    %v4536 = vpack.c.bf16 %v4532, %v4530
    %v4537 = vld [vmem:[#allocation10] sm:$0xf]
    %v4538 = vld [vmem:[#allocation10 + $0x4] sm:$0xf]
    %v4539 = vld [vmem:[#allocation10 + $0x8] sm:$0xf]
    %v4540 = vld [vmem:[#allocation10 + $0xc] sm:$0xf]
    %v4541 = vld [vmem:[#allocation10 + $0x10] sm:$0xf]
    %v4542 = vld [vmem:[#allocation10 + $0x14] sm:$0xf]
    %v4543 = vld [vmem:[#allocation10 + $0x18] sm:$0xf]
    %v4544 = vld [vmem:[#allocation10 + $0x1c] sm:$0xf]
    %v4545 = vld [vmem:[#allocation10 + $0x20] sm:$0xf]
    %v4546 = vld [vmem:[#allocation10 + $0x24] sm:$0xf]
    %v4547 = vld [vmem:[#allocation10 + $0x28] sm:$0xf]
    %v4548 = vld [vmem:[#allocation10 + $0x2c] sm:$0xf]
    %v4549 = vld [vmem:[#allocation10 + $0x30] sm:$0xf]
    %v4550 = vld [vmem:[#allocation10 + $0x34] sm:$0xf]
    %v4551 = vld [vmem:[#allocation10 + $0x38] sm:$0xf]
    %v4552 = vld [vmem:[#allocation10 + $0x3c] sm:$0xf]
    %v4553 = vld [vmem:[#allocation10 + $0x40] sm:$0xf]
    %v4554 = vld [vmem:[#allocation10 + $0x44] sm:$0xf]
    %v4555 = vld [vmem:[#allocation10 + $0x48] sm:$0xf]
    %v4556 = vld [vmem:[#allocation10 + $0x4c] sm:$0xf]
    %v4557 = vld [vmem:[#allocation10 + $0x50] sm:$0xf]
    %v4558 = vld [vmem:[#allocation10 + $0x54] sm:$0xf]
    %v4559 = vld [vmem:[#allocation10 + $0x58] sm:$0xf]
    %v4560 = vld [vmem:[#allocation10 + $0x5c] sm:$0xf]
    %v4561 = vld [vmem:[#allocation10 + $0x60] sm:$0xf]
    %v4562 = vld [vmem:[#allocation10 + $0x64] sm:$0xf]
    %v4563 = vld [vmem:[#allocation10 + $0x68] sm:$0xf]
    %v4564 = vld [vmem:[#allocation10 + $0x6c] sm:$0xf]
    %v4565 = vld [vmem:[#allocation10 + $0x70] sm:$0xf]
    %v4566 = vld [vmem:[#allocation10 + $0x74] sm:$0xf]
    %v4567 = vld [vmem:[#allocation10 + $0x78] sm:$0xf]
    %v4568 = vld [vmem:[#allocation10 + $0x7c] sm:$0xf]
    %v4569 = vld [vmem:[#allocation11] sm:$0x1]
    %v4571 = vlaneseq
    %v4572 = vshrl.u32 %v4571, 7
    %v4573 = vsub.s32 0, %v4572
    %v4574 = vrot.slane %v4569, %v4573
    %v4608 = vunpack.c.l.b16 %v4537
    %v4609 = vunpack.c.l.b16 %v4538
    %v4610 = vunpack.c.l.b16 %v4539
    %v4611 = vunpack.c.l.b16 %v4540
    %v4612 = vunpack.c.l.b16 %v4541
    %v4613 = vunpack.c.l.b16 %v4542
    %v4614 = vunpack.c.l.b16 %v4543
    %v4615 = vunpack.c.l.b16 %v4544
    %v4616 = vunpack.c.l.b16 %v4545
    %v4617 = vunpack.c.l.b16 %v4546
    %v4618 = vunpack.c.l.b16 %v4547
    %v4619 = vunpack.c.l.b16 %v4548
    %v4620 = vunpack.c.l.b16 %v4549
    %v4621 = vunpack.c.l.b16 %v4550
    %v4622 = vunpack.c.l.b16 %v4551
    %v4623 = vunpack.c.l.b16 %v4552
    %v4624 = vunpack.c.l.b16 %v4553
    %v4625 = vunpack.c.l.b16 %v4554
    %v4626 = vunpack.c.l.b16 %v4555
    %v4627 = vunpack.c.l.b16 %v4556
    %v4628 = vunpack.c.l.b16 %v4557
    %v4629 = vunpack.c.l.b16 %v4558
    %v4630 = vunpack.c.l.b16 %v4559
    %v4631 = vunpack.c.l.b16 %v4560
    %v4632 = vunpack.c.l.b16 %v4561
    %v4633 = vunpack.c.l.b16 %v4562
    %v4634 = vunpack.c.l.b16 %v4563
    %v4635 = vunpack.c.l.b16 %v4564
    %v4636 = vunpack.c.l.b16 %v4565
    %v4637 = vunpack.c.l.b16 %v4566
    %v4638 = vunpack.c.l.b16 %v4567
    %v4639 = vunpack.c.l.b16 %v4568
    %v4640 = vpack.c.b16 %v4609, %v4608
    %v4641 = vpack.c.b16 %v4611, %v4610
    %v4642 = vpack.c.b16 %v4613, %v4612
    %v4643 = vpack.c.b16 %v4615, %v4614
    %v4644 = vpack.c.b16 %v4617, %v4616
    %v4645 = vpack.c.b16 %v4619, %v4618
    %v4646 = vpack.c.b16 %v4621, %v4620
    %v4647 = vpack.c.b16 %v4623, %v4622
    %v4648 = vpack.c.b16 %v4625, %v4624
    %v4649 = vpack.c.b16 %v4627, %v4626
    %v4650 = vpack.c.b16 %v4629, %v4628
    %v4651 = vpack.c.b16 %v4631, %v4630
    %v4652 = vpack.c.b16 %v4633, %v4632
    %v4653 = vpack.c.b16 %v4635, %v4634
    %v4654 = vpack.c.b16 %v4637, %v4636
    %v4655 = vpack.c.b16 %v4639, %v4638
    %4672 = vmatprep.subr.bf16.mxu0 0
    %4673 = vmatpush1.bf16.msra.mxu0 %v4647
    %4674 = vmatprep.subr.bf16.mxu0 0
    %4675 = vmatpush1.bf16.msra.mxu0 %v4646
    %4676 = vmatprep.subr.bf16.mxu0 0
    %4677 = vmatpush1.bf16.msra.mxu0 %v4645
    %4678 = vmatprep.subr.bf16.mxu0 0
    %4679 = vmatpush1.bf16.msra.mxu0 %v4644
    %4680 = vmatprep.subr.bf16.mxu0 0
    %4681 = vmatpush1.bf16.msra.mxu0 %v4643
    %4682 = vmatprep.subr.bf16.mxu0 0
    %4683 = vmatpush1.bf16.msra.mxu0 %v4642
    %4684 = vmatprep.subr.bf16.mxu0 0
    %4685 = vmatpush1.bf16.msra.mxu0 %v4641
    %4686 = vmatprep.subr.bf16.mxu0 0
    %4687 = vmatpush1.bf16.msra.mxu0 %v4640
    %4688 = vmatprep.subr.bf16.mxu0 0
    %4689 = vmatpush2.bf16.msra.mxu0 %v4655
    %4690 = vmatprep.subr.bf16.mxu0 0
    %4691 = vmatpush2.bf16.msra.mxu0 %v4654
    %4692 = vmatprep.subr.bf16.mxu0 0
    %4693 = vmatpush2.bf16.msra.mxu0 %v4653
    %4694 = vmatprep.subr.bf16.mxu0 0
    %4695 = vmatpush2.bf16.msra.mxu0 %v4652
    %4696 = vmatprep.subr.bf16.mxu0 0
    %4697 = vmatpush2.bf16.msra.mxu0 %v4651
    %4698 = vmatprep.subr.bf16.mxu0 0
    %4699 = vmatpush2.bf16.msra.mxu0 %v4650
    %4700 = vmatprep.subr.bf16.mxu0 0
    %4701 = vmatpush2.bf16.msra.mxu0 %v4649
    %4702 = vmatprep.subr.bf16.mxu0 0
    %4703 = vmatpush2.bf16.msra.mxu0 %v4648
    %4704 = vmatprep.mubr.bf16.mxu0 %v4534
    %4705 = vmatmul.mubr.bf16.gmra.mxu0 %v4533
    %v4706 = vpop.f32.mrf.mxu0
    %v4707 = vadd.f32 %v4574, %v4706
    %v4708 = vpop.f32.mrf.mxu0
    %v4709 = vpop.f32.mrf.mxu0
    %v4710 = vadd.f32 %v4574, %v4709
    %v4711 = vpop.f32.mrf.mxu0
    %4712 = vmatprep.mubr.bf16.mxu0 %v4536
    %4713 = vmatmul.mubr.bf16.gmra.mxu0 %v4535
    %v4714 = vpop.f32.mrf.mxu0
    %v4715 = vadd.f32 %v4574, %v4714
    %v4716 = vpop.f32.mrf.mxu0
    %v4717 = vpop.f32.mrf.mxu0
    %v4718 = vadd.f32 %v4574, %v4717
    %v4719 = vpop.f32.mrf.mxu0
    %4720 = vdwg.mxu0
    %4721 = vst [vmem:[#allocation13] sm:$0xff] %v4707
    %4722 = vst [vmem:[#allocation13 + $0x8] sm:$0xff] %v4710
    %4723 = vst [vmem:[#allocation13 + $0x10] sm:$0xff] %v4715
    %4724 = vst [vmem:[#allocation13 + $0x18] sm:$0xff] %v4718
    // Predicated region
    $region54: #{mlp_forward.1} parent=1 // pred_check
      _
    $region55: #{mlp_forward.1} parent=1 // pred_check_branch
      %4726 = sbr.rel (0) target = $region57
    $region56: #{mlp_forward.1} parent=1 // pred_region
      %s4728 = ssub.s32 512, 32
      %4729 = vsyncadd [#allocation4], %s4728
      %s4730 = sshll.u32 [#allocation13], 4
      %s4731 = int_to_ptr.vmem [resolvable:$true] %s4730
      %4736 = dma.vmem_to_hbm [thread:$0]  %s4731, 32, %s7, [#allocation4], 32, 32, 2
    $region57: #{mlp_forward.1} parent=1 // pred_fallthru
      _
    // Predicated region
    $region58: #{mlp_forward.1} parent=1 // pred_check
      _
    $region59: #{mlp_forward.1} parent=1 // pred_check_branch
      %4738 = sbr.rel (0) target = $region61
    $region60: #{mlp_forward.1} parent=1 // pred_region
      %4739 = dma.done [#allocation4], 512
    $region61: #{mlp_forward.1} parent=1 // pred_fallthru
      _
    %4740 = vsyncpa [#allocation3], 1
    %4741 = vsyncpa [#allocation6], 1
    %4742 = vsyncpa [#allocation9], 1
    %4743 = vsyncpa [#allocation12], 1
    %4744 = vsyncpa [#allocation4], 1

</llo_original>
